<compile_context>
chip_gen: v5e
topology: v5e:2x2
jax: 0.10.0
libtpu: 0.0.40
codegen_flags: <defaults>
</compile_context>

<pallas_src>
import jax
import jax.numpy as jnp
from jax import lax
from jax.experimental import pallas as pl
from jax.experimental.pallas import tpu as pltpu

H, W = 7, 7
P = H * W                      # 49 flattened spatial positions
CIN, COUT = 1152, 320
COUT_PAD = 384                 # 3 * 128: lane-dense output width
NTAP = 9                       # 3x3 depthwise taps
CHUNK = 384                    # CIN processed in 3 lane-tile-aligned chunks
NCHUNK = CIN // CHUNK
EPS = 1e-5


def fused_kernel(xt_ref, wdw_ref, gamma_ref, beta_ref, wpw_ref, out_ref):
    # xt_ref    : (9, 49, 1152) f32  pre-shifted depthwise taps (pre-ReLU)
    # wdw_ref   : (9, 1152)     f32  depthwise weights, tap-major (dy*3+dx)
    # gamma/beta: (1, 1152)     f32
    # wpw_ref   : (1152, 384)   bf16 1x1-conv weight, zero-padded 320 -> 384
    # out_ref   : (49, 384)     f32
    for k in range(NCHUNK):                                        # static unroll
        c0 = k * CHUNK

        # --- relu32 fused into the taps -> 3x3 depthwise conv (aligned reads) ---
        conv = jnp.zeros((P, CHUNK), jnp.float32)
        for t in range(NTAP):
            x_t = jnp.maximum(xt_ref[t, :, c0:c0 + CHUNK], 0.0)
            conv = conv + x_t * wdw_ref[t:t + 1, c0:c0 + CHUNK]

        # --- BatchNorm2d: training-mode batch stats over the 49 positions ---
        mean = jnp.mean(conv, axis=0, keepdims=True)               # (1, CHUNK)
        var = jnp.mean((conv - mean) ** 2, axis=0, keepdims=True)  # biased var
        inv = lax.rsqrt(var + EPS)
        y = (conv - mean) * inv * gamma_ref[:, c0:c0 + CHUNK] \
            + beta_ref[:, c0:c0 + CHUNK]
        y = jnp.maximum(y, 0.0)                                    # relu33

        # --- 1x1 conv: single M=49 MXU dot per chunk, accumulated in f32 ---
        pw = jnp.dot(y.astype(jnp.bfloat16), wpw_ref[c0:c0 + CHUNK, :],
                     preferred_element_type=jnp.float32)
        if k == 0:
            out_ref[...] = pw
        else:
            out_ref[...] += pw


@jax.jit
def run_module(x_nchw, w_dw_oihw, gamma, beta, w_pw_oihw):
    # ---- glue: layout transforms only ----
    x_hwc = jnp.transpose(x_nchw[0], (1, 2, 0))                    # (7, 7, 1152)
    x_pad = jnp.pad(x_hwc, ((1, 1), (1, 1), (0, 0)))               # (9, 9, 1152)
    # Pre-shift the 9 taps (relu(0)==0, so zero padding commutes with relu32).
    x_taps = jnp.stack(
        [x_pad[dy:dy + H, dx:dx + W, :].reshape(P, CIN)
         for dy in range(3) for dx in range(3)], axis=0)           # (9, 49, 1152)
    w_dw_taps = jnp.transpose(
        w_dw_oihw[:, 0, :, :].reshape(CIN, NTAP), (1, 0))          # (9, 1152)
    gamma2 = gamma.reshape(1, CIN)
    beta2 = beta.reshape(1, CIN)
    w_pw = jnp.transpose(w_pw_oihw[:, :, 0, 0], (1, 0))            # (1152, 320)
    w_pw = jnp.pad(w_pw, ((0, 0), (0, COUT_PAD - COUT))).astype(jnp.bfloat16)

    # NOTE: on v7x a 2-wide "parallel" grid over the padded COUT could use the
    # second TensorCore, but at ~0.35us/grid-step the overhead likely eats the
    # gain for a kernel this small, so we keep a single invocation.
    out_flat = pl.pallas_call(
        fused_kernel,
        out_shape=jax.ShapeDtypeStruct((P, COUT_PAD), jnp.float32),
        grid=(1,),
        in_specs=[
            pl.BlockSpec((NTAP, P, CIN), lambda i: (0, 0, 0)),
            pl.BlockSpec((NTAP, CIN), lambda i: (0, 0)),
            pl.BlockSpec((1, CIN), lambda i: (0, 0)),
            pl.BlockSpec((1, CIN), lambda i: (0, 0)),
            pl.BlockSpec((CIN, COUT_PAD), lambda i: (0, 0)),
        ],
        out_specs=pl.BlockSpec((P, COUT_PAD), lambda i: (0, 0)),
        compiler_params=pltpu.CompilerParams(
            dimension_semantics=("arbitrary",)),
    )(x_taps, w_dw_taps, gamma2, beta2, w_pw)

    out_hwc = out_flat[:, :COUT].reshape(H, W, COUT)
    return jnp.transpose(out_hwc, (2, 0, 1))[None]                 # (1, 320, 7, 7)


def reference_forward(x_nchw, w_dw_oihw, gamma, beta, w_pw_oihw):
    dn = ("NCHW", "OIHW", "NCHW")
    x = jnp.maximum(x_nchw, 0.0)
    y = lax.conv_general_dilated(x, w_dw_oihw, (1, 1), ((1, 1), (1, 1)),
                                 feature_group_count=CIN, dimension_numbers=dn)
    mean = jnp.mean(y, axis=(0, 2, 3), keepdims=True)
    var = jnp.mean((y - mean) ** 2, axis=(0, 2, 3), keepdims=True)
    y = (y - mean) * lax.rsqrt(var + EPS) * gamma.reshape(1, CIN, 1, 1) \
        + beta.reshape(1, CIN, 1, 1)
    y = jnp.maximum(y, 0.0)
    return lax.conv_general_dilated(y, w_pw_oihw, (1, 1), "VALID",
                                    dimension_numbers=dn)


if __name__ == "__main__":
    key = jax.random.PRNGKey(0)
    k_x, k_dw, k_pw, k_g, k_b = jax.random.split(key, 5)

    # deterministic synthetic input + parameters (shapes from the module init)
    x140 = jax.random.normal(k_x, (1, CIN, H, W), jnp.float32)
    w_dw = jax.random.normal(k_dw, (CIN, 1, 3, 3), jnp.float32) * 0.1
    w_pw = jax.random.normal(k_pw, (COUT, CIN, 1, 1), jnp.float32) * 0.05
    gamma = 1.0 + 0.1 * jax.random.normal(k_g, (CIN,), jnp.float32)
    beta = 0.1 * jax.random.normal(k_b, (CIN,), jnp.float32)

    out = jax.block_until_ready(run_module(x140, w_dw, gamma, beta, w_pw))
    ref = jax.block_until_ready(reference_forward(x140, w_dw, gamma, beta, w_pw))

    assert out.shape == (1, COUT, H, W), out.shape
    # bf16 operands in the 1x1-conv matmul (K=1152, f32 accumulation) bound the
    # max abs error at ~1e-2 vs the f32 reference (output scale ~1), hence the
    # bf16-appropriate tolerance.
    assert jnp.allclose(out, ref, atol=3e-2, rtol=3e-2), \
        float(jnp.max(jnp.abs(out - ref)))
    print("KERNEL_OK")
</pallas_src>

<mosaic_0001>
module attributes {stable_mosaic.version = 11 : i64} {
  func.func @fused_kernel(%arg0: i32, %arg1: memref<9x49x1152xf32, #tpu.memory_space<vmem>>, %arg2: memref<9x1152xf32, #tpu.memory_space<vmem>>, %arg3: memref<1x1152xf32, #tpu.memory_space<vmem>>, %arg4: memref<1x1152xf32, #tpu.memory_space<vmem>>, %arg5: memref<1152x384xbf16, #tpu.memory_space<vmem>>, %arg6: memref<49x384xf32, #tpu.memory_space<vmem>>) attributes {dimension_semantics = [#tpu.dimension_semantics<arbitrary>], iteration_bounds = array<i64: 1>, scalar_prefetch = 0 : i64, scratch_operands = 0 : i64, tpu.core_type = #tpu.core_type<tc>, window_params = [{pipeline_mode = #tpu.pipeline_mode<synchronous>, transform_indices = @transform_0, window_bounds = array<i64: 9, 49, 1152>}, {pipeline_mode = #tpu.pipeline_mode<synchronous>, transform_indices = @transform_1, window_bounds = array<i64: 9, 1152>}, {pipeline_mode = #tpu.pipeline_mode<synchronous>, transform_indices = @transform_2, window_bounds = array<i64: 1, 1152>}, {pipeline_mode = #tpu.pipeline_mode<synchronous>, transform_indices = @transform_3, window_bounds = array<i64: 1, 1152>}, {pipeline_mode = #tpu.pipeline_mode<synchronous>, transform_indices = @transform_4, window_bounds = array<i64: 1152, 384>}, {pipeline_mode = #tpu.pipeline_mode<synchronous>, transform_indices = @transform_5, window_bounds = array<i64: 49, 384>}]} {
    %cst = arith.constant 0.000000e+00 : f32
    %0 = vector.broadcast %cst : f32 to vector<49x384xf32>
    %c0 = arith.constant 0 : index
    %c0_0 = arith.constant 0 : index
    %c0_1 = arith.constant 0 : index
    %1 = vector.load %arg1[%c0, %c0_0, %c0_1] : memref<9x49x1152xf32, #tpu.memory_space<vmem>>, vector<1x49x384xf32>
    %2 = vector.shape_cast %1 : vector<1x49x384xf32> to vector<49x384xf32>
    %cst_2 = arith.constant 0.000000e+00 : f32
    %3 = vector.broadcast %cst_2 : f32 to vector<49x384xf32>
    %4 = arith.maximumf %2, %3 : vector<49x384xf32>
    %c0_3 = arith.constant 0 : index
    %c0_4 = arith.constant 0 : index
    %5 = vector.load %arg2[%c0_3, %c0_4] : memref<9x1152xf32, #tpu.memory_space<vmem>>, vector<1x384xf32>
    %6 = vector.broadcast %5 : vector<1x384xf32> to vector<49x384xf32>
    %7 = arith.mulf %4, %6 : vector<49x384xf32>
    %8 = arith.addf %0, %7 : vector<49x384xf32>
    %c1 = arith.constant 1 : index
    %c0_5 = arith.constant 0 : index
    %c0_6 = arith.constant 0 : index
    %9 = vector.load %arg1[%c1, %c0_5, %c0_6] : memref<9x49x1152xf32, #tpu.memory_space<vmem>>, vector<1x49x384xf32>
    %10 = vector.shape_cast %9 : vector<1x49x384xf32> to vector<49x384xf32>
    %cst_7 = arith.constant 0.000000e+00 : f32
    %11 = vector.broadcast %cst_7 : f32 to vector<49x384xf32>
    %12 = arith.maximumf %10, %11 : vector<49x384xf32>
    %c1_8 = arith.constant 1 : index
    %c0_9 = arith.constant 0 : index
    %13 = vector.load %arg2[%c1_8, %c0_9] : memref<9x1152xf32, #tpu.memory_space<vmem>>, vector<1x384xf32>
    %14 = vector.broadcast %13 : vector<1x384xf32> to vector<49x384xf32>
    %15 = arith.mulf %12, %14 : vector<49x384xf32>
    %16 = arith.addf %8, %15 : vector<49x384xf32>
    %c2 = arith.constant 2 : index
    %c0_10 = arith.constant 0 : index
    %c0_11 = arith.constant 0 : index
    %17 = vector.load %arg1[%c2, %c0_10, %c0_11] : memref<9x49x1152xf32, #tpu.memory_space<vmem>>, vector<1x49x384xf32>
    %18 = vector.shape_cast %17 : vector<1x49x384xf32> to vector<49x384xf32>
    %cst_12 = arith.constant 0.000000e+00 : f32
    %19 = vector.broadcast %cst_12 : f32 to vector<49x384xf32>
    %20 = arith.maximumf %18, %19 : vector<49x384xf32>
    %c2_13 = arith.constant 2 : index
    %c0_14 = arith.constant 0 : index
    %21 = vector.load %arg2[%c2_13, %c0_14] : memref<9x1152xf32, #tpu.memory_space<vmem>>, vector<1x384xf32>
    %22 = vector.broadcast %21 : vector<1x384xf32> to vector<49x384xf32>
    %23 = arith.mulf %20, %22 : vector<49x384xf32>
    %24 = arith.addf %16, %23 : vector<49x384xf32>
    %c3 = arith.constant 3 : index
    %c0_15 = arith.constant 0 : index
    %c0_16 = arith.constant 0 : index
    %25 = vector.load %arg1[%c3, %c0_15, %c0_16] : memref<9x49x1152xf32, #tpu.memory_space<vmem>>, vector<1x49x384xf32>
    %26 = vector.shape_cast %25 : vector<1x49x384xf32> to vector<49x384xf32>
    %cst_17 = arith.constant 0.000000e+00 : f32
    %27 = vector.broadcast %cst_17 : f32 to vector<49x384xf32>
    %28 = arith.maximumf %26, %27 : vector<49x384xf32>
    %c3_18 = arith.constant 3 : index
    %c0_19 = arith.constant 0 : index
    %29 = vector.load %arg2[%c3_18, %c0_19] : memref<9x1152xf32, #tpu.memory_space<vmem>>, vector<1x384xf32>
    %30 = vector.broadcast %29 : vector<1x384xf32> to vector<49x384xf32>
    %31 = arith.mulf %28, %30 : vector<49x384xf32>
    %32 = arith.addf %24, %31 : vector<49x384xf32>
    %c4 = arith.constant 4 : index
    %c0_20 = arith.constant 0 : index
    %c0_21 = arith.constant 0 : index
    %33 = vector.load %arg1[%c4, %c0_20, %c0_21] : memref<9x49x1152xf32, #tpu.memory_space<vmem>>, vector<1x49x384xf32>
    %34 = vector.shape_cast %33 : vector<1x49x384xf32> to vector<49x384xf32>
    %cst_22 = arith.constant 0.000000e+00 : f32
    %35 = vector.broadcast %cst_22 : f32 to vector<49x384xf32>
    %36 = arith.maximumf %34, %35 : vector<49x384xf32>
    %c4_23 = arith.constant 4 : index
    %c0_24 = arith.constant 0 : index
    %37 = vector.load %arg2[%c4_23, %c0_24] : memref<9x1152xf32, #tpu.memory_space<vmem>>, vector<1x384xf32>
    %38 = vector.broadcast %37 : vector<1x384xf32> to vector<49x384xf32>
    %39 = arith.mulf %36, %38 : vector<49x384xf32>
    %40 = arith.addf %32, %39 : vector<49x384xf32>
    %c5 = arith.constant 5 : index
    %c0_25 = arith.constant 0 : index
    %c0_26 = arith.constant 0 : index
    %41 = vector.load %arg1[%c5, %c0_25, %c0_26] : memref<9x49x1152xf32, #tpu.memory_space<vmem>>, vector<1x49x384xf32>
    %42 = vector.shape_cast %41 : vector<1x49x384xf32> to vector<49x384xf32>
    %cst_27 = arith.constant 0.000000e+00 : f32
    %43 = vector.broadcast %cst_27 : f32 to vector<49x384xf32>
    %44 = arith.maximumf %42, %43 : vector<49x384xf32>
    %c5_28 = arith.constant 5 : index
    %c0_29 = arith.constant 0 : index
    %45 = vector.load %arg2[%c5_28, %c0_29] : memref<9x1152xf32, #tpu.memory_space<vmem>>, vector<1x384xf32>
    %46 = vector.broadcast %45 : vector<1x384xf32> to vector<49x384xf32>
    %47 = arith.mulf %44, %46 : vector<49x384xf32>
    %48 = arith.addf %40, %47 : vector<49x384xf32>
    %c6 = arith.constant 6 : index
    %c0_30 = arith.constant 0 : index
    %c0_31 = arith.constant 0 : index
    %49 = vector.load %arg1[%c6, %c0_30, %c0_31] : memref<9x49x1152xf32, #tpu.memory_space<vmem>>, vector<1x49x384xf32>
    %50 = vector.shape_cast %49 : vector<1x49x384xf32> to vector<49x384xf32>
    %cst_32 = arith.constant 0.000000e+00 : f32
    %51 = vector.broadcast %cst_32 : f32 to vector<49x384xf32>
    %52 = arith.maximumf %50, %51 : vector<49x384xf32>
    %c6_33 = arith.constant 6 : index
    %c0_34 = arith.constant 0 : index
    %53 = vector.load %arg2[%c6_33, %c0_34] : memref<9x1152xf32, #tpu.memory_space<vmem>>, vector<1x384xf32>
    %54 = vector.broadcast %53 : vector<1x384xf32> to vector<49x384xf32>
    %55 = arith.mulf %52, %54 : vector<49x384xf32>
    %56 = arith.addf %48, %55 : vector<49x384xf32>
    %c7 = arith.constant 7 : index
    %c0_35 = arith.constant 0 : index
    %c0_36 = arith.constant 0 : index
    %57 = vector.load %arg1[%c7, %c0_35, %c0_36] : memref<9x49x1152xf32, #tpu.memory_space<vmem>>, vector<1x49x384xf32>
    %58 = vector.shape_cast %57 : vector<1x49x384xf32> to vector<49x384xf32>
    %cst_37 = arith.constant 0.000000e+00 : f32
    %59 = vector.broadcast %cst_37 : f32 to vector<49x384xf32>
    %60 = arith.maximumf %58, %59 : vector<49x384xf32>
    %c7_38 = arith.constant 7 : index
    %c0_39 = arith.constant 0 : index
    %61 = vector.load %arg2[%c7_38, %c0_39] : memref<9x1152xf32, #tpu.memory_space<vmem>>, vector<1x384xf32>
    %62 = vector.broadcast %61 : vector<1x384xf32> to vector<49x384xf32>
    %63 = arith.mulf %60, %62 : vector<49x384xf32>
    %64 = arith.addf %56, %63 : vector<49x384xf32>
    %c8 = arith.constant 8 : index
    %c0_40 = arith.constant 0 : index
    %c0_41 = arith.constant 0 : index
    %65 = vector.load %arg1[%c8, %c0_40, %c0_41] : memref<9x49x1152xf32, #tpu.memory_space<vmem>>, vector<1x49x384xf32>
    %66 = vector.shape_cast %65 : vector<1x49x384xf32> to vector<49x384xf32>
    %cst_42 = arith.constant 0.000000e+00 : f32
    %67 = vector.broadcast %cst_42 : f32 to vector<49x384xf32>
    %68 = arith.maximumf %66, %67 : vector<49x384xf32>
    %c8_43 = arith.constant 8 : index
    %c0_44 = arith.constant 0 : index
    %69 = vector.load %arg2[%c8_43, %c0_44] : memref<9x1152xf32, #tpu.memory_space<vmem>>, vector<1x384xf32>
    %70 = vector.broadcast %69 : vector<1x384xf32> to vector<49x384xf32>
    %71 = arith.mulf %68, %70 : vector<49x384xf32>
    %72 = arith.addf %64, %71 : vector<49x384xf32>
    %cst_45 = arith.constant dense<0.000000e+00> : vector<384xf32>
    %73 = vector.multi_reduction <add>, %72, %cst_45 [0] : vector<49x384xf32> to vector<384xf32>
    %74 = vector.shape_cast %73 : vector<384xf32> to vector<1x384xf32>
    %cst_46 = arith.constant 4.900000e+01 : f32
    %75 = vector.broadcast %cst_46 : f32 to vector<1x384xf32>
    %76 = arith.divf %74, %75 : vector<1x384xf32>
    %77 = vector.broadcast %76 : vector<1x384xf32> to vector<49x384xf32>
    %78 = arith.subf %72, %77 : vector<49x384xf32>
    %79 = arith.mulf %78, %78 : vector<49x384xf32>
    %cst_47 = arith.constant dense<0.000000e+00> : vector<384xf32>
    %80 = vector.multi_reduction <add>, %79, %cst_47 [0] : vector<49x384xf32> to vector<384xf32>
    %81 = vector.shape_cast %80 : vector<384xf32> to vector<1x384xf32>
    %cst_48 = arith.constant 4.900000e+01 : f32
    %82 = vector.broadcast %cst_48 : f32 to vector<1x384xf32>
    %83 = arith.divf %81, %82 : vector<1x384xf32>
    %cst_49 = arith.constant 9.99999974E-6 : f32
    %84 = vector.broadcast %cst_49 : f32 to vector<1x384xf32>
    %85 = arith.addf %83, %84 : vector<1x384xf32>
    %86 = math.rsqrt %85 : vector<1x384xf32>
    %87 = vector.broadcast %76 : vector<1x384xf32> to vector<49x384xf32>
    %88 = arith.subf %72, %87 : vector<49x384xf32>
    %89 = vector.broadcast %86 : vector<1x384xf32> to vector<49x384xf32>
    %90 = arith.mulf %88, %89 : vector<49x384xf32>
    %c0_50 = arith.constant 0 : index
    %c0_51 = arith.constant 0 : index
    %91 = vector.load %arg3[%c0_50, %c0_51] : memref<1x1152xf32, #tpu.memory_space<vmem>>, vector<1x384xf32>
    %92 = vector.broadcast %91 : vector<1x384xf32> to vector<49x384xf32>
    %93 = arith.mulf %90, %92 : vector<49x384xf32>
    %c0_52 = arith.constant 0 : index
    %c0_53 = arith.constant 0 : index
    %94 = vector.load %arg4[%c0_52, %c0_53] : memref<1x1152xf32, #tpu.memory_space<vmem>>, vector<1x384xf32>
    %95 = vector.broadcast %94 : vector<1x384xf32> to vector<49x384xf32>
    %96 = arith.addf %93, %95 : vector<49x384xf32>
    %cst_54 = arith.constant 0.000000e+00 : f32
    %97 = vector.broadcast %cst_54 : f32 to vector<49x384xf32>
    %98 = arith.maximumf %96, %97 : vector<49x384xf32>
    %99 = arith.truncf %98 : vector<49x384xf32> to vector<49x384xbf16>
    %c0_55 = arith.constant 0 : index
    %c0_56 = arith.constant 0 : index
    %100 = vector.load %arg5[%c0_55, %c0_56] : memref<1152x384xbf16, #tpu.memory_space<vmem>>, vector<384x384xbf16>
    %cst_57 = arith.constant dense<0.000000e+00> : vector<49x384xf32>
    %101 = tpu.matmul %99, %100, %cst_57 {dimension_numbers = #tpu.dot_dimension_numbers<[1], [0], [0], [1], [0, 0, 1, 1], [], []>} : vector<49x384xbf16>, vector<384x384xbf16>, vector<49x384xf32> -> vector<49x384xf32>
    %c0_58 = arith.constant 0 : index
    %c0_59 = arith.constant 0 : index
    %102 = vector.load %arg6[%c0_58, %c0_59] : memref<49x384xf32, #tpu.memory_space<vmem>>, vector<49x384xf32>
    tpu.vector_store %arg6[%c0_58, %c0_59], %101 {strides = array<i32>} : memref<49x384xf32, #tpu.memory_space<vmem>>, vector<49x384xf32>,
    %cst_60 = arith.constant 0.000000e+00 : f32
    %103 = vector.broadcast %cst_60 : f32 to vector<49x384xf32>
    %c0_61 = arith.constant 0 : index
    %c0_62 = arith.constant 0 : index
    %c384 = arith.constant 384 : index
    %104 = vector.load %arg1[%c0_61, %c0_62, %c384] : memref<9x49x1152xf32, #tpu.memory_space<vmem>>, vector<1x49x384xf32>
    %105 = vector.shape_cast %104 : vector<1x49x384xf32> to vector<49x384xf32>
    %cst_63 = arith.constant 0.000000e+00 : f32
    %106 = vector.broadcast %cst_63 : f32 to vector<49x384xf32>
    %107 = arith.maximumf %105, %106 : vector<49x384xf32>
    %c0_64 = arith.constant 0 : index
    %c384_65 = arith.constant 384 : index
    %108 = vector.load %arg2[%c0_64, %c384_65] : memref<9x1152xf32, #tpu.memory_space<vmem>>, vector<1x384xf32>
    %109 = vector.broadcast %108 : vector<1x384xf32> to vector<49x384xf32>
    %110 = arith.mulf %107, %109 : vector<49x384xf32>
    %111 = arith.addf %103, %110 : vector<49x384xf32>
    %c1_66 = arith.constant 1 : index
    %c0_67 = arith.constant 0 : index
    %c384_68 = arith.constant 384 : index
    %112 = vector.load %arg1[%c1_66, %c0_67, %c384_68] : memref<9x49x1152xf32, #tpu.memory_space<vmem>>, vector<1x49x384xf32>
    %113 = vector.shape_cast %112 : vector<1x49x384xf32> to vector<49x384xf32>
    %cst_69 = arith.constant 0.000000e+00 : f32
    %114 = vector.broadcast %cst_69 : f32 to vector<49x384xf32>
    %115 = arith.maximumf %113, %114 : vector<49x384xf32>
    %c1_70 = arith.constant 1 : index
    %c384_71 = arith.constant 384 : index
    %116 = vector.load %arg2[%c1_70, %c384_71] : memref<9x1152xf32, #tpu.memory_space<vmem>>, vector<1x384xf32>
    %117 = vector.broadcast %116 : vector<1x384xf32> to vector<49x384xf32>
    %118 = arith.mulf %115, %117 : vector<49x384xf32>
    %119 = arith.addf %111, %118 : vector<49x384xf32>
    %c2_72 = arith.constant 2 : index
    %c0_73 = arith.constant 0 : index
    %c384_74 = arith.constant 384 : index
    %120 = vector.load %arg1[%c2_72, %c0_73, %c384_74] : memref<9x49x1152xf32, #tpu.memory_space<vmem>>, vector<1x49x384xf32>
    %121 = vector.shape_cast %120 : vector<1x49x384xf32> to vector<49x384xf32>
    %cst_75 = arith.constant 0.000000e+00 : f32
    %122 = vector.broadcast %cst_75 : f32 to vector<49x384xf32>
    %123 = arith.maximumf %121, %122 : vector<49x384xf32>
    %c2_76 = arith.constant 2 : index
    %c384_77 = arith.constant 384 : index
    %124 = vector.load %arg2[%c2_76, %c384_77] : memref<9x1152xf32, #tpu.memory_space<vmem>>, vector<1x384xf32>
    %125 = vector.broadcast %124 : vector<1x384xf32> to vector<49x384xf32>
    %126 = arith.mulf %123, %125 : vector<49x384xf32>
    %127 = arith.addf %119, %126 : vector<49x384xf32>
    %c3_78 = arith.constant 3 : index
    %c0_79 = arith.constant 0 : index
    %c384_80 = arith.constant 384 : index
    %128 = vector.load %arg1[%c3_78, %c0_79, %c384_80] : memref<9x49x1152xf32, #tpu.memory_space<vmem>>, vector<1x49x384xf32>
    %129 = vector.shape_cast %128 : vector<1x49x384xf32> to vector<49x384xf32>
    %cst_81 = arith.constant 0.000000e+00 : f32
    %130 = vector.broadcast %cst_81 : f32 to vector<49x384xf32>
    %131 = arith.maximumf %129, %130 : vector<49x384xf32>
    %c3_82 = arith.constant 3 : index
    %c384_83 = arith.constant 384 : index
    %132 = vector.load %arg2[%c3_82, %c384_83] : memref<9x1152xf32, #tpu.memory_space<vmem>>, vector<1x384xf32>
    %133 = vector.broadcast %132 : vector<1x384xf32> to vector<49x384xf32>
    %134 = arith.mulf %131, %133 : vector<49x384xf32>
    %135 = arith.addf %127, %134 : vector<49x384xf32>
    %c4_84 = arith.constant 4 : index
    %c0_85 = arith.constant 0 : index
    %c384_86 = arith.constant 384 : index
    %136 = vector.load %arg1[%c4_84, %c0_85, %c384_86] : memref<9x49x1152xf32, #tpu.memory_space<vmem>>, vector<1x49x384xf32>
    %137 = vector.shape_cast %136 : vector<1x49x384xf32> to vector<49x384xf32>
    %cst_87 = arith.constant 0.000000e+00 : f32
    %138 = vector.broadcast %cst_87 : f32 to vector<49x384xf32>
    %139 = arith.maximumf %137, %138 : vector<49x384xf32>
    %c4_88 = arith.constant 4 : index
    %c384_89 = arith.constant 384 : index
    %140 = vector.load %arg2[%c4_88, %c384_89] : memref<9x1152xf32, #tpu.memory_space<vmem>>, vector<1x384xf32>
    %141 = vector.broadcast %140 : vector<1x384xf32> to vector<49x384xf32>
    %142 = arith.mulf %139, %141 : vector<49x384xf32>
    %143 = arith.addf %135, %142 : vector<49x384xf32>
    %c5_90 = arith.constant 5 : index
    %c0_91 = arith.constant 0 : index
    %c384_92 = arith.constant 384 : index
    %144 = vector.load %arg1[%c5_90, %c0_91, %c384_92] : memref<9x49x1152xf32, #tpu.memory_space<vmem>>, vector<1x49x384xf32>
    %145 = vector.shape_cast %144 : vector<1x49x384xf32> to vector<49x384xf32>
    %cst_93 = arith.constant 0.000000e+00 : f32
    %146 = vector.broadcast %cst_93 : f32 to vector<49x384xf32>
    %147 = arith.maximumf %145, %146 : vector<49x384xf32>
    %c5_94 = arith.constant 5 : index
    %c384_95 = arith.constant 384 : index
    %148 = vector.load %arg2[%c5_94, %c384_95] : memref<9x1152xf32, #tpu.memory_space<vmem>>, vector<1x384xf32>
    %149 = vector.broadcast %148 : vector<1x384xf32> to vector<49x384xf32>
    %150 = arith.mulf %147, %149 : vector<49x384xf32>
    %151 = arith.addf %143, %150 : vector<49x384xf32>
    %c6_96 = arith.constant 6 : index
    %c0_97 = arith.constant 0 : index
    %c384_98 = arith.constant 384 : index
    %152 = vector.load %arg1[%c6_96, %c0_97, %c384_98] : memref<9x49x1152xf32, #tpu.memory_space<vmem>>, vector<1x49x384xf32>
    %153 = vector.shape_cast %152 : vector<1x49x384xf32> to vector<49x384xf32>
    %cst_99 = arith.constant 0.000000e+00 : f32
    %154 = vector.broadcast %cst_99 : f32 to vector<49x384xf32>
    %155 = arith.maximumf %153, %154 : vector<49x384xf32>
    %c6_100 = arith.constant 6 : index
    %c384_101 = arith.constant 384 : index
    %156 = vector.load %arg2[%c6_100, %c384_101] : memref<9x1152xf32, #tpu.memory_space<vmem>>, vector<1x384xf32>
    %157 = vector.broadcast %156 : vector<1x384xf32> to vector<49x384xf32>
    %158 = arith.mulf %155, %157 : vector<49x384xf32>
    %159 = arith.addf %151, %158 : vector<49x384xf32>
    %c7_102 = arith.constant 7 : index
    %c0_103 = arith.constant 0 : index
    %c384_104 = arith.constant 384 : index
    %160 = vector.load %arg1[%c7_102, %c0_103, %c384_104] : memref<9x49x1152xf32, #tpu.memory_space<vmem>>, vector<1x49x384xf32>
    %161 = vector.shape_cast %160 : vector<1x49x384xf32> to vector<49x384xf32>
    %cst_105 = arith.constant 0.000000e+00 : f32
    %162 = vector.broadcast %cst_105 : f32 to vector<49x384xf32>
    %163 = arith.maximumf %161, %162 : vector<49x384xf32>
    %c7_106 = arith.constant 7 : index
    %c384_107 = arith.constant 384 : index
    %164 = vector.load %arg2[%c7_106, %c384_107] : memref<9x1152xf32, #tpu.memory_space<vmem>>, vector<1x384xf32>
    %165 = vector.broadcast %164 : vector<1x384xf32> to vector<49x384xf32>
    %166 = arith.mulf %163, %165 : vector<49x384xf32>
    %167 = arith.addf %159, %166 : vector<49x384xf32>
    %c8_108 = arith.constant 8 : index
    %c0_109 = arith.constant 0 : index
    %c384_110 = arith.constant 384 : index
    %168 = vector.load %arg1[%c8_108, %c0_109, %c384_110] : memref<9x49x1152xf32, #tpu.memory_space<vmem>>, vector<1x49x384xf32>
    %169 = vector.shape_cast %168 : vector<1x49x384xf32> to vector<49x384xf32>
    %cst_111 = arith.constant 0.000000e+00 : f32
    %170 = vector.broadcast %cst_111 : f32 to vector<49x384xf32>
    %171 = arith.maximumf %169, %170 : vector<49x384xf32>
    %c8_112 = arith.constant 8 : index
    %c384_113 = arith.constant 384 : index
    %172 = vector.load %arg2[%c8_112, %c384_113] : memref<9x1152xf32, #tpu.memory_space<vmem>>, vector<1x384xf32>
    %173 = vector.broadcast %172 : vector<1x384xf32> to vector<49x384xf32>
    %174 = arith.mulf %171, %173 : vector<49x384xf32>
    %175 = arith.addf %167, %174 : vector<49x384xf32>
    %cst_114 = arith.constant dense<0.000000e+00> : vector<384xf32>
    %176 = vector.multi_reduction <add>, %175, %cst_114 [0] : vector<49x384xf32> to vector<384xf32>
    %177 = vector.shape_cast %176 : vector<384xf32> to vector<1x384xf32>
    %cst_115 = arith.constant 4.900000e+01 : f32
    %178 = vector.broadcast %cst_115 : f32 to vector<1x384xf32>
    %179 = arith.divf %177, %178 : vector<1x384xf32>
    %180 = vector.broadcast %179 : vector<1x384xf32> to vector<49x384xf32>
    %181 = arith.subf %175, %180 : vector<49x384xf32>
    %182 = arith.mulf %181, %181 : vector<49x384xf32>
    %cst_116 = arith.constant dense<0.000000e+00> : vector<384xf32>
    %183 = vector.multi_reduction <add>, %182, %cst_116 [0] : vector<49x384xf32> to vector<384xf32>
    %184 = vector.shape_cast %183 : vector<384xf32> to vector<1x384xf32>
    %cst_117 = arith.constant 4.900000e+01 : f32
    %185 = vector.broadcast %cst_117 : f32 to vector<1x384xf32>
    %186 = arith.divf %184, %185 : vector<1x384xf32>
    %cst_118 = arith.constant 9.99999974E-6 : f32
    %187 = vector.broadcast %cst_118 : f32 to vector<1x384xf32>
    %188 = arith.addf %186, %187 : vector<1x384xf32>
    %189 = math.rsqrt %188 : vector<1x384xf32>
    %190 = vector.broadcast %179 : vector<1x384xf32> to vector<49x384xf32>
    %191 = arith.subf %175, %190 : vector<49x384xf32>
    %192 = vector.broadcast %189 : vector<1x384xf32> to vector<49x384xf32>
    %193 = arith.mulf %191, %192 : vector<49x384xf32>
    %c0_119 = arith.constant 0 : index
    %c384_120 = arith.constant 384 : index
    %194 = vector.load %arg3[%c0_119, %c384_120] : memref<1x1152xf32, #tpu.memory_space<vmem>>, vector<1x384xf32>
    %195 = vector.broadcast %194 : vector<1x384xf32> to vector<49x384xf32>
    %196 = arith.mulf %193, %195 : vector<49x384xf32>
    %c0_121 = arith.constant 0 : index
    %c384_122 = arith.constant 384 : index
    %197 = vector.load %arg4[%c0_121, %c384_122] : memref<1x1152xf32, #tpu.memory_space<vmem>>, vector<1x384xf32>
    %198 = vector.broadcast %197 : vector<1x384xf32> to vector<49x384xf32>
    %199 = arith.addf %196, %198 : vector<49x384xf32>
    %cst_123 = arith.constant 0.000000e+00 : f32
    %200 = vector.broadcast %cst_123 : f32 to vector<49x384xf32>
    %201 = arith.maximumf %199, %200 : vector<49x384xf32>
    %202 = arith.truncf %201 : vector<49x384xf32> to vector<49x384xbf16>
    %c384_124 = arith.constant 384 : index
    %c0_125 = arith.constant 0 : index
    %203 = vector.load %arg5[%c384_124, %c0_125] : memref<1152x384xbf16, #tpu.memory_space<vmem>>, vector<384x384xbf16>
    %cst_126 = arith.constant dense<0.000000e+00> : vector<49x384xf32>
    %204 = tpu.matmul %202, %203, %cst_126 {dimension_numbers = #tpu.dot_dimension_numbers<[1], [0], [0], [1], [0, 0, 1, 1], [], []>} : vector<49x384xbf16>, vector<384x384xbf16>, vector<49x384xf32> -> vector<49x384xf32>
    %c0_127 = arith.constant 0 : index
    %c0_128 = arith.constant 0 : index
    %205 = vector.load %arg6[%c0_127, %c0_128] : memref<49x384xf32, #tpu.memory_space<vmem>>, vector<49x384xf32>
    %206 = arith.addf %205, %204 : vector<49x384xf32>
    %c0_129 = arith.constant 0 : index
    %c0_130 = arith.constant 0 : index
    %207 = vector.load %arg6[%c0_129, %c0_130] : memref<49x384xf32, #tpu.memory_space<vmem>>, vector<49x384xf32>
    tpu.vector_store %arg6[%c0_129, %c0_130], %206 {strides = array<i32>} : memref<49x384xf32, #tpu.memory_space<vmem>>, vector<49x384xf32>,
    %cst_131 = arith.constant 0.000000e+00 : f32
    %208 = vector.broadcast %cst_131 : f32 to vector<49x384xf32>
    %c0_132 = arith.constant 0 : index
    %c0_133 = arith.constant 0 : index
    %c768 = arith.constant 768 : index
    %209 = vector.load %arg1[%c0_132, %c0_133, %c768] : memref<9x49x1152xf32, #tpu.memory_space<vmem>>, vector<1x49x384xf32>
    %210 = vector.shape_cast %209 : vector<1x49x384xf32> to vector<49x384xf32>
    %cst_134 = arith.constant 0.000000e+00 : f32
    %211 = vector.broadcast %cst_134 : f32 to vector<49x384xf32>
    %212 = arith.maximumf %210, %211 : vector<49x384xf32>
    %c0_135 = arith.constant 0 : index
    %c768_136 = arith.constant 768 : index
    %213 = vector.load %arg2[%c0_135, %c768_136] : memref<9x1152xf32, #tpu.memory_space<vmem>>, vector<1x384xf32>
    %214 = vector.broadcast %213 : vector<1x384xf32> to vector<49x384xf32>
    %215 = arith.mulf %212, %214 : vector<49x384xf32>
    %216 = arith.addf %208, %215 : vector<49x384xf32>
    %c1_137 = arith.constant 1 : index
    %c0_138 = arith.constant 0 : index
    %c768_139 = arith.constant 768 : index
    %217 = vector.load %arg1[%c1_137, %c0_138, %c768_139] : memref<9x49x1152xf32, #tpu.memory_space<vmem>>, vector<1x49x384xf32>
    %218 = vector.shape_cast %217 : vector<1x49x384xf32> to vector<49x384xf32>
    %cst_140 = arith.constant 0.000000e+00 : f32
    %219 = vector.broadcast %cst_140 : f32 to vector<49x384xf32>
    %220 = arith.maximumf %218, %219 : vector<49x384xf32>
    %c1_141 = arith.constant 1 : index
    %c768_142 = arith.constant 768 : index
    %221 = vector.load %arg2[%c1_141, %c768_142] : memref<9x1152xf32, #tpu.memory_space<vmem>>, vector<1x384xf32>
    %222 = vector.broadcast %221 : vector<1x384xf32> to vector<49x384xf32>
    %223 = arith.mulf %220, %222 : vector<49x384xf32>
    %224 = arith.addf %216, %223 : vector<49x384xf32>
    %c2_143 = arith.constant 2 : index
    %c0_144 = arith.constant 0 : index
    %c768_145 = arith.constant 768 : index
    %225 = vector.load %arg1[%c2_143, %c0_144, %c768_145] : memref<9x49x1152xf32, #tpu.memory_space<vmem>>, vector<1x49x384xf32>
    %226 = vector.shape_cast %225 : vector<1x49x384xf32> to vector<49x384xf32>
    %cst_146 = arith.constant 0.000000e+00 : f32
    %227 = vector.broadcast %cst_146 : f32 to vector<49x384xf32>
    %228 = arith.maximumf %226, %227 : vector<49x384xf32>
    %c2_147 = arith.constant 2 : index
    %c768_148 = arith.constant 768 : index
    %229 = vector.load %arg2[%c2_147, %c768_148] : memref<9x1152xf32, #tpu.memory_space<vmem>>, vector<1x384xf32>
    %230 = vector.broadcast %229 : vector<1x384xf32> to vector<49x384xf32>
    %231 = arith.mulf %228, %230 : vector<49x384xf32>
    %232 = arith.addf %224, %231 : vector<49x384xf32>
    %c3_149 = arith.constant 3 : index
    %c0_150 = arith.constant 0 : index
    %c768_151 = arith.constant 768 : index
    %233 = vector.load %arg1[%c3_149, %c0_150, %c768_151] : memref<9x49x1152xf32, #tpu.memory_space<vmem>>, vector<1x49x384xf32>
    %234 = vector.shape_cast %233 : vector<1x49x384xf32> to vector<49x384xf32>
    %cst_152 = arith.constant 0.000000e+00 : f32
    %235 = vector.broadcast %cst_152 : f32 to vector<49x384xf32>
    %236 = arith.maximumf %234, %235 : vector<49x384xf32>
    %c3_153 = arith.constant 3 : index
    %c768_154 = arith.constant 768 : index
    %237 = vector.load %arg2[%c3_153, %c768_154] : memref<9x1152xf32, #tpu.memory_space<vmem>>, vector<1x384xf32>
    %238 = vector.broadcast %237 : vector<1x384xf32> to vector<49x384xf32>
    %239 = arith.mulf %236, %238 : vector<49x384xf32>
    %240 = arith.addf %232, %239 : vector<49x384xf32>
    %c4_155 = arith.constant 4 : index
    %c0_156 = arith.constant 0 : index
    %c768_157 = arith.constant 768 : index
    %241 = vector.load %arg1[%c4_155, %c0_156, %c768_157] : memref<9x49x1152xf32, #tpu.memory_space<vmem>>, vector<1x49x384xf32>
    %242 = vector.shape_cast %241 : vector<1x49x384xf32> to vector<49x384xf32>
    %cst_158 = arith.constant 0.000000e+00 : f32
    %243 = vector.broadcast %cst_158 : f32 to vector<49x384xf32>
    %244 = arith.maximumf %242, %243 : vector<49x384xf32>
    %c4_159 = arith.constant 4 : index
    %c768_160 = arith.constant 768 : index
    %245 = vector.load %arg2[%c4_159, %c768_160] : memref<9x1152xf32, #tpu.memory_space<vmem>>, vector<1x384xf32>
    %246 = vector.broadcast %245 : vector<1x384xf32> to vector<49x384xf32>
    %247 = arith.mulf %244, %246 : vector<49x384xf32>
    %248 = arith.addf %240, %247 : vector<49x384xf32>
    %c5_161 = arith.constant 5 : index
    %c0_162 = arith.constant 0 : index
    %c768_163 = arith.constant 768 : index
    %249 = vector.load %arg1[%c5_161, %c0_162, %c768_163] : memref<9x49x1152xf32, #tpu.memory_space<vmem>>, vector<1x49x384xf32>
    %250 = vector.shape_cast %249 : vector<1x49x384xf32> to vector<49x384xf32>
    %cst_164 = arith.constant 0.000000e+00 : f32
    %251 = vector.broadcast %cst_164 : f32 to vector<49x384xf32>
    %252 = arith.maximumf %250, %251 : vector<49x384xf32>
    %c5_165 = arith.constant 5 : index
    %c768_166 = arith.constant 768 : index
    %253 = vector.load %arg2[%c5_165, %c768_166] : memref<9x1152xf32, #tpu.memory_space<vmem>>, vector<1x384xf32>
    %254 = vector.broadcast %253 : vector<1x384xf32> to vector<49x384xf32>
    %255 = arith.mulf %252, %254 : vector<49x384xf32>
    %256 = arith.addf %248, %255 : vector<49x384xf32>
    %c6_167 = arith.constant 6 : index
    %c0_168 = arith.constant 0 : index
    %c768_169 = arith.constant 768 : index
    %257 = vector.load %arg1[%c6_167, %c0_168, %c768_169] : memref<9x49x1152xf32, #tpu.memory_space<vmem>>, vector<1x49x384xf32>
    %258 = vector.shape_cast %257 : vector<1x49x384xf32> to vector<49x384xf32>
    %cst_170 = arith.constant 0.000000e+00 : f32
    %259 = vector.broadcast %cst_170 : f32 to vector<49x384xf32>
    %260 = arith.maximumf %258, %259 : vector<49x384xf32>
    %c6_171 = arith.constant 6 : index
    %c768_172 = arith.constant 768 : index
    %261 = vector.load %arg2[%c6_171, %c768_172] : memref<9x1152xf32, #tpu.memory_space<vmem>>, vector<1x384xf32>
    %262 = vector.broadcast %261 : vector<1x384xf32> to vector<49x384xf32>
    %263 = arith.mulf %260, %262 : vector<49x384xf32>
    %264 = arith.addf %256, %263 : vector<49x384xf32>
    %c7_173 = arith.constant 7 : index
    %c0_174 = arith.constant 0 : index
    %c768_175 = arith.constant 768 : index
    %265 = vector.load %arg1[%c7_173, %c0_174, %c768_175] : memref<9x49x1152xf32, #tpu.memory_space<vmem>>, vector<1x49x384xf32>
    %266 = vector.shape_cast %265 : vector<1x49x384xf32> to vector<49x384xf32>
    %cst_176 = arith.constant 0.000000e+00 : f32
    %267 = vector.broadcast %cst_176 : f32 to vector<49x384xf32>
    %268 = arith.maximumf %266, %267 : vector<49x384xf32>
    %c7_177 = arith.constant 7 : index
    %c768_178 = arith.constant 768 : index
    %269 = vector.load %arg2[%c7_177, %c768_178] : memref<9x1152xf32, #tpu.memory_space<vmem>>, vector<1x384xf32>
    %270 = vector.broadcast %269 : vector<1x384xf32> to vector<49x384xf32>
    %271 = arith.mulf %268, %270 : vector<49x384xf32>
    %272 = arith.addf %264, %271 : vector<49x384xf32>
    %c8_179 = arith.constant 8 : index
    %c0_180 = arith.constant 0 : index
    %c768_181 = arith.constant 768 : index
    %273 = vector.load %arg1[%c8_179, %c0_180, %c768_181] : memref<9x49x1152xf32, #tpu.memory_space<vmem>>, vector<1x49x384xf32>
    %274 = vector.shape_cast %273 : vector<1x49x384xf32> to vector<49x384xf32>
    %cst_182 = arith.constant 0.000000e+00 : f32
    %275 = vector.broadcast %cst_182 : f32 to vector<49x384xf32>
    %276 = arith.maximumf %274, %275 : vector<49x384xf32>
    %c8_183 = arith.constant 8 : index
    %c768_184 = arith.constant 768 : index
    %277 = vector.load %arg2[%c8_183, %c768_184] : memref<9x1152xf32, #tpu.memory_space<vmem>>, vector<1x384xf32>
    %278 = vector.broadcast %277 : vector<1x384xf32> to vector<49x384xf32>
    %279 = arith.mulf %276, %278 : vector<49x384xf32>
    %280 = arith.addf %272, %279 : vector<49x384xf32>
    %cst_185 = arith.constant dense<0.000000e+00> : vector<384xf32>
    %281 = vector.multi_reduction <add>, %280, %cst_185 [0] : vector<49x384xf32> to vector<384xf32>
    %282 = vector.shape_cast %281 : vector<384xf32> to vector<1x384xf32>
    %cst_186 = arith.constant 4.900000e+01 : f32
    %283 = vector.broadcast %cst_186 : f32 to vector<1x384xf32>
    %284 = arith.divf %282, %283 : vector<1x384xf32>
    %285 = vector.broadcast %284 : vector<1x384xf32> to vector<49x384xf32>
    %286 = arith.subf %280, %285 : vector<49x384xf32>
    %287 = arith.mulf %286, %286 : vector<49x384xf32>
    %cst_187 = arith.constant dense<0.000000e+00> : vector<384xf32>
    %288 = vector.multi_reduction <add>, %287, %cst_187 [0] : vector<49x384xf32> to vector<384xf32>
    %289 = vector.shape_cast %288 : vector<384xf32> to vector<1x384xf32>
    %cst_188 = arith.constant 4.900000e+01 : f32
    %290 = vector.broadcast %cst_188 : f32 to vector<1x384xf32>
    %291 = arith.divf %289, %290 : vector<1x384xf32>
    %cst_189 = arith.constant 9.99999974E-6 : f32
    %292 = vector.broadcast %cst_189 : f32 to vector<1x384xf32>
    %293 = arith.addf %291, %292 : vector<1x384xf32>
    %294 = math.rsqrt %293 : vector<1x384xf32>
    %295 = vector.broadcast %284 : vector<1x384xf32> to vector<49x384xf32>
    %296 = arith.subf %280, %295 : vector<49x384xf32>
    %297 = vector.broadcast %294 : vector<1x384xf32> to vector<49x384xf32>
    %298 = arith.mulf %296, %297 : vector<49x384xf32>
    %c0_190 = arith.constant 0 : index
    %c768_191 = arith.constant 768 : index
    %299 = vector.load %arg3[%c0_190, %c768_191] : memref<1x1152xf32, #tpu.memory_space<vmem>>, vector<1x384xf32>
    %300 = vector.broadcast %299 : vector<1x384xf32> to vector<49x384xf32>
    %301 = arith.mulf %298, %300 : vector<49x384xf32>
    %c0_192 = arith.constant 0 : index
    %c768_193 = arith.constant 768 : index
    %302 = vector.load %arg4[%c0_192, %c768_193] : memref<1x1152xf32, #tpu.memory_space<vmem>>, vector<1x384xf32>
    %303 = vector.broadcast %302 : vector<1x384xf32> to vector<49x384xf32>
    %304 = arith.addf %301, %303 : vector<49x384xf32>
    %cst_194 = arith.constant 0.000000e+00 : f32
    %305 = vector.broadcast %cst_194 : f32 to vector<49x384xf32>
    %306 = arith.maximumf %304, %305 : vector<49x384xf32>
    %307 = arith.truncf %306 : vector<49x384xf32> to vector<49x384xbf16>
    %c768_195 = arith.constant 768 : index
    %c0_196 = arith.constant 0 : index
    %308 = vector.load %arg5[%c768_195, %c0_196] : memref<1152x384xbf16, #tpu.memory_space<vmem>>, vector<384x384xbf16>
    %cst_197 = arith.constant dense<0.000000e+00> : vector<49x384xf32>
    %309 = tpu.matmul %307, %308, %cst_197 {dimension_numbers = #tpu.dot_dimension_numbers<[1], [0], [0], [1], [0, 0, 1, 1], [], []>} : vector<49x384xbf16>, vector<384x384xbf16>, vector<49x384xf32> -> vector<49x384xf32>
    %c0_198 = arith.constant 0 : index
    %c0_199 = arith.constant 0 : index
    %310 = vector.load %arg6[%c0_198, %c0_199] : memref<49x384xf32, #tpu.memory_space<vmem>>, vector<49x384xf32>
    %311 = arith.addf %310, %309 : vector<49x384xf32>
    %c0_200 = arith.constant 0 : index
    %c0_201 = arith.constant 0 : index
    %312 = vector.load %arg6[%c0_200, %c0_201] : memref<49x384xf32, #tpu.memory_space<vmem>>, vector<49x384xf32>
    tpu.vector_store %arg6[%c0_200, %c0_201], %311 {strides = array<i32>} : memref<49x384xf32, #tpu.memory_space<vmem>>, vector<49x384xf32>,
    return
  }
  func.func @transform_0(%arg0: i32) -> (i32, i32, i32) {
    %c0_i32 = arith.constant 0 : i32
    %c0_i32_0 = arith.constant 0 : i32
    %c0_i32_1 = arith.constant 0 : i32
    %c0_i32_2 = arith.constant 0 : i32
    return %c0_i32, %c0_i32_0, %c0_i32_1 : i32, i32, i32
  }
  func.func @transform_1(%arg0: i32) -> (i32, i32) {
    %c0_i32 = arith.constant 0 : i32
    %c0_i32_0 = arith.constant 0 : i32
    %c0_i32_1 = arith.constant 0 : i32
    return %c0_i32, %c0_i32_0 : i32, i32
  }
  func.func @transform_2(%arg0: i32) -> (i32, i32) {
    %c0_i32 = arith.constant 0 : i32
    %c0_i32_0 = arith.constant 0 : i32
    %c0_i32_1 = arith.constant 0 : i32
    return %c0_i32, %c0_i32_0 : i32, i32
  }
  func.func @transform_3(%arg0: i32) -> (i32, i32) {
    %c0_i32 = arith.constant 0 : i32
    %c0_i32_0 = arith.constant 0 : i32
    %c0_i32_1 = arith.constant 0 : i32
    return %c0_i32, %c0_i32_0 : i32, i32
  }
  func.func @transform_4(%arg0: i32) -> (i32, i32) {
    %c0_i32 = arith.constant 0 : i32
    %c0_i32_0 = arith.constant 0 : i32
    %c0_i32_1 = arith.constant 0 : i32
    return %c0_i32, %c0_i32_0 : i32, i32
  }
  func.func @transform_5(%arg0: i32) -> (i32, i32) {
    %c0_i32 = arith.constant 0 : i32
    %c0_i32_0 = arith.constant 0 : i32
    %c0_i32_1 = arith.constant 0 : i32
    return %c0_i32, %c0_i32_0 : i32, i32
  }
}

</mosaic_0001>

<llo_original>
// kernel: squeeze.4
$region0: #{squeeze.4}
  %s0 = inlined_call_operand.vmem [shape: f32[1152,3,3], index: 0, kind: input, shape index: {}]
  %s1 = inlined_call_operand.vmem [shape: f32[1152,9], index: 1, kind: output, shape index: {}]
  $region1: #{squeeze.4} parent=0
    #allocation0 [shape = 'u8[110592]{0}', space=vmem, size = 0x1b000, scoped, tag = 'scoped mem for input reshape']
    %s3 = ssub.s32 16, 1
    %s4 = scalar_lea.vmem %s0, 104
    %v5 = vld [vmem:[%s4] sm:%s3]
    %s6 = scalar_lea.vmem [#allocation0], 208
    %7 = vst [vmem:[%s6] sm:%s3] %v5
    %s8 = scalar_lea.vmem %s0, 100
    %v9 = vld [vmem:[%s8] sm:%s3]
    %s10 = scalar_lea.vmem [#allocation0], 200
    %11 = vst [vmem:[%s10] sm:%s3] %v9
    %s12 = scalar_lea.vmem %s0, 96
    %v13 = vld [vmem:[%s12] sm:%s3]
    %s14 = scalar_lea.vmem [#allocation0], 192
    %15 = vst [vmem:[%s14] sm:%s3] %v13
    %s16 = scalar_lea.vmem %s0, 92
    %v17 = vld [vmem:[%s16] sm:%s3]
    %s18 = scalar_lea.vmem [#allocation0], 184
    %19 = vst [vmem:[%s18] sm:%s3] %v17
    %s20 = scalar_lea.vmem %s0, 88
    %v21 = vld [vmem:[%s20] sm:%s3]
    %s22 = scalar_lea.vmem [#allocation0], 176
    %23 = vst [vmem:[%s22] sm:%s3] %v21
    %s24 = scalar_lea.vmem %s0, 84
    %v25 = vld [vmem:[%s24] sm:%s3]
    %s26 = scalar_lea.vmem [#allocation0], 168
    %27 = vst [vmem:[%s26] sm:%s3] %v25
    %s28 = scalar_lea.vmem %s0, 80
    %v29 = vld [vmem:[%s28] sm:%s3]
    %s30 = scalar_lea.vmem [#allocation0], 160
    %31 = vst [vmem:[%s30] sm:%s3] %v29
    %s32 = scalar_lea.vmem %s0, 76
    %v33 = vld [vmem:[%s32] sm:%s3]
    %s34 = scalar_lea.vmem [#allocation0], 152
    %35 = vst [vmem:[%s34] sm:%s3] %v33
    %s36 = scalar_lea.vmem %s0, 72
    %v37 = vld [vmem:[%s36] sm:%s3]
    %s38 = scalar_lea.vmem [#allocation0], 144
    %39 = vst [vmem:[%s38] sm:%s3] %v37
    %s40 = scalar_lea.vmem %s0, 68
    %v41 = vld [vmem:[%s40] sm:%s3]
    %s42 = scalar_lea.vmem [#allocation0], 136
    %43 = vst [vmem:[%s42] sm:%s3] %v41
    %s44 = scalar_lea.vmem %s0, 64
    %v45 = vld [vmem:[%s44] sm:%s3]
    %s46 = scalar_lea.vmem [#allocation0], 128
    %47 = vst [vmem:[%s46] sm:%s3] %v45
    %s48 = scalar_lea.vmem %s0, 60
    %v49 = vld [vmem:[%s48] sm:%s3]
    %s50 = scalar_lea.vmem [#allocation0], 120
    %51 = vst [vmem:[%s50] sm:%s3] %v49
    %s52 = scalar_lea.vmem %s0, 56
    %v53 = vld [vmem:[%s52] sm:%s3]
    %s54 = scalar_lea.vmem [#allocation0], 112
    %55 = vst [vmem:[%s54] sm:%s3] %v53
    %s56 = scalar_lea.vmem %s0, 52
    %v57 = vld [vmem:[%s56] sm:%s3]
    %s58 = scalar_lea.vmem [#allocation0], 104
    %59 = vst [vmem:[%s58] sm:%s3] %v57
    %s60 = scalar_lea.vmem %s0, 48
    %v61 = vld [vmem:[%s60] sm:%s3]
    %s62 = scalar_lea.vmem [#allocation0], 96
    %63 = vst [vmem:[%s62] sm:%s3] %v61
    %s64 = scalar_lea.vmem %s0, 44
    %v65 = vld [vmem:[%s64] sm:%s3]
    %s66 = scalar_lea.vmem [#allocation0], 88
    %67 = vst [vmem:[%s66] sm:%s3] %v65
    %s68 = scalar_lea.vmem %s0, 40
    %v69 = vld [vmem:[%s68] sm:%s3]
    %s70 = scalar_lea.vmem [#allocation0], 80
    %71 = vst [vmem:[%s70] sm:%s3] %v69
    %s72 = scalar_lea.vmem %s0, 36
    %v73 = vld [vmem:[%s72] sm:%s3]
    %s74 = scalar_lea.vmem [#allocation0], 72
    %75 = vst [vmem:[%s74] sm:%s3] %v73
    %s76 = scalar_lea.vmem %s0, 32
    %v77 = vld [vmem:[%s76] sm:%s3]
    %s78 = scalar_lea.vmem [#allocation0], 64
    %79 = vst [vmem:[%s78] sm:%s3] %v77
    %s80 = scalar_lea.vmem %s0, 28
    %v81 = vld [vmem:[%s80] sm:%s3]
    %s82 = scalar_lea.vmem [#allocation0], 56
    %83 = vst [vmem:[%s82] sm:%s3] %v81
    %s84 = scalar_lea.vmem %s0, 24
    %v85 = vld [vmem:[%s84] sm:%s3]
    %s86 = scalar_lea.vmem [#allocation0], 48
    %87 = vst [vmem:[%s86] sm:%s3] %v85
    %s88 = scalar_lea.vmem %s0, 20
    %v89 = vld [vmem:[%s88] sm:%s3]
    %s90 = scalar_lea.vmem [#allocation0], 40
    %91 = vst [vmem:[%s90] sm:%s3] %v89
    %s92 = scalar_lea.vmem %s0, 16
    %v93 = vld [vmem:[%s92] sm:%s3]
    %s94 = scalar_lea.vmem [#allocation0], 32
    %95 = vst [vmem:[%s94] sm:%s3] %v93
    %s96 = scalar_lea.vmem %s0, 12
    %v97 = vld [vmem:[%s96] sm:%s3]
    %s98 = scalar_lea.vmem [#allocation0], 24
    %99 = vst [vmem:[%s98] sm:%s3] %v97
    %s100 = scalar_lea.vmem %s0, 8
    %v101 = vld [vmem:[%s100] sm:%s3]
    %s102 = scalar_lea.vmem [#allocation0], 16
    %103 = vst [vmem:[%s102] sm:%s3] %v101
    %s104 = scalar_lea.vmem %s0, 4
    %v105 = vld [vmem:[%s104] sm:%s3]
    %s106 = scalar_lea.vmem [#allocation0], 8
    %107 = vst [vmem:[%s106] sm:%s3] %v105
    %v108 = vld [vmem:[%s0] sm:%s3]
    %109 = vst [vmem:[#allocation0] sm:%s3] %v108
    %v110 = vld [vmem:[#allocation0] sm:$0x7]
    %111 = vst [vmem:[%s1] sm:$0x7] %v110
    %s112 = scalar_lea.vmem [#allocation0], 8
    %v113 = vld [vmem:[%s112] sm:$0x7]
    %s114 = scalar_lea.vmem %s1, 8
    %115 = vst [vmem:[%s114] sm:$0x7] %v113
    %s116 = scalar_lea.vmem [#allocation0], 16
    %v117 = vld [vmem:[%s116] sm:$0x7]
    %s118 = scalar_lea.vmem %s1, 16
    %119 = vst [vmem:[%s118] sm:$0x7] %v117
    %s120 = scalar_lea.vmem [#allocation0], 24
    %v121 = vld [vmem:[%s120] sm:$0x7]
    %s122 = scalar_lea.vmem %s1, 24
    %123 = vst [vmem:[%s122] sm:$0x7] %v121
    %s124 = scalar_lea.vmem [#allocation0], 32
    %v125 = vld [vmem:[%s124] sm:$0x7]
    %s126 = scalar_lea.vmem %s1, 32
    %127 = vst [vmem:[%s126] sm:$0x7] %v125
    %s128 = scalar_lea.vmem [#allocation0], 40
    %v129 = vld [vmem:[%s128] sm:$0x7]
    %s130 = scalar_lea.vmem %s1, 40
    %131 = vst [vmem:[%s130] sm:$0x7] %v129
    %s132 = scalar_lea.vmem [#allocation0], 48
    %v133 = vld [vmem:[%s132] sm:$0x7]
    %s134 = scalar_lea.vmem %s1, 48
    %135 = vst [vmem:[%s134] sm:$0x7] %v133
    %s136 = scalar_lea.vmem [#allocation0], 56
    %v137 = vld [vmem:[%s136] sm:$0x7]
    %s138 = scalar_lea.vmem %s1, 56
    %139 = vst [vmem:[%s138] sm:$0x7] %v137
    %s140 = scalar_lea.vmem [#allocation0], 64
    %v141 = vld [vmem:[%s140] sm:$0x7]
    %s142 = scalar_lea.vmem %s1, 64
    %143 = vst [vmem:[%s142] sm:$0x7] %v141
    %s144 = scalar_lea.vmem [#allocation0], 72
    %v145 = vld [vmem:[%s144] sm:$0x7]
    %s146 = scalar_lea.vmem %s1, 3
    %147 = vst [vmem:[%s146] sm:$0x7] %v145
    %s148 = scalar_lea.vmem [#allocation0], 80
    %v149 = vld [vmem:[%s148] sm:$0x7]
    %s150 = scalar_lea.vmem %s1, 11
    %151 = vst [vmem:[%s150] sm:$0x7] %v149
    %s152 = scalar_lea.vmem [#allocation0], 88
    %v153 = vld [vmem:[%s152] sm:$0x7]
    %s154 = scalar_lea.vmem %s1, 19
    %155 = vst [vmem:[%s154] sm:$0x7] %v153
    %s156 = scalar_lea.vmem [#allocation0], 96
    %v157 = vld [vmem:[%s156] sm:$0x7]
    %s158 = scalar_lea.vmem %s1, 27
    %159 = vst [vmem:[%s158] sm:$0x7] %v157
    %s160 = scalar_lea.vmem [#allocation0], 104
    %v161 = vld [vmem:[%s160] sm:$0x7]
    %s162 = scalar_lea.vmem %s1, 35
    %163 = vst [vmem:[%s162] sm:$0x7] %v161
    %s164 = scalar_lea.vmem [#allocation0], 112
    %v165 = vld [vmem:[%s164] sm:$0x7]
    %s166 = scalar_lea.vmem %s1, 43
    %167 = vst [vmem:[%s166] sm:$0x7] %v165
    %s168 = scalar_lea.vmem [#allocation0], 120
    %v169 = vld [vmem:[%s168] sm:$0x7]
    %s170 = scalar_lea.vmem %s1, 51
    %171 = vst [vmem:[%s170] sm:$0x7] %v169
    %s172 = scalar_lea.vmem [#allocation0], 128
    %v173 = vld [vmem:[%s172] sm:$0x7]
    %s174 = scalar_lea.vmem %s1, 59
    %175 = vst [vmem:[%s174] sm:$0x7] %v173
    %s176 = scalar_lea.vmem [#allocation0], 136
    %v177 = vld [vmem:[%s176] sm:$0x7]
    %s178 = scalar_lea.vmem %s1, 67
    %179 = vst [vmem:[%s178] sm:$0x7] %v177
    %s180 = scalar_lea.vmem [#allocation0], 144
    %v181 = vld [vmem:[%s180] sm:$0x7]
    %s182 = scalar_lea.vmem %s1, 6
    %183 = vst [vmem:[%s182] sm:$0x3] %v181
    %s184 = scalar_lea.vmem %s1, 70
    %185 = vst [vmem:[%s184] sm:$0x4] %v181
    %s186 = scalar_lea.vmem [#allocation0], 152
    %v187 = vld [vmem:[%s186] sm:$0x7]
    %s188 = scalar_lea.vmem %s1, 14
    %189 = vst [vmem:[%s188] sm:$0x3] %v187
    %s190 = scalar_lea.vmem %s1, 78
    %191 = vst [vmem:[%s190] sm:$0x4] %v187
    %s192 = scalar_lea.vmem [#allocation0], 160
    %v193 = vld [vmem:[%s192] sm:$0x7]
    %s194 = scalar_lea.vmem %s1, 22
    %195 = vst [vmem:[%s194] sm:$0x3] %v193
    %s196 = scalar_lea.vmem %s1, 86
    %197 = vst [vmem:[%s196] sm:$0x4] %v193
    %s198 = scalar_lea.vmem [#allocation0], 168
    %v199 = vld [vmem:[%s198] sm:$0x7]
    %s200 = scalar_lea.vmem %s1, 30
    %201 = vst [vmem:[%s200] sm:$0x3] %v199
    %s202 = scalar_lea.vmem %s1, 94
    %203 = vst [vmem:[%s202] sm:$0x4] %v199
    %s204 = scalar_lea.vmem [#allocation0], 176
    %v205 = vld [vmem:[%s204] sm:$0x7]
    %s206 = scalar_lea.vmem %s1, 38
    %207 = vst [vmem:[%s206] sm:$0x3] %v205
    %s208 = scalar_lea.vmem %s1, 102
    %209 = vst [vmem:[%s208] sm:$0x4] %v205
    %s210 = scalar_lea.vmem [#allocation0], 184
    %v211 = vld [vmem:[%s210] sm:$0x7]
    %s212 = scalar_lea.vmem %s1, 46
    %213 = vst [vmem:[%s212] sm:$0x3] %v211
    %s214 = scalar_lea.vmem %s1, 110
    %215 = vst [vmem:[%s214] sm:$0x4] %v211
    %s216 = scalar_lea.vmem [#allocation0], 192
    %v217 = vld [vmem:[%s216] sm:$0x7]
    %s218 = scalar_lea.vmem %s1, 54
    %219 = vst [vmem:[%s218] sm:$0x3] %v217
    %s220 = scalar_lea.vmem %s1, 118
    %221 = vst [vmem:[%s220] sm:$0x4] %v217
    %s222 = scalar_lea.vmem [#allocation0], 200
    %v223 = vld [vmem:[%s222] sm:$0x7]
    %s224 = scalar_lea.vmem %s1, 62
    %225 = vst [vmem:[%s224] sm:$0x3] %v223
    %s226 = scalar_lea.vmem %s1, 126
    %227 = vst [vmem:[%s226] sm:$0x4] %v223
    %s228 = scalar_lea.vmem [#allocation0], 208
    %v229 = vld [vmem:[%s228] sm:$0x7]
    %s230 = scalar_lea.vmem %s1, 70
    %231 = vst [vmem:[%s230] sm:$0x3] %v229
    %s232 = scalar_lea.vmem %s1, 134
    %233 = vst [vmem:[%s232] sm:$0x4] %v229

// kernel: run_module.1
$region0: #{run_module.1}
  #allocation0 [shape = 'u32[]', space=smem, size = 0x4, offset = 0x4, fixed_abs, tag = 'smem constant byte address 0x4 - core index']
  #allocation1 [shape = 'u32[72,128]{1,0:T(1,128)}', space=vmem, size = 0x9000, scoped, tag = 'internal scratch']
  %s0 = inlined_call_operand.vmem [shape: f32[9,49,1152], index: 0, kind: input, shape index: {}]
  %s1 = inlined_call_operand.vmem [shape: f32[9,1152], index: 1, kind: input, shape index: {}]
  %s2 = inlined_call_operand.vmem [shape: f32[1,1152], index: 2, kind: input, shape index: {}]
  %s3 = inlined_call_operand.vmem [shape: f32[1,1152], index: 3, kind: input, shape index: {}]
  %s4 = inlined_call_operand.vmem [shape: bf16[1152,384], index: 4, kind: input, shape index: {}]
  %s5 = inlined_call_operand.vmem [shape: f32[49,384], index: 5, kind: output, shape index: {}]
  %s6 = sld [smem:[#allocation0]]
  $region30: #{run_module.1} parent=0
    _
  %s8 = ssub.s32 1, %s6
  %s9 = scalar_select 0, %s8, %s6
  // Predicated region
  $region2: #{run_module.1} parent=0 // pred_check
    _
  $region3: #{run_module.1} parent=0 // pred_check_branch
    %11 = sbr.rel (0) target = $region5
  $region4: #{run_module.1} parent=0 // pred_region
    _
  $region5: #{run_module.1} parent=0 // pred_fallthru
    _
  // Predicated region
  $region6: #{run_module.1} parent=0 // pred_check
    _
  $region7: #{run_module.1} parent=0 // pred_check_branch
    %13 = sbr.rel (0) target = $region9
  $region8: #{run_module.1} parent=0 // pred_region
    _
  $region9: #{run_module.1} parent=0 // pred_fallthru
    _
  // Predicated region
  $region10: #{run_module.1} parent=0 // pred_check
    _
  $region11: #{run_module.1} parent=0 // pred_check_branch
    %15 = sbr.rel (0) target = $region13
  $region12: #{run_module.1} parent=0 // pred_region
    _
  $region13: #{run_module.1} parent=0 // pred_fallthru
    _
  // Predicated region
  $region14: #{run_module.1} parent=0 // pred_check
    _
  $region15: #{run_module.1} parent=0 // pred_check_branch
    %17 = sbr.rel (0) target = $region17
  $region16: #{run_module.1} parent=0 // pred_region
    _
  $region17: #{run_module.1} parent=0 // pred_fallthru
    _
  // Predicated region
  $region18: #{run_module.1} parent=0 // pred_check
    _
  $region19: #{run_module.1} parent=0 // pred_check_branch
    %19 = sbr.rel (0) target = $region21
  $region20: #{run_module.1} parent=0 // pred_region
    _
  $region21: #{run_module.1} parent=0 // pred_fallthru
    _
  %v20 = vld [vmem:[%s0] sm:$0xff]
  %v21 = vld [vmem:[%s0 + $0x8] sm:$0xff]
  %v22 = vld [vmem:[%s0 + $0x10] sm:$0xff]
  %v23 = vld [vmem:[%s0 + $0x48] sm:$0xff]
  %v24 = vld [vmem:[%s0 + $0x50] sm:$0xff]
  %v25 = vld [vmem:[%s0 + $0x58] sm:$0xff]
  %v26 = vld [vmem:[%s0 + $0x90] sm:$0xff]
  %v27 = vld [vmem:[%s0 + $0x98] sm:$0xff]
  %v28 = vld [vmem:[%s0 + $0xa0] sm:$0xff]
  %v29 = vld [vmem:[%s0 + $0xd8] sm:$0xff]
  %v30 = vld [vmem:[%s0 + $0xe0] sm:$0xff]
  %v31 = vld [vmem:[%s0 + $0xe8] sm:$0xff]
  %v32 = vld [vmem:[%s0 + $0x120] sm:$0xff]
  %v33 = vld [vmem:[%s0 + $0x128] sm:$0xff]
  %v34 = vld [vmem:[%s0 + $0x130] sm:$0xff]
  %v35 = vld [vmem:[%s0 + $0x168] sm:$0xff]
  %v36 = vld [vmem:[%s0 + $0x170] sm:$0xff]
  %v37 = vld [vmem:[%s0 + $0x178] sm:$0xff]
  %v38 = vld [vmem:[%s0 + $0x1b0] sm:$0x1]
  %v39 = vld [vmem:[%s0 + $0x1b8] sm:$0x1]
  %v40 = vld [vmem:[%s0 + $0x1c0] sm:$0x1]
  %v41 = vmax.f32 %v20, 0.0
  %v42 = vmax.f32 %v21, 0.0
  %v43 = vmax.f32 %v22, 0.0
  %v44 = vmax.f32 %v23, 0.0
  %v45 = vmax.f32 %v24, 0.0
  %v46 = vmax.f32 %v25, 0.0
  %v47 = vmax.f32 %v26, 0.0
  %v48 = vmax.f32 %v27, 0.0
  %v49 = vmax.f32 %v28, 0.0
  %v50 = vmax.f32 %v29, 0.0
  %v51 = vmax.f32 %v30, 0.0
  %v52 = vmax.f32 %v31, 0.0
  %v53 = vmax.f32 %v32, 0.0
  %v54 = vmax.f32 %v33, 0.0
  %v55 = vmax.f32 %v34, 0.0
  %v56 = vmax.f32 %v35, 0.0
  %v57 = vmax.f32 %v36, 0.0
  %v58 = vmax.f32 %v37, 0.0
  %v59 = vmax.f32 %v38, 0.0
  %v60 = vmax.f32 %v39, 0.0
  %v61 = vmax.f32 %v40, 0.0
  %v62 = vld [vmem:[%s1] ss:$8 sm:$0x7]
  %v64 = vperm.slane %v62, 0
  %v65 = vperm.slane %v62, 1
  %v66 = vperm.slane %v62, 2
  %v70 = vmul.f32 %v41, %v64
  %v71 = vmul.f32 %v42, %v65
  %v72 = vmul.f32 %v43, %v66
  %v73 = vmul.f32 %v44, %v64
  %v74 = vmul.f32 %v45, %v65
  %v75 = vmul.f32 %v46, %v66
  %v76 = vmul.f32 %v47, %v64
  %v77 = vmul.f32 %v48, %v65
  %v78 = vmul.f32 %v49, %v66
  %v79 = vmul.f32 %v50, %v64
  %v80 = vmul.f32 %v51, %v65
  %v81 = vmul.f32 %v52, %v66
  %v82 = vmul.f32 %v53, %v64
  %v83 = vmul.f32 %v54, %v65
  %v84 = vmul.f32 %v55, %v66
  %v85 = vmul.f32 %v56, %v64
  %v86 = vmul.f32 %v57, %v65
  %v87 = vmul.f32 %v58, %v66
  %v88 = vmul.f32 %v59, %v64
  %v89 = vmul.f32 %v60, %v65
  %v90 = vmul.f32 %v61, %v66
  %v91 = vadd.f32 %v70, 0.0
  %v92 = vadd.f32 %v71, 0.0
  %v93 = vadd.f32 %v72, 0.0
  %v94 = vadd.f32 %v73, 0.0
  %v95 = vadd.f32 %v74, 0.0
  %v96 = vadd.f32 %v75, 0.0
  %v97 = vadd.f32 %v76, 0.0
  %v98 = vadd.f32 %v77, 0.0
  %v99 = vadd.f32 %v78, 0.0
  %v100 = vadd.f32 %v79, 0.0
  %v101 = vadd.f32 %v80, 0.0
  %v102 = vadd.f32 %v81, 0.0
  %v103 = vadd.f32 %v82, 0.0
  %v104 = vadd.f32 %v83, 0.0
  %v105 = vadd.f32 %v84, 0.0
  %v106 = vadd.f32 %v85, 0.0
  %v107 = vadd.f32 %v86, 0.0
  %v108 = vadd.f32 %v87, 0.0
  %v109 = vadd.f32 %v88, 0.0
  %v110 = vadd.f32 %v89, 0.0
  %v111 = vadd.f32 %v90, 0.0
  %s112 = scalar_lea.vmem %s0, 504
  %v113 = vld [vmem:[%s112] sm:$0xff]
  %v114 = vld [vmem:[%s112 + $0x8] sm:$0xff]
  %v115 = vld [vmem:[%s112 + $0x10] sm:$0xff]
  %v116 = vld [vmem:[%s112 + $0x48] sm:$0xff]
  %v117 = vld [vmem:[%s112 + $0x50] sm:$0xff]
  %v118 = vld [vmem:[%s112 + $0x58] sm:$0xff]
  %v119 = vld [vmem:[%s112 + $0x90] sm:$0xff]
  %v120 = vld [vmem:[%s112 + $0x98] sm:$0xff]
  %v121 = vld [vmem:[%s112 + $0xa0] sm:$0xff]
  %v122 = vld [vmem:[%s112 + $0xd8] sm:$0xff]
  %v123 = vld [vmem:[%s112 + $0xe0] sm:$0xff]
  %v124 = vld [vmem:[%s112 + $0xe8] sm:$0xff]
  %v125 = vld [vmem:[%s112 + $0x120] sm:$0xff]
  %v126 = vld [vmem:[%s112 + $0x128] sm:$0xff]
  %v127 = vld [vmem:[%s112 + $0x130] sm:$0xff]
  %v128 = vld [vmem:[%s112 + $0x168] sm:$0xff]
  %v129 = vld [vmem:[%s112 + $0x170] sm:$0xff]
  %v130 = vld [vmem:[%s112 + $0x178] sm:$0xff]
  %v131 = vld [vmem:[%s112 + $0x1b0] sm:$0x1]
  %v132 = vld [vmem:[%s112 + $0x1b8] sm:$0x1]
  %v133 = vld [vmem:[%s112 + $0x1c0] sm:$0x1]
  %v134 = vmax.f32 %v113, 0.0
  %v135 = vmax.f32 %v114, 0.0
  %v136 = vmax.f32 %v115, 0.0
  %v137 = vmax.f32 %v116, 0.0
  %v138 = vmax.f32 %v117, 0.0
  %v139 = vmax.f32 %v118, 0.0
  %v140 = vmax.f32 %v119, 0.0
  %v141 = vmax.f32 %v120, 0.0
  %v142 = vmax.f32 %v121, 0.0
  %v143 = vmax.f32 %v122, 0.0
  %v144 = vmax.f32 %v123, 0.0
  %v145 = vmax.f32 %v124, 0.0
  %v146 = vmax.f32 %v125, 0.0
  %v147 = vmax.f32 %v126, 0.0
  %v148 = vmax.f32 %v127, 0.0
  %v149 = vmax.f32 %v128, 0.0
  %v150 = vmax.f32 %v129, 0.0
  %v151 = vmax.f32 %v130, 0.0
  %v152 = vmax.f32 %v131, 0.0
  %v153 = vmax.f32 %v132, 0.0
  %v154 = vmax.f32 %v133, 0.0
  %s155 = scalar_lea.vmem %s1, 1
  %v156 = vld [vmem:[%s155] ss:$8 sm:$0x7]
  %v158 = vperm.slane %v156, 0
  %v159 = vperm.slane %v156, 1
  %v160 = vperm.slane %v156, 2
  %v164 = vmul.f32 %v134, %v158
  %v165 = vmul.f32 %v135, %v159
  %v166 = vmul.f32 %v136, %v160
  %v167 = vmul.f32 %v137, %v158
  %v168 = vmul.f32 %v138, %v159
  %v169 = vmul.f32 %v139, %v160
  %v170 = vmul.f32 %v140, %v158
  %v171 = vmul.f32 %v141, %v159
  %v172 = vmul.f32 %v142, %v160
  %v173 = vmul.f32 %v143, %v158
  %v174 = vmul.f32 %v144, %v159
  %v175 = vmul.f32 %v145, %v160
  %v176 = vmul.f32 %v146, %v158
  %v177 = vmul.f32 %v147, %v159
  %v178 = vmul.f32 %v148, %v160
  %v179 = vmul.f32 %v149, %v158
  %v180 = vmul.f32 %v150, %v159
  %v181 = vmul.f32 %v151, %v160
  %v182 = vmul.f32 %v152, %v158
  %v183 = vmul.f32 %v153, %v159
  %v184 = vmul.f32 %v154, %v160
  %v185 = vadd.f32 %v91, %v164
  %v186 = vadd.f32 %v92, %v165
  %v187 = vadd.f32 %v93, %v166
  %v188 = vadd.f32 %v94, %v167
  %v189 = vadd.f32 %v95, %v168
  %v190 = vadd.f32 %v96, %v169
  %v191 = vadd.f32 %v97, %v170
  %v192 = vadd.f32 %v98, %v171
  %v193 = vadd.f32 %v99, %v172
  %v194 = vadd.f32 %v100, %v173
  %v195 = vadd.f32 %v101, %v174
  %v196 = vadd.f32 %v102, %v175
  %v197 = vadd.f32 %v103, %v176
  %v198 = vadd.f32 %v104, %v177
  %v199 = vadd.f32 %v105, %v178
  %v200 = vadd.f32 %v106, %v179
  %v201 = vadd.f32 %v107, %v180
  %v202 = vadd.f32 %v108, %v181
  %v203 = vadd.f32 %v109, %v182
  %v204 = vadd.f32 %v110, %v183
  %v205 = vadd.f32 %v111, %v184
  %s206 = scalar_lea.vmem %s0, 1008
  %v207 = vld [vmem:[%s206] sm:$0xff]
  %v208 = vld [vmem:[%s206 + $0x8] sm:$0xff]
  %v209 = vld [vmem:[%s206 + $0x10] sm:$0xff]
  %v210 = vld [vmem:[%s206 + $0x48] sm:$0xff]
  %v211 = vld [vmem:[%s206 + $0x50] sm:$0xff]
  %v212 = vld [vmem:[%s206 + $0x58] sm:$0xff]
  %v213 = vld [vmem:[%s206 + $0x90] sm:$0xff]
  %v214 = vld [vmem:[%s206 + $0x98] sm:$0xff]
  %v215 = vld [vmem:[%s206 + $0xa0] sm:$0xff]
  %v216 = vld [vmem:[%s206 + $0xd8] sm:$0xff]
  %v217 = vld [vmem:[%s206 + $0xe0] sm:$0xff]
  %v218 = vld [vmem:[%s206 + $0xe8] sm:$0xff]
  %v219 = vld [vmem:[%s206 + $0x120] sm:$0xff]
  %v220 = vld [vmem:[%s206 + $0x128] sm:$0xff]
  %v221 = vld [vmem:[%s206 + $0x130] sm:$0xff]
  %v222 = vld [vmem:[%s206 + $0x168] sm:$0xff]
  %v223 = vld [vmem:[%s206 + $0x170] sm:$0xff]
  %v224 = vld [vmem:[%s206 + $0x178] sm:$0xff]
  %v225 = vld [vmem:[%s206 + $0x1b0] sm:$0x1]
  %v226 = vld [vmem:[%s206 + $0x1b8] sm:$0x1]
  %v227 = vld [vmem:[%s206 + $0x1c0] sm:$0x1]
  %v228 = vmax.f32 %v207, 0.0
  %v229 = vmax.f32 %v208, 0.0
  %v230 = vmax.f32 %v209, 0.0
  %v231 = vmax.f32 %v210, 0.0
  %v232 = vmax.f32 %v211, 0.0
  %v233 = vmax.f32 %v212, 0.0
  %v234 = vmax.f32 %v213, 0.0
  %v235 = vmax.f32 %v214, 0.0
  %v236 = vmax.f32 %v215, 0.0
  %v237 = vmax.f32 %v216, 0.0
  %v238 = vmax.f32 %v217, 0.0
  %v239 = vmax.f32 %v218, 0.0
  %v240 = vmax.f32 %v219, 0.0
  %v241 = vmax.f32 %v220, 0.0
  %v242 = vmax.f32 %v221, 0.0
  %v243 = vmax.f32 %v222, 0.0
  %v244 = vmax.f32 %v223, 0.0
  %v245 = vmax.f32 %v224, 0.0
  %v246 = vmax.f32 %v225, 0.0
  %v247 = vmax.f32 %v226, 0.0
  %v248 = vmax.f32 %v227, 0.0
  %s249 = scalar_lea.vmem %s1, 2
  %v250 = vld [vmem:[%s249] ss:$8 sm:$0x7]
  %v252 = vperm.slane %v250, 0
  %v253 = vperm.slane %v250, 1
  %v254 = vperm.slane %v250, 2
  %v258 = vmul.f32 %v228, %v252
  %v259 = vmul.f32 %v229, %v253
  %v260 = vmul.f32 %v230, %v254
  %v261 = vmul.f32 %v231, %v252
  %v262 = vmul.f32 %v232, %v253
  %v263 = vmul.f32 %v233, %v254
  %v264 = vmul.f32 %v234, %v252
  %v265 = vmul.f32 %v235, %v253
  %v266 = vmul.f32 %v236, %v254
  %v267 = vmul.f32 %v237, %v252
  %v268 = vmul.f32 %v238, %v253
  %v269 = vmul.f32 %v239, %v254
  %v270 = vmul.f32 %v240, %v252
  %v271 = vmul.f32 %v241, %v253
  %v272 = vmul.f32 %v242, %v254
  %v273 = vmul.f32 %v243, %v252
  %v274 = vmul.f32 %v244, %v253
  %v275 = vmul.f32 %v245, %v254
  %v276 = vmul.f32 %v246, %v252
  %v277 = vmul.f32 %v247, %v253
  %v278 = vmul.f32 %v248, %v254
  %v279 = vadd.f32 %v185, %v258
  %v280 = vadd.f32 %v186, %v259
  %v281 = vadd.f32 %v187, %v260
  %v282 = vadd.f32 %v188, %v261
  %v283 = vadd.f32 %v189, %v262
  %v284 = vadd.f32 %v190, %v263
  %v285 = vadd.f32 %v191, %v264
  %v286 = vadd.f32 %v192, %v265
  %v287 = vadd.f32 %v193, %v266
  %v288 = vadd.f32 %v194, %v267
  %v289 = vadd.f32 %v195, %v268
  %v290 = vadd.f32 %v196, %v269
  %v291 = vadd.f32 %v197, %v270
  %v292 = vadd.f32 %v198, %v271
  %v293 = vadd.f32 %v199, %v272
  %v294 = vadd.f32 %v200, %v273
  %v295 = vadd.f32 %v201, %v274
  %v296 = vadd.f32 %v202, %v275
  %v297 = vadd.f32 %v203, %v276
  %v298 = vadd.f32 %v204, %v277
  %v299 = vadd.f32 %v205, %v278
  %s300 = scalar_lea.vmem %s0, 1512
  %v301 = vld [vmem:[%s300] sm:$0xff]
  %v302 = vld [vmem:[%s300 + $0x8] sm:$0xff]
  %v303 = vld [vmem:[%s300 + $0x10] sm:$0xff]
  %v304 = vld [vmem:[%s300 + $0x48] sm:$0xff]
  %v305 = vld [vmem:[%s300 + $0x50] sm:$0xff]
  %v306 = vld [vmem:[%s300 + $0x58] sm:$0xff]
  %v307 = vld [vmem:[%s300 + $0x90] sm:$0xff]
  %v308 = vld [vmem:[%s300 + $0x98] sm:$0xff]
  %v309 = vld [vmem:[%s300 + $0xa0] sm:$0xff]
  %v310 = vld [vmem:[%s300 + $0xd8] sm:$0xff]
  %v311 = vld [vmem:[%s300 + $0xe0] sm:$0xff]
  %v312 = vld [vmem:[%s300 + $0xe8] sm:$0xff]
  %v313 = vld [vmem:[%s300 + $0x120] sm:$0xff]
  %v314 = vld [vmem:[%s300 + $0x128] sm:$0xff]
  %v315 = vld [vmem:[%s300 + $0x130] sm:$0xff]
  %v316 = vld [vmem:[%s300 + $0x168] sm:$0xff]
  %v317 = vld [vmem:[%s300 + $0x170] sm:$0xff]
  %v318 = vld [vmem:[%s300 + $0x178] sm:$0xff]
  %v319 = vld [vmem:[%s300 + $0x1b0] sm:$0x1]
  %v320 = vld [vmem:[%s300 + $0x1b8] sm:$0x1]
  %v321 = vld [vmem:[%s300 + $0x1c0] sm:$0x1]
  %v322 = vmax.f32 %v301, 0.0
  %v323 = vmax.f32 %v302, 0.0
  %v324 = vmax.f32 %v303, 0.0
  %v325 = vmax.f32 %v304, 0.0
  %v326 = vmax.f32 %v305, 0.0
  %v327 = vmax.f32 %v306, 0.0
  %v328 = vmax.f32 %v307, 0.0
  %v329 = vmax.f32 %v308, 0.0
  %v330 = vmax.f32 %v309, 0.0
  %v331 = vmax.f32 %v310, 0.0
  %v332 = vmax.f32 %v311, 0.0
  %v333 = vmax.f32 %v312, 0.0
  %v334 = vmax.f32 %v313, 0.0
  %v335 = vmax.f32 %v314, 0.0
  %v336 = vmax.f32 %v315, 0.0
  %v337 = vmax.f32 %v316, 0.0
  %v338 = vmax.f32 %v317, 0.0
  %v339 = vmax.f32 %v318, 0.0
  %v340 = vmax.f32 %v319, 0.0
  %v341 = vmax.f32 %v320, 0.0
  %v342 = vmax.f32 %v321, 0.0
  %s343 = scalar_lea.vmem %s1, 3
  %v344 = vld [vmem:[%s343] ss:$8 sm:$0x7]
  %v346 = vperm.slane %v344, 0
  %v347 = vperm.slane %v344, 1
  %v348 = vperm.slane %v344, 2
  %v352 = vmul.f32 %v322, %v346
  %v353 = vmul.f32 %v323, %v347
  %v354 = vmul.f32 %v324, %v348
  %v355 = vmul.f32 %v325, %v346
  %v356 = vmul.f32 %v326, %v347
  %v357 = vmul.f32 %v327, %v348
  %v358 = vmul.f32 %v328, %v346
  %v359 = vmul.f32 %v329, %v347
  %v360 = vmul.f32 %v330, %v348
  %v361 = vmul.f32 %v331, %v346
  %v362 = vmul.f32 %v332, %v347
  %v363 = vmul.f32 %v333, %v348
  %v364 = vmul.f32 %v334, %v346
  %v365 = vmul.f32 %v335, %v347
  %v366 = vmul.f32 %v336, %v348
  %v367 = vmul.f32 %v337, %v346
  %v368 = vmul.f32 %v338, %v347
  %v369 = vmul.f32 %v339, %v348
  %v370 = vmul.f32 %v340, %v346
  %v371 = vmul.f32 %v341, %v347
  %v372 = vmul.f32 %v342, %v348
  %v373 = vadd.f32 %v279, %v352
  %v374 = vadd.f32 %v280, %v353
  %v375 = vadd.f32 %v281, %v354
  %v376 = vadd.f32 %v282, %v355
  %v377 = vadd.f32 %v283, %v356
  %v378 = vadd.f32 %v284, %v357
  %v379 = vadd.f32 %v285, %v358
  %v380 = vadd.f32 %v286, %v359
  %v381 = vadd.f32 %v287, %v360
  %v382 = vadd.f32 %v288, %v361
  %v383 = vadd.f32 %v289, %v362
  %v384 = vadd.f32 %v290, %v363
  %v385 = vadd.f32 %v291, %v364
  %v386 = vadd.f32 %v292, %v365
  %v387 = vadd.f32 %v293, %v366
  %v388 = vadd.f32 %v294, %v367
  %v389 = vadd.f32 %v295, %v368
  %v390 = vadd.f32 %v296, %v369
  %v391 = vadd.f32 %v297, %v370
  %v392 = vadd.f32 %v298, %v371
  %v393 = vadd.f32 %v299, %v372
  %s394 = scalar_lea.vmem %s0, 2016
  %v395 = vld [vmem:[%s394] sm:$0xff]
  %v396 = vld [vmem:[%s394 + $0x8] sm:$0xff]
  %v397 = vld [vmem:[%s394 + $0x10] sm:$0xff]
  %v398 = vld [vmem:[%s394 + $0x48] sm:$0xff]
  %v399 = vld [vmem:[%s394 + $0x50] sm:$0xff]
  %v400 = vld [vmem:[%s394 + $0x58] sm:$0xff]
  %v401 = vld [vmem:[%s394 + $0x90] sm:$0xff]
  %v402 = vld [vmem:[%s394 + $0x98] sm:$0xff]
  %v403 = vld [vmem:[%s394 + $0xa0] sm:$0xff]
  %v404 = vld [vmem:[%s394 + $0xd8] sm:$0xff]
  %v405 = vld [vmem:[%s394 + $0xe0] sm:$0xff]
  %v406 = vld [vmem:[%s394 + $0xe8] sm:$0xff]
  %v407 = vld [vmem:[%s394 + $0x120] sm:$0xff]
  %v408 = vld [vmem:[%s394 + $0x128] sm:$0xff]
  %v409 = vld [vmem:[%s394 + $0x130] sm:$0xff]
  %v410 = vld [vmem:[%s394 + $0x168] sm:$0xff]
  %v411 = vld [vmem:[%s394 + $0x170] sm:$0xff]
  %v412 = vld [vmem:[%s394 + $0x178] sm:$0xff]
  %v413 = vld [vmem:[%s394 + $0x1b0] sm:$0x1]
  %v414 = vld [vmem:[%s394 + $0x1b8] sm:$0x1]
  %v415 = vld [vmem:[%s394 + $0x1c0] sm:$0x1]
  %v416 = vmax.f32 %v395, 0.0
  %v417 = vmax.f32 %v396, 0.0
  %v418 = vmax.f32 %v397, 0.0
  %v419 = vmax.f32 %v398, 0.0
  %v420 = vmax.f32 %v399, 0.0
  %v421 = vmax.f32 %v400, 0.0
  %v422 = vmax.f32 %v401, 0.0
  %v423 = vmax.f32 %v402, 0.0
  %v424 = vmax.f32 %v403, 0.0
  %v425 = vmax.f32 %v404, 0.0
  %v426 = vmax.f32 %v405, 0.0
  %v427 = vmax.f32 %v406, 0.0
  %v428 = vmax.f32 %v407, 0.0
  %v429 = vmax.f32 %v408, 0.0
  %v430 = vmax.f32 %v409, 0.0
  %v431 = vmax.f32 %v410, 0.0
  %v432 = vmax.f32 %v411, 0.0
  %v433 = vmax.f32 %v412, 0.0
  %v434 = vmax.f32 %v413, 0.0
  %v435 = vmax.f32 %v414, 0.0
  %v436 = vmax.f32 %v415, 0.0
  %s437 = scalar_lea.vmem %s1, 4
  %v438 = vld [vmem:[%s437] ss:$8 sm:$0x7]
  %v440 = vperm.slane %v438, 0
  %v441 = vperm.slane %v438, 1
  %v442 = vperm.slane %v438, 2
  %v446 = vmul.f32 %v416, %v440
  %v447 = vmul.f32 %v417, %v441
  %v448 = vmul.f32 %v418, %v442
  %v449 = vmul.f32 %v419, %v440
  %v450 = vmul.f32 %v420, %v441
  %v451 = vmul.f32 %v421, %v442
  %v452 = vmul.f32 %v422, %v440
  %v453 = vmul.f32 %v423, %v441
  %v454 = vmul.f32 %v424, %v442
  %v455 = vmul.f32 %v425, %v440
  %v456 = vmul.f32 %v426, %v441
  %v457 = vmul.f32 %v427, %v442
  %v458 = vmul.f32 %v428, %v440
  %v459 = vmul.f32 %v429, %v441
  %v460 = vmul.f32 %v430, %v442
  %v461 = vmul.f32 %v431, %v440
  %v462 = vmul.f32 %v432, %v441
  %v463 = vmul.f32 %v433, %v442
  %v464 = vmul.f32 %v434, %v440
  %v465 = vmul.f32 %v435, %v441
  %v466 = vmul.f32 %v436, %v442
  %v467 = vadd.f32 %v373, %v446
  %v468 = vadd.f32 %v374, %v447
  %v469 = vadd.f32 %v375, %v448
  %v470 = vadd.f32 %v376, %v449
  %v471 = vadd.f32 %v377, %v450
  %v472 = vadd.f32 %v378, %v451
  %v473 = vadd.f32 %v379, %v452
  %v474 = vadd.f32 %v380, %v453
  %v475 = vadd.f32 %v381, %v454
  %v476 = vadd.f32 %v382, %v455
  %v477 = vadd.f32 %v383, %v456
  %v478 = vadd.f32 %v384, %v457
  %v479 = vadd.f32 %v385, %v458
  %v480 = vadd.f32 %v386, %v459
  %v481 = vadd.f32 %v387, %v460
  %v482 = vadd.f32 %v388, %v461
  %v483 = vadd.f32 %v389, %v462
  %v484 = vadd.f32 %v390, %v463
  %v485 = vadd.f32 %v391, %v464
  %v486 = vadd.f32 %v392, %v465
  %v487 = vadd.f32 %v393, %v466
  %s488 = scalar_lea.vmem %s0, 2520
  %v489 = vld [vmem:[%s488] sm:$0xff]
  %v490 = vld [vmem:[%s488 + $0x8] sm:$0xff]
  %v491 = vld [vmem:[%s488 + $0x10] sm:$0xff]
  %v492 = vld [vmem:[%s488 + $0x48] sm:$0xff]
  %v493 = vld [vmem:[%s488 + $0x50] sm:$0xff]
  %v494 = vld [vmem:[%s488 + $0x58] sm:$0xff]
  %v495 = vld [vmem:[%s488 + $0x90] sm:$0xff]
  %v496 = vld [vmem:[%s488 + $0x98] sm:$0xff]
  %v497 = vld [vmem:[%s488 + $0xa0] sm:$0xff]
  %v498 = vld [vmem:[%s488 + $0xd8] sm:$0xff]
  %v499 = vld [vmem:[%s488 + $0xe0] sm:$0xff]
  %v500 = vld [vmem:[%s488 + $0xe8] sm:$0xff]
  %v501 = vld [vmem:[%s488 + $0x120] sm:$0xff]
  %v502 = vld [vmem:[%s488 + $0x128] sm:$0xff]
  %v503 = vld [vmem:[%s488 + $0x130] sm:$0xff]
  %v504 = vld [vmem:[%s488 + $0x168] sm:$0xff]
  %v505 = vld [vmem:[%s488 + $0x170] sm:$0xff]
  %v506 = vld [vmem:[%s488 + $0x178] sm:$0xff]
  %v507 = vld [vmem:[%s488 + $0x1b0] sm:$0x1]
  %v508 = vld [vmem:[%s488 + $0x1b8] sm:$0x1]
  %v509 = vld [vmem:[%s488 + $0x1c0] sm:$0x1]
  %v510 = vmax.f32 %v489, 0.0
  %v511 = vmax.f32 %v490, 0.0
  %v512 = vmax.f32 %v491, 0.0
  %v513 = vmax.f32 %v492, 0.0
  %v514 = vmax.f32 %v493, 0.0
  %v515 = vmax.f32 %v494, 0.0
  %v516 = vmax.f32 %v495, 0.0
  %v517 = vmax.f32 %v496, 0.0
  %v518 = vmax.f32 %v497, 0.0
  %v519 = vmax.f32 %v498, 0.0
  %v520 = vmax.f32 %v499, 0.0
  %v521 = vmax.f32 %v500, 0.0
  %v522 = vmax.f32 %v501, 0.0
  %v523 = vmax.f32 %v502, 0.0
  %v524 = vmax.f32 %v503, 0.0
  %v525 = vmax.f32 %v504, 0.0
  %v526 = vmax.f32 %v505, 0.0
  %v527 = vmax.f32 %v506, 0.0
  %v528 = vmax.f32 %v507, 0.0
  %v529 = vmax.f32 %v508, 0.0
  %v530 = vmax.f32 %v509, 0.0
  %s531 = scalar_lea.vmem %s1, 5
  %v532 = vld [vmem:[%s531] ss:$8 sm:$0x7]
  %v534 = vperm.slane %v532, 0
  %v535 = vperm.slane %v532, 1
  %v536 = vperm.slane %v532, 2
  %v540 = vmul.f32 %v510, %v534
  %v541 = vmul.f32 %v511, %v535
  %v542 = vmul.f32 %v512, %v536
  %v543 = vmul.f32 %v513, %v534
  %v544 = vmul.f32 %v514, %v535
  %v545 = vmul.f32 %v515, %v536
  %v546 = vmul.f32 %v516, %v534
  %v547 = vmul.f32 %v517, %v535
  %v548 = vmul.f32 %v518, %v536
  %v549 = vmul.f32 %v519, %v534
  %v550 = vmul.f32 %v520, %v535
  %v551 = vmul.f32 %v521, %v536
  %v552 = vmul.f32 %v522, %v534
  %v553 = vmul.f32 %v523, %v535
  %v554 = vmul.f32 %v524, %v536
  %v555 = vmul.f32 %v525, %v534
  %v556 = vmul.f32 %v526, %v535
  %v557 = vmul.f32 %v527, %v536
  %v558 = vmul.f32 %v528, %v534
  %v559 = vmul.f32 %v529, %v535
  %v560 = vmul.f32 %v530, %v536
  %v561 = vadd.f32 %v467, %v540
  %v562 = vadd.f32 %v468, %v541
  %v563 = vadd.f32 %v469, %v542
  %v564 = vadd.f32 %v470, %v543
  %v565 = vadd.f32 %v471, %v544
  %v566 = vadd.f32 %v472, %v545
  %v567 = vadd.f32 %v473, %v546
  %v568 = vadd.f32 %v474, %v547
  %v569 = vadd.f32 %v475, %v548
  %v570 = vadd.f32 %v476, %v549
  %v571 = vadd.f32 %v477, %v550
  %v572 = vadd.f32 %v478, %v551
  %v573 = vadd.f32 %v479, %v552
  %v574 = vadd.f32 %v480, %v553
  %v575 = vadd.f32 %v481, %v554
  %v576 = vadd.f32 %v482, %v555
  %v577 = vadd.f32 %v483, %v556
  %v578 = vadd.f32 %v484, %v557
  %v579 = vadd.f32 %v485, %v558
  %v580 = vadd.f32 %v486, %v559
  %v581 = vadd.f32 %v487, %v560
  %s582 = scalar_lea.vmem %s0, 3024
  %v583 = vld [vmem:[%s582] sm:$0xff]
  %v584 = vld [vmem:[%s582 + $0x8] sm:$0xff]
  %v585 = vld [vmem:[%s582 + $0x10] sm:$0xff]
  %v586 = vld [vmem:[%s582 + $0x48] sm:$0xff]
  %v587 = vld [vmem:[%s582 + $0x50] sm:$0xff]
  %v588 = vld [vmem:[%s582 + $0x58] sm:$0xff]
  %v589 = vld [vmem:[%s582 + $0x90] sm:$0xff]
  %v590 = vld [vmem:[%s582 + $0x98] sm:$0xff]
  %v591 = vld [vmem:[%s582 + $0xa0] sm:$0xff]
  %v592 = vld [vmem:[%s582 + $0xd8] sm:$0xff]
  %v593 = vld [vmem:[%s582 + $0xe0] sm:$0xff]
  %v594 = vld [vmem:[%s582 + $0xe8] sm:$0xff]
  %v595 = vld [vmem:[%s582 + $0x120] sm:$0xff]
  %v596 = vld [vmem:[%s582 + $0x128] sm:$0xff]
  %v597 = vld [vmem:[%s582 + $0x130] sm:$0xff]
  %v598 = vld [vmem:[%s582 + $0x168] sm:$0xff]
  %v599 = vld [vmem:[%s582 + $0x170] sm:$0xff]
  %v600 = vld [vmem:[%s582 + $0x178] sm:$0xff]
  %v601 = vld [vmem:[%s582 + $0x1b0] sm:$0x1]
  %v602 = vld [vmem:[%s582 + $0x1b8] sm:$0x1]
  %v603 = vld [vmem:[%s582 + $0x1c0] sm:$0x1]
  %v604 = vmax.f32 %v583, 0.0
  %v605 = vmax.f32 %v584, 0.0
  %v606 = vmax.f32 %v585, 0.0
  %v607 = vmax.f32 %v586, 0.0
  %v608 = vmax.f32 %v587, 0.0
  %v609 = vmax.f32 %v588, 0.0
  %v610 = vmax.f32 %v589, 0.0
  %v611 = vmax.f32 %v590, 0.0
  %v612 = vmax.f32 %v591, 0.0
  %v613 = vmax.f32 %v592, 0.0
  %v614 = vmax.f32 %v593, 0.0
  %v615 = vmax.f32 %v594, 0.0
  %v616 = vmax.f32 %v595, 0.0
  %v617 = vmax.f32 %v596, 0.0
  %v618 = vmax.f32 %v597, 0.0
  %v619 = vmax.f32 %v598, 0.0
  %v620 = vmax.f32 %v599, 0.0
  %v621 = vmax.f32 %v600, 0.0
  %v622 = vmax.f32 %v601, 0.0
  %v623 = vmax.f32 %v602, 0.0
  %v624 = vmax.f32 %v603, 0.0
  %s625 = scalar_lea.vmem %s1, 6
  %v626 = vld [vmem:[%s625] ss:$8 sm:$0x7]
  %v628 = vperm.slane %v626, 0
  %v629 = vperm.slane %v626, 1
  %v630 = vperm.slane %v626, 2
  %v634 = vmul.f32 %v604, %v628
  %v635 = vmul.f32 %v605, %v629
  %v636 = vmul.f32 %v606, %v630
  %v637 = vmul.f32 %v607, %v628
  %v638 = vmul.f32 %v608, %v629
  %v639 = vmul.f32 %v609, %v630
  %v640 = vmul.f32 %v610, %v628
  %v641 = vmul.f32 %v611, %v629
  %v642 = vmul.f32 %v612, %v630
  %v643 = vmul.f32 %v613, %v628
  %v644 = vmul.f32 %v614, %v629
  %v645 = vmul.f32 %v615, %v630
  %v646 = vmul.f32 %v616, %v628
  %v647 = vmul.f32 %v617, %v629
  %v648 = vmul.f32 %v618, %v630
  %v649 = vmul.f32 %v619, %v628
  %v650 = vmul.f32 %v620, %v629
  %v651 = vmul.f32 %v621, %v630
  %v652 = vmul.f32 %v622, %v628
  %v653 = vmul.f32 %v623, %v629
  %v654 = vmul.f32 %v624, %v630
  %v655 = vadd.f32 %v561, %v634
  %v656 = vadd.f32 %v562, %v635
  %v657 = vadd.f32 %v563, %v636
  %v658 = vadd.f32 %v564, %v637
  %v659 = vadd.f32 %v565, %v638
  %v660 = vadd.f32 %v566, %v639
  %v661 = vadd.f32 %v567, %v640
  %v662 = vadd.f32 %v568, %v641
  %v663 = vadd.f32 %v569, %v642
  %v664 = vadd.f32 %v570, %v643
  %v665 = vadd.f32 %v571, %v644
  %v666 = vadd.f32 %v572, %v645
  %v667 = vadd.f32 %v573, %v646
  %v668 = vadd.f32 %v574, %v647
  %v669 = vadd.f32 %v575, %v648
  %v670 = vadd.f32 %v576, %v649
  %v671 = vadd.f32 %v577, %v650
  %v672 = vadd.f32 %v578, %v651
  %v673 = vadd.f32 %v579, %v652
  %v674 = vadd.f32 %v580, %v653
  %v675 = vadd.f32 %v581, %v654
  %s676 = scalar_lea.vmem %s0, 3528
  %v677 = vld [vmem:[%s676] sm:$0xff]
  %v678 = vld [vmem:[%s676 + $0x8] sm:$0xff]
  %v679 = vld [vmem:[%s676 + $0x10] sm:$0xff]
  %v680 = vld [vmem:[%s676 + $0x48] sm:$0xff]
  %v681 = vld [vmem:[%s676 + $0x50] sm:$0xff]
  %v682 = vld [vmem:[%s676 + $0x58] sm:$0xff]
  %v683 = vld [vmem:[%s676 + $0x90] sm:$0xff]
  %v684 = vld [vmem:[%s676 + $0x98] sm:$0xff]
  %v685 = vld [vmem:[%s676 + $0xa0] sm:$0xff]
  %v686 = vld [vmem:[%s676 + $0xd8] sm:$0xff]
  %v687 = vld [vmem:[%s676 + $0xe0] sm:$0xff]
  %v688 = vld [vmem:[%s676 + $0xe8] sm:$0xff]
  %v689 = vld [vmem:[%s676 + $0x120] sm:$0xff]
  %v690 = vld [vmem:[%s676 + $0x128] sm:$0xff]
  %v691 = vld [vmem:[%s676 + $0x130] sm:$0xff]
  %v692 = vld [vmem:[%s676 + $0x168] sm:$0xff]
  %v693 = vld [vmem:[%s676 + $0x170] sm:$0xff]
  %v694 = vld [vmem:[%s676 + $0x178] sm:$0xff]
  %v695 = vld [vmem:[%s676 + $0x1b0] sm:$0x1]
  %v696 = vld [vmem:[%s676 + $0x1b8] sm:$0x1]
  %v697 = vld [vmem:[%s676 + $0x1c0] sm:$0x1]
  %v698 = vmax.f32 %v677, 0.0
  %v699 = vmax.f32 %v678, 0.0
  %v700 = vmax.f32 %v679, 0.0
  %v701 = vmax.f32 %v680, 0.0
  %v702 = vmax.f32 %v681, 0.0
  %v703 = vmax.f32 %v682, 0.0
  %v704 = vmax.f32 %v683, 0.0
  %v705 = vmax.f32 %v684, 0.0
  %v706 = vmax.f32 %v685, 0.0
  %v707 = vmax.f32 %v686, 0.0
  %v708 = vmax.f32 %v687, 0.0
  %v709 = vmax.f32 %v688, 0.0
  %v710 = vmax.f32 %v689, 0.0
  %v711 = vmax.f32 %v690, 0.0
  %v712 = vmax.f32 %v691, 0.0
  %v713 = vmax.f32 %v692, 0.0
  %v714 = vmax.f32 %v693, 0.0
  %v715 = vmax.f32 %v694, 0.0
  %v716 = vmax.f32 %v695, 0.0
  %v717 = vmax.f32 %v696, 0.0
  %v718 = vmax.f32 %v697, 0.0
  %s719 = scalar_lea.vmem %s1, 7
  %v720 = vld [vmem:[%s719] ss:$8 sm:$0x7]
  %v722 = vperm.slane %v720, 0
  %v723 = vperm.slane %v720, 1
  %v724 = vperm.slane %v720, 2
  %v728 = vmul.f32 %v698, %v722
  %v729 = vmul.f32 %v699, %v723
  %v730 = vmul.f32 %v700, %v724
  %v731 = vmul.f32 %v701, %v722
  %v732 = vmul.f32 %v702, %v723
  %v733 = vmul.f32 %v703, %v724
  %v734 = vmul.f32 %v704, %v722
  %v735 = vmul.f32 %v705, %v723
  %v736 = vmul.f32 %v706, %v724
  %v737 = vmul.f32 %v707, %v722
  %v738 = vmul.f32 %v708, %v723
  %v739 = vmul.f32 %v709, %v724
  %v740 = vmul.f32 %v710, %v722
  %v741 = vmul.f32 %v711, %v723
  %v742 = vmul.f32 %v712, %v724
  %v743 = vmul.f32 %v713, %v722
  %v744 = vmul.f32 %v714, %v723
  %v745 = vmul.f32 %v715, %v724
  %v746 = vmul.f32 %v716, %v722
  %v747 = vmul.f32 %v717, %v723
  %v748 = vmul.f32 %v718, %v724
  %v749 = vadd.f32 %v655, %v728
  %v750 = vadd.f32 %v656, %v729
  %v751 = vadd.f32 %v657, %v730
  %v752 = vadd.f32 %v658, %v731
  %v753 = vadd.f32 %v659, %v732
  %v754 = vadd.f32 %v660, %v733
  %v755 = vadd.f32 %v661, %v734
  %v756 = vadd.f32 %v662, %v735
  %v757 = vadd.f32 %v663, %v736
  %v758 = vadd.f32 %v664, %v737
  %v759 = vadd.f32 %v665, %v738
  %v760 = vadd.f32 %v666, %v739
  %v761 = vadd.f32 %v667, %v740
  %v762 = vadd.f32 %v668, %v741
  %v763 = vadd.f32 %v669, %v742
  %v764 = vadd.f32 %v670, %v743
  %v765 = vadd.f32 %v671, %v744
  %v766 = vadd.f32 %v672, %v745
  %v767 = vadd.f32 %v673, %v746
  %v768 = vadd.f32 %v674, %v747
  %v769 = vadd.f32 %v675, %v748
  %s770 = scalar_lea.vmem %s0, 4032
  %v771 = vld [vmem:[%s770] sm:$0xff]
  %v772 = vld [vmem:[%s770 + $0x8] sm:$0xff]
  %v773 = vld [vmem:[%s770 + $0x10] sm:$0xff]
  %v774 = vld [vmem:[%s770 + $0x48] sm:$0xff]
  %v775 = vld [vmem:[%s770 + $0x50] sm:$0xff]
  %v776 = vld [vmem:[%s770 + $0x58] sm:$0xff]
  %v777 = vld [vmem:[%s770 + $0x90] sm:$0xff]
  %v778 = vld [vmem:[%s770 + $0x98] sm:$0xff]
  %v779 = vld [vmem:[%s770 + $0xa0] sm:$0xff]
  %v780 = vld [vmem:[%s770 + $0xd8] sm:$0xff]
  %v781 = vld [vmem:[%s770 + $0xe0] sm:$0xff]
  %v782 = vld [vmem:[%s770 + $0xe8] sm:$0xff]
  %v783 = vld [vmem:[%s770 + $0x120] sm:$0xff]
  %v784 = vld [vmem:[%s770 + $0x128] sm:$0xff]
  %v785 = vld [vmem:[%s770 + $0x130] sm:$0xff]
  %v786 = vld [vmem:[%s770 + $0x168] sm:$0xff]
  %v787 = vld [vmem:[%s770 + $0x170] sm:$0xff]
  %v788 = vld [vmem:[%s770 + $0x178] sm:$0xff]
  %v789 = vld [vmem:[%s770 + $0x1b0] sm:$0x1]
  %v790 = vld [vmem:[%s770 + $0x1b8] sm:$0x1]
  %v791 = vld [vmem:[%s770 + $0x1c0] sm:$0x1]
  %v792 = vmax.f32 %v771, 0.0
  %v793 = vmax.f32 %v772, 0.0
  %v794 = vmax.f32 %v773, 0.0
  %v795 = vmax.f32 %v774, 0.0
  %v796 = vmax.f32 %v775, 0.0
  %v797 = vmax.f32 %v776, 0.0
  %v798 = vmax.f32 %v777, 0.0
  %v799 = vmax.f32 %v778, 0.0
  %v800 = vmax.f32 %v779, 0.0
  %v801 = vmax.f32 %v780, 0.0
  %v802 = vmax.f32 %v781, 0.0
  %v803 = vmax.f32 %v782, 0.0
  %v804 = vmax.f32 %v783, 0.0
  %v805 = vmax.f32 %v784, 0.0
  %v806 = vmax.f32 %v785, 0.0
  %v807 = vmax.f32 %v786, 0.0
  %v808 = vmax.f32 %v787, 0.0
  %v809 = vmax.f32 %v788, 0.0
  %v810 = vmax.f32 %v789, 0.0
  %v811 = vmax.f32 %v790, 0.0
  %v812 = vmax.f32 %v791, 0.0
  %s813 = scalar_lea.vmem %s1, 72
  %v814 = vld [vmem:[%s813] ss:$8 sm:$0x7]
  %v816 = vperm.slane %v814, 0
  %v817 = vperm.slane %v814, 1
  %v818 = vperm.slane %v814, 2
  %v822 = vmul.f32 %v792, %v816
  %v823 = vmul.f32 %v793, %v817
  %v824 = vmul.f32 %v794, %v818
  %v825 = vmul.f32 %v795, %v816
  %v826 = vmul.f32 %v796, %v817
  %v827 = vmul.f32 %v797, %v818
  %v828 = vmul.f32 %v798, %v816
  %v829 = vmul.f32 %v799, %v817
  %v830 = vmul.f32 %v800, %v818
  %v831 = vmul.f32 %v801, %v816
  %v832 = vmul.f32 %v802, %v817
  %v833 = vmul.f32 %v803, %v818
  %v834 = vmul.f32 %v804, %v816
  %v835 = vmul.f32 %v805, %v817
  %v836 = vmul.f32 %v806, %v818
  %v837 = vmul.f32 %v807, %v816
  %v838 = vmul.f32 %v808, %v817
  %v839 = vmul.f32 %v809, %v818
  %v840 = vmul.f32 %v810, %v816
  %v841 = vmul.f32 %v811, %v817
  %v842 = vmul.f32 %v812, %v818
  %v843 = vadd.f32 %v749, %v822
  %v844 = vadd.f32 %v750, %v823
  %v845 = vadd.f32 %v751, %v824
  %v846 = vadd.f32 %v752, %v825
  %v847 = vadd.f32 %v753, %v826
  %v848 = vadd.f32 %v754, %v827
  %v849 = vadd.f32 %v755, %v828
  %v850 = vadd.f32 %v756, %v829
  %v851 = vadd.f32 %v757, %v830
  %v852 = vadd.f32 %v758, %v831
  %v853 = vadd.f32 %v759, %v832
  %v854 = vadd.f32 %v760, %v833
  %v855 = vadd.f32 %v761, %v834
  %v856 = vadd.f32 %v762, %v835
  %v857 = vadd.f32 %v763, %v836
  %v858 = vadd.f32 %v764, %v837
  %v859 = vadd.f32 %v765, %v838
  %v860 = vadd.f32 %v766, %v839
  %v861 = vadd.f32 %v767, %v840
  %v862 = vadd.f32 %v768, %v841
  %v863 = vadd.f32 %v769, %v842
  %v864 = vadd.f32 %v843, %v846
  %v865 = vadd.f32 %v864, %v849
  %v866 = vadd.f32 %v865, %v852
  %v867 = vadd.f32 %v866, %v855
  %v868 = vadd.f32 %v867, %v858
  %vm869 = vcmask 1040384
  %v870 = vsel %vm869, %v861, 0.0
  %v871 = vadd.f32 %v868, %v870
  %v872 = vrot.slane %v871, 4
  %v873 = vadd.f32 %v871, %v872
  %v874 = vrot.slane %v873, 2
  %v875 = vadd.f32 %v873, %v874
  %v876 = vrot.slane %v875, 1
  %v877 = vadd.f32 %v875, %v876
  %v878 = vadd.f32 %v844, %v847
  %v879 = vadd.f32 %v878, %v850
  %v880 = vadd.f32 %v879, %v853
  %v881 = vadd.f32 %v880, %v856
  %v882 = vadd.f32 %v881, %v859
  %v883 = vsel %vm869, %v862, 0.0
  %v884 = vadd.f32 %v882, %v883
  %v885 = vrot.slane %v884, 4
  %v886 = vadd.f32 %v884, %v885
  %v887 = vrot.slane %v886, 2
  %v888 = vadd.f32 %v886, %v887
  %v889 = vrot.slane %v888, 1
  %v890 = vadd.f32 %v888, %v889
  %v891 = vadd.f32 %v845, %v848
  %v892 = vadd.f32 %v891, %v851
  %v893 = vadd.f32 %v892, %v854
  %v894 = vadd.f32 %v893, %v857
  %v895 = vadd.f32 %v894, %v860
  %v896 = vsel %vm869, %v863, 0.0
  %v897 = vadd.f32 %v895, %v896
  %v898 = vrot.slane %v897, 4
  %v899 = vadd.f32 %v897, %v898
  %v900 = vrot.slane %v899, 2
  %v901 = vadd.f32 %v899, %v900
  %v902 = vrot.slane %v901, 1
  %v903 = vadd.f32 %v901, %v902
  %v904 = vrcp.pop 49.0
  %v905 = vmul.f32 49.0, %v904
  %v906 = vsub.f32 1.0, %v905
  %v907 = vmul.f32 %v904, %v906
  %v908 = vadd.f32 %v904, %v907
  %vm909 = vweird.f32 %v904
  %v910 = vsel %vm909, %v904, %v908
  %v911 = vmul.f32 %v877, %v910
  %v912 = vmul.f32 %v890, %v910
  %v913 = vmul.f32 %v903, %v910
  %v914 = vsub.f32 %v843, %v911
  %v915 = vsub.f32 %v844, %v912
  %v916 = vsub.f32 %v845, %v913
  %v917 = vsub.f32 %v846, %v911
  %v918 = vsub.f32 %v847, %v912
  %v919 = vsub.f32 %v848, %v913
  %v920 = vsub.f32 %v849, %v911
  %v921 = vsub.f32 %v850, %v912
  %v922 = vsub.f32 %v851, %v913
  %v923 = vsub.f32 %v852, %v911
  %v924 = vsub.f32 %v853, %v912
  %v925 = vsub.f32 %v854, %v913
  %v926 = vsub.f32 %v855, %v911
  %v927 = vsub.f32 %v856, %v912
  %v928 = vsub.f32 %v857, %v913
  %v929 = vsub.f32 %v858, %v911
  %v930 = vsub.f32 %v859, %v912
  %v931 = vsub.f32 %v860, %v913
  %v932 = vsub.f32 %v861, %v911
  %v933 = vsub.f32 %v862, %v912
  %v934 = vsub.f32 %v863, %v913
  %v935 = vmul.f32 %v914, %v914
  %v936 = vmul.f32 %v915, %v915
  %v937 = vmul.f32 %v916, %v916
  %v938 = vmul.f32 %v917, %v917
  %v939 = vmul.f32 %v918, %v918
  %v940 = vmul.f32 %v919, %v919
  %v941 = vmul.f32 %v920, %v920
  %v942 = vmul.f32 %v921, %v921
  %v943 = vmul.f32 %v922, %v922
  %v944 = vmul.f32 %v923, %v923
  %v945 = vmul.f32 %v924, %v924
  %v946 = vmul.f32 %v925, %v925
  %v947 = vmul.f32 %v926, %v926
  %v948 = vmul.f32 %v927, %v927
  %v949 = vmul.f32 %v928, %v928
  %v950 = vmul.f32 %v929, %v929
  %v951 = vmul.f32 %v930, %v930
  %v952 = vmul.f32 %v931, %v931
  %v953 = vmul.f32 %v932, %v932
  %v954 = vmul.f32 %v933, %v933
  %v955 = vmul.f32 %v934, %v934
  %v956 = vadd.f32 %v935, %v938
  %v957 = vadd.f32 %v956, %v941
  %v958 = vadd.f32 %v957, %v944
  %v959 = vadd.f32 %v958, %v947
  %v960 = vadd.f32 %v959, %v950
  %v961 = vsel %vm869, %v953, 0.0
  %v962 = vadd.f32 %v960, %v961
  %v963 = vrot.slane %v962, 4
  %v964 = vadd.f32 %v962, %v963
  %v965 = vrot.slane %v964, 2
  %v966 = vadd.f32 %v964, %v965
  %v967 = vrot.slane %v966, 1
  %v968 = vadd.f32 %v966, %v967
  %v969 = vadd.f32 %v936, %v939
  %v970 = vadd.f32 %v969, %v942
  %v971 = vadd.f32 %v970, %v945
  %v972 = vadd.f32 %v971, %v948
  %v973 = vadd.f32 %v972, %v951
  %v974 = vsel %vm869, %v954, 0.0
  %v975 = vadd.f32 %v973, %v974
  %v976 = vrot.slane %v975, 4
  %v977 = vadd.f32 %v975, %v976
  %v978 = vrot.slane %v977, 2
  %v979 = vadd.f32 %v977, %v978
  %v980 = vrot.slane %v979, 1
  %v981 = vadd.f32 %v979, %v980
  %v982 = vadd.f32 %v937, %v940
  %v983 = vadd.f32 %v982, %v943
  %v984 = vadd.f32 %v983, %v946
  %v985 = vadd.f32 %v984, %v949
  %v986 = vadd.f32 %v985, %v952
  %v987 = vsel %vm869, %v955, 0.0
  %v988 = vadd.f32 %v986, %v987
  %v989 = vrot.slane %v988, 4
  %v990 = vadd.f32 %v988, %v989
  %v991 = vrot.slane %v990, 2
  %v992 = vadd.f32 %v990, %v991
  %v993 = vrot.slane %v992, 1
  %v994 = vadd.f32 %v992, %v993
  %v995 = vmul.f32 %v968, %v910
  %v996 = vmul.f32 %v981, %v910
  %v997 = vmul.f32 %v994, %v910
  %v998 = vadd.f32 %v995, 1e-05
  %v999 = vadd.f32 %v996, 1e-05
  %v1000 = vadd.f32 %v997, 1e-05
  %v1001 = vrsqrt.pop %v998
  %v1002 = vmul.f32 %v1001, %v998
  %v1003 = vmul.f32 %v1002, %v1001
  %v1004 = vmul.f32 0.5, %v1003
  %v1005 = vsub.f32 1.5, %v1004
  %v1006 = vmul.f32 %v1001, %v1005
  %vm1007 = vweird.f32 %v998
  %vm1008 = vweird.f32 %v1001
  %vm1009 = vmor %vm1007, %vm1008
  %v1010 = vsel %vm1009, %v1001, %v1006
  %v1011 = vrsqrt.pop %v999
  %v1012 = vmul.f32 %v1011, %v999
  %v1013 = vmul.f32 %v1012, %v1011
  %v1014 = vmul.f32 0.5, %v1013
  %v1015 = vsub.f32 1.5, %v1014
  %v1016 = vmul.f32 %v1011, %v1015
  %vm1017 = vweird.f32 %v999
  %vm1018 = vweird.f32 %v1011
  %vm1019 = vmor %vm1017, %vm1018
  %v1020 = vsel %vm1019, %v1011, %v1016
  %v1021 = vrsqrt.pop %v1000
  %v1022 = vmul.f32 %v1021, %v1000
  %v1023 = vmul.f32 %v1022, %v1021
  %v1024 = vmul.f32 0.5, %v1023
  %v1025 = vsub.f32 1.5, %v1024
  %v1026 = vmul.f32 %v1021, %v1025
  %vm1027 = vweird.f32 %v1000
  %vm1028 = vweird.f32 %v1021
  %vm1029 = vmor %vm1027, %vm1028
  %v1030 = vsel %vm1029, %v1021, %v1026
  %v1031 = vmul.f32 %v914, %v1010
  %v1032 = vmul.f32 %v915, %v1020
  %v1033 = vmul.f32 %v916, %v1030
  %v1034 = vmul.f32 %v917, %v1010
  %v1035 = vmul.f32 %v918, %v1020
  %v1036 = vmul.f32 %v919, %v1030
  %v1037 = vmul.f32 %v920, %v1010
  %v1038 = vmul.f32 %v921, %v1020
  %v1039 = vmul.f32 %v922, %v1030
  %v1040 = vmul.f32 %v923, %v1010
  %v1041 = vmul.f32 %v924, %v1020
  %v1042 = vmul.f32 %v925, %v1030
  %v1043 = vmul.f32 %v926, %v1010
  %v1044 = vmul.f32 %v927, %v1020
  %v1045 = vmul.f32 %v928, %v1030
  %v1046 = vmul.f32 %v929, %v1010
  %v1047 = vmul.f32 %v930, %v1020
  %v1048 = vmul.f32 %v931, %v1030
  %v1049 = vmul.f32 %v932, %v1010
  %v1050 = vmul.f32 %v933, %v1020
  %v1051 = vmul.f32 %v934, %v1030
  %v1052 = vld [vmem:[%s2] sm:$0x7]
  %v1054 = vperm.slane %v1052, 0
  %v1055 = vperm.slane %v1052, 1
  %v1056 = vperm.slane %v1052, 2
  %v1060 = vmul.f32 %v1031, %v1054
  %v1061 = vmul.f32 %v1032, %v1055
  %v1062 = vmul.f32 %v1033, %v1056
  %v1063 = vmul.f32 %v1034, %v1054
  %v1064 = vmul.f32 %v1035, %v1055
  %v1065 = vmul.f32 %v1036, %v1056
  %v1066 = vmul.f32 %v1037, %v1054
  %v1067 = vmul.f32 %v1038, %v1055
  %v1068 = vmul.f32 %v1039, %v1056
  %v1069 = vmul.f32 %v1040, %v1054
  %v1070 = vmul.f32 %v1041, %v1055
  %v1071 = vmul.f32 %v1042, %v1056
  %v1072 = vmul.f32 %v1043, %v1054
  %v1073 = vmul.f32 %v1044, %v1055
  %v1074 = vmul.f32 %v1045, %v1056
  %v1075 = vmul.f32 %v1046, %v1054
  %v1076 = vmul.f32 %v1047, %v1055
  %v1077 = vmul.f32 %v1048, %v1056
  %v1078 = vmul.f32 %v1049, %v1054
  %v1079 = vmul.f32 %v1050, %v1055
  %v1080 = vmul.f32 %v1051, %v1056
  %v1081 = vld [vmem:[%s3] sm:$0x7]
  %v1083 = vperm.slane %v1081, 0
  %v1084 = vperm.slane %v1081, 1
  %v1085 = vperm.slane %v1081, 2
  %v1089 = vadd.f32 %v1060, %v1083
  %v1090 = vadd.f32 %v1061, %v1084
  %v1091 = vadd.f32 %v1062, %v1085
  %v1092 = vadd.f32 %v1063, %v1083
  %v1093 = vadd.f32 %v1064, %v1084
  %v1094 = vadd.f32 %v1065, %v1085
  %v1095 = vadd.f32 %v1066, %v1083
  %v1096 = vadd.f32 %v1067, %v1084
  %v1097 = vadd.f32 %v1068, %v1085
  %v1098 = vadd.f32 %v1069, %v1083
  %v1099 = vadd.f32 %v1070, %v1084
  %v1100 = vadd.f32 %v1071, %v1085
  %v1101 = vadd.f32 %v1072, %v1083
  %v1102 = vadd.f32 %v1073, %v1084
  %v1103 = vadd.f32 %v1074, %v1085
  %v1104 = vadd.f32 %v1075, %v1083
  %v1105 = vadd.f32 %v1076, %v1084
  %v1106 = vadd.f32 %v1077, %v1085
  %v1107 = vadd.f32 %v1078, %v1083
  %v1108 = vadd.f32 %v1079, %v1084
  %v1109 = vadd.f32 %v1080, %v1085
  %v1110 = vmax.f32 %v1089, 0.0
  %v1111 = vmax.f32 %v1090, 0.0
  %v1112 = vmax.f32 %v1091, 0.0
  %v1113 = vmax.f32 %v1092, 0.0
  %v1114 = vmax.f32 %v1093, 0.0
  %v1115 = vmax.f32 %v1094, 0.0
  %v1116 = vmax.f32 %v1095, 0.0
  %v1117 = vmax.f32 %v1096, 0.0
  %v1118 = vmax.f32 %v1097, 0.0
  %v1119 = vmax.f32 %v1098, 0.0
  %v1120 = vmax.f32 %v1099, 0.0
  %v1121 = vmax.f32 %v1100, 0.0
  %v1122 = vmax.f32 %v1101, 0.0
  %v1123 = vmax.f32 %v1102, 0.0
  %v1124 = vmax.f32 %v1103, 0.0
  %v1125 = vmax.f32 %v1104, 0.0
  %v1126 = vmax.f32 %v1105, 0.0
  %v1127 = vmax.f32 %v1106, 0.0
  %v1128 = vmax.f32 %v1107, 0.0
  %v1129 = vmax.f32 %v1108, 0.0
  %v1130 = vmax.f32 %v1109, 0.0
  %v1131 = vpack.c.bf16 %v1113, %v1110
  %v1132 = vpack.c.bf16 %v1114, %v1111
  %v1133 = vpack.c.bf16 %v1115, %v1112
  %v1134 = vpack.c.bf16 %v1119, %v1116
  %v1135 = vpack.c.bf16 %v1120, %v1117
  %v1136 = vpack.c.bf16 %v1121, %v1118
  %v1137 = vpack.c.bf16 %v1125, %v1122
  %v1138 = vpack.c.bf16 %v1126, %v1123
  %v1139 = vpack.c.bf16 %v1127, %v1124
  %v1140 = vpack.c.bf16 %v1128, %v1128
  %v1141 = vpack.c.bf16 %v1129, %v1129
  %v1142 = vpack.c.bf16 %v1130, %v1130
  %v1143 = vld [vmem:[%s4] sm:$0xff]
  %v1144 = vld [vmem:[%s4 + $0x8] sm:$0xf]
  %v1145 = vld [vmem:[%s4 + $0xc] sm:$0xff]
  %v1146 = vld [vmem:[%s4 + $0x14] sm:$0xf]
  %v1147 = vld [vmem:[%s4 + $0x18] sm:$0xff]
  %v1148 = vld [vmem:[%s4 + $0x20] sm:$0xf]
  %v1149 = vld [vmem:[%s4 + $0x24] sm:$0xff]
  %v1150 = vld [vmem:[%s4 + $0x2c] sm:$0xf]
  %v1151 = vld [vmem:[%s4 + $0x30] sm:$0xff]
  %v1152 = vld [vmem:[%s4 + $0x38] sm:$0xf]
  %v1153 = vld [vmem:[%s4 + $0x3c] sm:$0xff]
  %v1154 = vld [vmem:[%s4 + $0x44] sm:$0xf]
  %v1155 = vld [vmem:[%s4 + $0x48] sm:$0xff]
  %v1156 = vld [vmem:[%s4 + $0x50] sm:$0xf]
  %v1157 = vld [vmem:[%s4 + $0x54] sm:$0xff]
  %v1158 = vld [vmem:[%s4 + $0x5c] sm:$0xf]
  %v1159 = vld [vmem:[%s4 + $0x60] sm:$0xff]
  %v1160 = vld [vmem:[%s4 + $0x68] sm:$0xf]
  %v1161 = vld [vmem:[%s4 + $0x6c] sm:$0xff]
  %v1162 = vld [vmem:[%s4 + $0x74] sm:$0xf]
  %v1163 = vld [vmem:[%s4 + $0x78] sm:$0xff]
  %v1164 = vld [vmem:[%s4 + $0x80] sm:$0xf]
  %v1165 = vld [vmem:[%s4 + $0x84] sm:$0xff]
  %v1166 = vld [vmem:[%s4 + $0x8c] sm:$0xf]
  %v1167 = vld [vmem:[%s4 + $0x90] sm:$0xff]
  %v1168 = vld [vmem:[%s4 + $0x98] sm:$0xf]
  %v1169 = vld [vmem:[%s4 + $0x9c] sm:$0xff]
  %v1170 = vld [vmem:[%s4 + $0xa4] sm:$0xf]
  %v1171 = vld [vmem:[%s4 + $0xa8] sm:$0xff]
  %v1172 = vld [vmem:[%s4 + $0xb0] sm:$0xf]
  %v1173 = vld [vmem:[%s4 + $0xb4] sm:$0xff]
  %v1174 = vld [vmem:[%s4 + $0xbc] sm:$0xf]
  %v1175 = vld [vmem:[%s4 + $0xc0] sm:$0xff]
  %v1176 = vld [vmem:[%s4 + $0xc8] sm:$0xf]
  %v1177 = vld [vmem:[%s4 + $0xcc] sm:$0xff]
  %v1178 = vld [vmem:[%s4 + $0xd4] sm:$0xf]
  %v1179 = vld [vmem:[%s4 + $0xd8] sm:$0xff]
  %v1180 = vld [vmem:[%s4 + $0xe0] sm:$0xf]
  %v1181 = vld [vmem:[%s4 + $0xe4] sm:$0xff]
  %v1182 = vld [vmem:[%s4 + $0xec] sm:$0xf]
  %v1183 = vld [vmem:[%s4 + $0xf0] sm:$0xff]
  %v1184 = vld [vmem:[%s4 + $0xf8] sm:$0xf]
  %v1185 = vld [vmem:[%s4 + $0xfc] sm:$0xff]
  %v1186 = vld [vmem:[%s4 + $0x104] sm:$0xf]
  %v1187 = vld [vmem:[%s4 + $0x108] sm:$0xff]
  %v1188 = vld [vmem:[%s4 + $0x110] sm:$0xf]
  %v1189 = vld [vmem:[%s4 + $0x114] sm:$0xff]
  %v1190 = vld [vmem:[%s4 + $0x11c] sm:$0xf]
  %v1191 = vld [vmem:[%s4 + $0x120] sm:$0xff]
  %v1192 = vld [vmem:[%s4 + $0x128] sm:$0xf]
  %v1193 = vld [vmem:[%s4 + $0x12c] sm:$0xff]
  %v1194 = vld [vmem:[%s4 + $0x134] sm:$0xf]
  %v1195 = vld [vmem:[%s4 + $0x138] sm:$0xff]
  %v1196 = vld [vmem:[%s4 + $0x140] sm:$0xf]
  %v1197 = vld [vmem:[%s4 + $0x144] sm:$0xff]
  %v1198 = vld [vmem:[%s4 + $0x14c] sm:$0xf]
  %v1199 = vld [vmem:[%s4 + $0x150] sm:$0xff]
  %v1200 = vld [vmem:[%s4 + $0x158] sm:$0xf]
  %v1201 = vld [vmem:[%s4 + $0x15c] sm:$0xff]
  %v1202 = vld [vmem:[%s4 + $0x164] sm:$0xf]
  %v1203 = vld [vmem:[%s4 + $0x168] sm:$0xff]
  %v1204 = vld [vmem:[%s4 + $0x170] sm:$0xf]
  %v1205 = vld [vmem:[%s4 + $0x174] sm:$0xff]
  %v1206 = vld [vmem:[%s4 + $0x17c] sm:$0xf]
  %v1207 = vld [vmem:[%s4 + $0x180] sm:$0xff]
  %v1208 = vld [vmem:[%s4 + $0x188] sm:$0xf]
  %v1209 = vld [vmem:[%s4 + $0x18c] sm:$0xff]
  %v1210 = vld [vmem:[%s4 + $0x194] sm:$0xf]
  %v1211 = vld [vmem:[%s4 + $0x198] sm:$0xff]
  %v1212 = vld [vmem:[%s4 + $0x1a0] sm:$0xf]
  %v1213 = vld [vmem:[%s4 + $0x1a4] sm:$0xff]
  %v1214 = vld [vmem:[%s4 + $0x1ac] sm:$0xf]
  %v1215 = vld [vmem:[%s4 + $0x1b0] sm:$0xff]
  %v1216 = vld [vmem:[%s4 + $0x1b8] sm:$0xf]
  %v1217 = vld [vmem:[%s4 + $0x1bc] sm:$0xff]
  %v1218 = vld [vmem:[%s4 + $0x1c4] sm:$0xf]
  %v1219 = vld [vmem:[%s4 + $0x1c8] sm:$0xff]
  %v1220 = vld [vmem:[%s4 + $0x1d0] sm:$0xf]
  %v1221 = vld [vmem:[%s4 + $0x1d4] sm:$0xff]
  %v1222 = vld [vmem:[%s4 + $0x1dc] sm:$0xf]
  %v1223 = vld [vmem:[%s4 + $0x1e0] sm:$0xff]
  %v1224 = vld [vmem:[%s4 + $0x1e8] sm:$0xf]
  %v1225 = vld [vmem:[%s4 + $0x1ec] sm:$0xff]
  %v1226 = vld [vmem:[%s4 + $0x1f4] sm:$0xf]
  %v1227 = vld [vmem:[%s4 + $0x1f8] sm:$0xff]
  %v1228 = vld [vmem:[%s4 + $0x200] sm:$0xf]
  %v1229 = vld [vmem:[%s4 + $0x204] sm:$0xff]
  %v1230 = vld [vmem:[%s4 + $0x20c] sm:$0xf]
  %v1231 = vld [vmem:[%s4 + $0x210] sm:$0xff]
  %v1232 = vld [vmem:[%s4 + $0x218] sm:$0xf]
  %v1233 = vld [vmem:[%s4 + $0x21c] sm:$0xff]
  %v1234 = vld [vmem:[%s4 + $0x224] sm:$0xf]
  %v1235 = vld [vmem:[%s4 + $0x228] sm:$0xff]
  %v1236 = vld [vmem:[%s4 + $0x230] sm:$0xf]
  %v1237 = vld [vmem:[%s4 + $0x234] sm:$0xff]
  %v1238 = vld [vmem:[%s4 + $0x23c] sm:$0xf]
  %v1335 = vunpack.c.l.b16 %v1143
  %v1336 = vunpack.c.h.b16 %v1143
  %v1337 = vunpack.c.l.b16 %v1144
  %v1338 = vunpack.c.l.b16 %v1145
  %v1339 = vunpack.c.h.b16 %v1145
  %v1340 = vunpack.c.l.b16 %v1146
  %v1341 = vunpack.c.l.b16 %v1147
  %v1342 = vunpack.c.h.b16 %v1147
  %v1343 = vunpack.c.l.b16 %v1148
  %v1344 = vunpack.c.l.b16 %v1149
  %v1345 = vunpack.c.h.b16 %v1149
  %v1346 = vunpack.c.l.b16 %v1150
  %v1347 = vunpack.c.l.b16 %v1151
  %v1348 = vunpack.c.h.b16 %v1151
  %v1349 = vunpack.c.l.b16 %v1152
  %v1350 = vunpack.c.l.b16 %v1153
  %v1351 = vunpack.c.h.b16 %v1153
  %v1352 = vunpack.c.l.b16 %v1154
  %v1353 = vunpack.c.l.b16 %v1155
  %v1354 = vunpack.c.h.b16 %v1155
  %v1355 = vunpack.c.l.b16 %v1156
  %v1356 = vunpack.c.l.b16 %v1157
  %v1357 = vunpack.c.h.b16 %v1157
  %v1358 = vunpack.c.l.b16 %v1158
  %v1359 = vunpack.c.l.b16 %v1159
  %v1360 = vunpack.c.h.b16 %v1159
  %v1361 = vunpack.c.l.b16 %v1160
  %v1362 = vunpack.c.l.b16 %v1161
  %v1363 = vunpack.c.h.b16 %v1161
  %v1364 = vunpack.c.l.b16 %v1162
  %v1365 = vunpack.c.l.b16 %v1163
  %v1366 = vunpack.c.h.b16 %v1163
  %v1367 = vunpack.c.l.b16 %v1164
  %v1368 = vunpack.c.l.b16 %v1165
  %v1369 = vunpack.c.h.b16 %v1165
  %v1370 = vunpack.c.l.b16 %v1166
  %v1371 = vunpack.c.l.b16 %v1167
  %v1372 = vunpack.c.h.b16 %v1167
  %v1373 = vunpack.c.l.b16 %v1168
  %v1374 = vunpack.c.l.b16 %v1169
  %v1375 = vunpack.c.h.b16 %v1169
  %v1376 = vunpack.c.l.b16 %v1170
  %v1377 = vunpack.c.l.b16 %v1171
  %v1378 = vunpack.c.h.b16 %v1171
  %v1379 = vunpack.c.l.b16 %v1172
  %v1380 = vunpack.c.l.b16 %v1173
  %v1381 = vunpack.c.h.b16 %v1173
  %v1382 = vunpack.c.l.b16 %v1174
  %v1383 = vunpack.c.l.b16 %v1175
  %v1384 = vunpack.c.h.b16 %v1175
  %v1385 = vunpack.c.l.b16 %v1176
  %v1386 = vunpack.c.l.b16 %v1177
  %v1387 = vunpack.c.h.b16 %v1177
  %v1388 = vunpack.c.l.b16 %v1178
  %v1389 = vunpack.c.l.b16 %v1179
  %v1390 = vunpack.c.h.b16 %v1179
  %v1391 = vunpack.c.l.b16 %v1180
  %v1392 = vunpack.c.l.b16 %v1181
  %v1393 = vunpack.c.h.b16 %v1181
  %v1394 = vunpack.c.l.b16 %v1182
  %v1395 = vunpack.c.l.b16 %v1183
  %v1396 = vunpack.c.h.b16 %v1183
  %v1397 = vunpack.c.l.b16 %v1184
  %v1398 = vunpack.c.l.b16 %v1185
  %v1399 = vunpack.c.h.b16 %v1185
  %v1400 = vunpack.c.l.b16 %v1186
  %v1401 = vunpack.c.l.b16 %v1187
  %v1402 = vunpack.c.h.b16 %v1187
  %v1403 = vunpack.c.l.b16 %v1188
  %v1404 = vunpack.c.l.b16 %v1189
  %v1405 = vunpack.c.h.b16 %v1189
  %v1406 = vunpack.c.l.b16 %v1190
  %v1407 = vunpack.c.l.b16 %v1191
  %v1408 = vunpack.c.h.b16 %v1191
  %v1409 = vunpack.c.l.b16 %v1192
  %v1410 = vunpack.c.l.b16 %v1193
  %v1411 = vunpack.c.h.b16 %v1193
  %v1412 = vunpack.c.l.b16 %v1194
  %v1413 = vunpack.c.l.b16 %v1195
  %v1414 = vunpack.c.h.b16 %v1195
  %v1415 = vunpack.c.l.b16 %v1196
  %v1416 = vunpack.c.l.b16 %v1197
  %v1417 = vunpack.c.h.b16 %v1197
  %v1418 = vunpack.c.l.b16 %v1198
  %v1419 = vunpack.c.l.b16 %v1199
  %v1420 = vunpack.c.h.b16 %v1199
  %v1421 = vunpack.c.l.b16 %v1200
  %v1422 = vunpack.c.l.b16 %v1201
  %v1423 = vunpack.c.h.b16 %v1201
  %v1424 = vunpack.c.l.b16 %v1202
  %v1425 = vunpack.c.l.b16 %v1203
  %v1426 = vunpack.c.h.b16 %v1203
  %v1427 = vunpack.c.l.b16 %v1204
  %v1428 = vunpack.c.l.b16 %v1205
  %v1429 = vunpack.c.h.b16 %v1205
  %v1430 = vunpack.c.l.b16 %v1206
  %v1431 = vunpack.c.l.b16 %v1207
  %v1432 = vunpack.c.h.b16 %v1207
  %v1433 = vunpack.c.l.b16 %v1208
  %v1434 = vunpack.c.l.b16 %v1209
  %v1435 = vunpack.c.h.b16 %v1209
  %v1436 = vunpack.c.l.b16 %v1210
  %v1437 = vunpack.c.l.b16 %v1211
  %v1438 = vunpack.c.h.b16 %v1211
  %v1439 = vunpack.c.l.b16 %v1212
  %v1440 = vunpack.c.l.b16 %v1213
  %v1441 = vunpack.c.h.b16 %v1213
  %v1442 = vunpack.c.l.b16 %v1214
  %v1443 = vunpack.c.l.b16 %v1215
  %v1444 = vunpack.c.h.b16 %v1215
  %v1445 = vunpack.c.l.b16 %v1216
  %v1446 = vunpack.c.l.b16 %v1217
  %v1447 = vunpack.c.h.b16 %v1217
  %v1448 = vunpack.c.l.b16 %v1218
  %v1449 = vunpack.c.l.b16 %v1219
  %v1450 = vunpack.c.h.b16 %v1219
  %v1451 = vunpack.c.l.b16 %v1220
  %v1452 = vunpack.c.l.b16 %v1221
  %v1453 = vunpack.c.h.b16 %v1221
  %v1454 = vunpack.c.l.b16 %v1222
  %v1455 = vunpack.c.l.b16 %v1223
  %v1456 = vunpack.c.h.b16 %v1223
  %v1457 = vunpack.c.l.b16 %v1224
  %v1458 = vunpack.c.l.b16 %v1225
  %v1459 = vunpack.c.h.b16 %v1225
  %v1460 = vunpack.c.l.b16 %v1226
  %v1461 = vunpack.c.l.b16 %v1227
  %v1462 = vunpack.c.h.b16 %v1227
  %v1463 = vunpack.c.l.b16 %v1228
  %v1464 = vunpack.c.l.b16 %v1229
  %v1465 = vunpack.c.h.b16 %v1229
  %v1466 = vunpack.c.l.b16 %v1230
  %v1467 = vunpack.c.l.b16 %v1231
  %v1468 = vunpack.c.h.b16 %v1231
  %v1469 = vunpack.c.l.b16 %v1232
  %v1470 = vunpack.c.l.b16 %v1233
  %v1471 = vunpack.c.h.b16 %v1233
  %v1472 = vunpack.c.l.b16 %v1234
  %v1473 = vunpack.c.l.b16 %v1235
  %v1474 = vunpack.c.h.b16 %v1235
  %v1475 = vunpack.c.l.b16 %v1236
  %v1476 = vunpack.c.l.b16 %v1237
  %v1477 = vunpack.c.h.b16 %v1237
  %v1478 = vunpack.c.l.b16 %v1238
  %v1479 = vpack.c.b16 %v1338, %v1335
  %v1480 = vpack.c.b16 %v1339, %v1336
  %v1481 = vpack.c.b16 %v1340, %v1337
  %v1482 = vpack.c.b16 %v1344, %v1341
  %v1483 = vpack.c.b16 %v1345, %v1342
  %v1484 = vpack.c.b16 %v1346, %v1343
  %v1485 = vpack.c.b16 %v1350, %v1347
  %v1486 = vpack.c.b16 %v1351, %v1348
  %v1487 = vpack.c.b16 %v1352, %v1349
  %v1488 = vpack.c.b16 %v1356, %v1353
  %v1489 = vpack.c.b16 %v1357, %v1354
  %v1490 = vpack.c.b16 %v1358, %v1355
  %v1491 = vpack.c.b16 %v1362, %v1359
  %v1492 = vpack.c.b16 %v1363, %v1360
  %v1493 = vpack.c.b16 %v1364, %v1361
  %v1494 = vpack.c.b16 %v1368, %v1365
  %v1495 = vpack.c.b16 %v1369, %v1366
  %v1496 = vpack.c.b16 %v1370, %v1367
  %v1497 = vpack.c.b16 %v1374, %v1371
  %v1498 = vpack.c.b16 %v1375, %v1372
  %v1499 = vpack.c.b16 %v1376, %v1373
  %v1500 = vpack.c.b16 %v1380, %v1377
  %v1501 = vpack.c.b16 %v1381, %v1378
  %v1502 = vpack.c.b16 %v1382, %v1379
  %v1503 = vpack.c.b16 %v1386, %v1383
  %v1504 = vpack.c.b16 %v1387, %v1384
  %v1505 = vpack.c.b16 %v1388, %v1385
  %v1506 = vpack.c.b16 %v1392, %v1389
  %v1507 = vpack.c.b16 %v1393, %v1390
  %v1508 = vpack.c.b16 %v1394, %v1391
  %v1509 = vpack.c.b16 %v1398, %v1395
  %v1510 = vpack.c.b16 %v1399, %v1396
  %v1511 = vpack.c.b16 %v1400, %v1397
  %v1512 = vpack.c.b16 %v1404, %v1401
  %v1513 = vpack.c.b16 %v1405, %v1402
  %v1514 = vpack.c.b16 %v1406, %v1403
  %v1515 = vpack.c.b16 %v1410, %v1407
  %v1516 = vpack.c.b16 %v1411, %v1408
  %v1517 = vpack.c.b16 %v1412, %v1409
  %v1518 = vpack.c.b16 %v1416, %v1413
  %v1519 = vpack.c.b16 %v1417, %v1414
  %v1520 = vpack.c.b16 %v1418, %v1415
  %v1521 = vpack.c.b16 %v1422, %v1419
  %v1522 = vpack.c.b16 %v1423, %v1420
  %v1523 = vpack.c.b16 %v1424, %v1421
  %v1524 = vpack.c.b16 %v1428, %v1425
  %v1525 = vpack.c.b16 %v1429, %v1426
  %v1526 = vpack.c.b16 %v1430, %v1427
  %v1527 = vpack.c.b16 %v1434, %v1431
  %v1528 = vpack.c.b16 %v1435, %v1432
  %v1529 = vpack.c.b16 %v1436, %v1433
  %v1530 = vpack.c.b16 %v1440, %v1437
  %v1531 = vpack.c.b16 %v1441, %v1438
  %v1532 = vpack.c.b16 %v1442, %v1439
  %v1533 = vpack.c.b16 %v1446, %v1443
  %v1534 = vpack.c.b16 %v1447, %v1444
  %v1535 = vpack.c.b16 %v1448, %v1445
  %v1536 = vpack.c.b16 %v1452, %v1449
  %v1537 = vpack.c.b16 %v1453, %v1450
  %v1538 = vpack.c.b16 %v1454, %v1451
  %v1539 = vpack.c.b16 %v1458, %v1455
  %v1540 = vpack.c.b16 %v1459, %v1456
  %v1541 = vpack.c.b16 %v1460, %v1457
  %v1542 = vpack.c.b16 %v1464, %v1461
  %v1543 = vpack.c.b16 %v1465, %v1462
  %v1544 = vpack.c.b16 %v1466, %v1463
  %v1545 = vpack.c.b16 %v1470, %v1467
  %v1546 = vpack.c.b16 %v1471, %v1468
  %v1547 = vpack.c.b16 %v1472, %v1469
  %v1548 = vpack.c.b16 %v1476, %v1473
  %v1549 = vpack.c.b16 %v1477, %v1474
  %v1550 = vpack.c.b16 %v1478, %v1475
  %1623 = vmatpush.bf16.msra.mxu0 %v1500
  %1624 = vmatpush.bf16.msra.mxu0 %v1497
  %1625 = vmatpush.bf16.msra.mxu0 %v1494
  %1626 = vmatpush.bf16.msra.mxu0 %v1491
  %1627 = vmatpush.bf16.msra.mxu0 %v1488
  %1628 = vmatpush.bf16.msra.mxu0 %v1485
  %1629 = vmatpush.bf16.msra.mxu0 %v1482
  %1630 = vmatpush.bf16.msra.mxu0 %v1479
  %1631 = vmatmul.bf16.gmra.mxu0 %v1131
  %v1632 = vpop.f32.mrf.mxu0
  %v1633 = vadd.f32 0.0, %v1632
  %v1634 = vpop.f32.mrf.mxu0
  %v1635 = vadd.f32 0.0, %v1634
  %1636 = vmatmul.bf16.gmra.mxu0 %v1134
  %v1637 = vpop.f32.mrf.mxu0
  %v1638 = vadd.f32 0.0, %v1637
  %v1639 = vpop.f32.mrf.mxu0
  %v1640 = vadd.f32 0.0, %v1639
  %1641 = vmatmul.bf16.gmra.mxu0 %v1137
  %v1642 = vpop.f32.mrf.mxu0
  %v1643 = vadd.f32 0.0, %v1642
  %v1644 = vpop.f32.mrf.mxu0
  %v1645 = vadd.f32 0.0, %v1644
  %1646 = vmatmul.bf16.gmra.mxu0 %v1140
  %v1647 = vpop.f32.mrf.mxu0
  %v1648 = vadd.f32 0.0, %v1647
  %v1649 = vpop.f32.mrf.mxu0
  %1650 = vdwg.mxu0
  %1651 = vmatpush.bf16.msra.mxu0 %v1524
  %1652 = vmatpush.bf16.msra.mxu0 %v1521
  %1653 = vmatpush.bf16.msra.mxu0 %v1518
  %1654 = vmatpush.bf16.msra.mxu0 %v1515
  %1655 = vmatpush.bf16.msra.mxu0 %v1512
  %1656 = vmatpush.bf16.msra.mxu0 %v1509
  %1657 = vmatpush.bf16.msra.mxu0 %v1506
  %1658 = vmatpush.bf16.msra.mxu0 %v1503
  %1659 = vmatmul.bf16.gmra.mxu0 %v1132
  %v1660 = vpop.f32.mrf.mxu0
  %v1661 = vadd.f32 %v1633, %v1660
  %v1662 = vpop.f32.mrf.mxu0
  %v1663 = vadd.f32 %v1635, %v1662
  %1664 = vmatmul.bf16.gmra.mxu0 %v1135
  %v1665 = vpop.f32.mrf.mxu0
  %v1666 = vadd.f32 %v1638, %v1665
  %v1667 = vpop.f32.mrf.mxu0
  %v1668 = vadd.f32 %v1640, %v1667
  %1669 = vmatmul.bf16.gmra.mxu0 %v1138
  %v1670 = vpop.f32.mrf.mxu0
  %v1671 = vadd.f32 %v1643, %v1670
  %v1672 = vpop.f32.mrf.mxu0
  %v1673 = vadd.f32 %v1645, %v1672
  %1674 = vmatmul.bf16.gmra.mxu0 %v1141
  %v1675 = vpop.f32.mrf.mxu0
  %v1676 = vadd.f32 %v1648, %v1675
  %v1677 = vpop.f32.mrf.mxu0
  %1678 = vdwg.mxu0
  %1679 = vmatpush.bf16.msra.mxu0 %v1548
  %1680 = vmatpush.bf16.msra.mxu0 %v1545
  %1681 = vmatpush.bf16.msra.mxu0 %v1542
  %1682 = vmatpush.bf16.msra.mxu0 %v1539
  %1683 = vmatpush.bf16.msra.mxu0 %v1536
  %1684 = vmatpush.bf16.msra.mxu0 %v1533
  %1685 = vmatpush.bf16.msra.mxu0 %v1530
  %1686 = vmatpush.bf16.msra.mxu0 %v1527
  %1687 = vmatmul.bf16.gmra.mxu0 %v1133
  %v1688 = vpop.f32.mrf.mxu0
  %v1689 = vadd.f32 %v1661, %v1688
  %v1690 = vpop.f32.mrf.mxu0
  %v1691 = vadd.f32 %v1663, %v1690
  %1692 = vmatmul.bf16.gmra.mxu0 %v1136
  %v1693 = vpop.f32.mrf.mxu0
  %v1694 = vadd.f32 %v1666, %v1693
  %v1695 = vpop.f32.mrf.mxu0
  %v1696 = vadd.f32 %v1668, %v1695
  %1697 = vmatmul.bf16.gmra.mxu0 %v1139
  %v1698 = vpop.f32.mrf.mxu0
  %v1699 = vadd.f32 %v1671, %v1698
  %v1700 = vpop.f32.mrf.mxu0
  %v1701 = vadd.f32 %v1673, %v1700
  %1702 = vmatmul.bf16.gmra.mxu0 %v1142
  %v1703 = vpop.f32.mrf.mxu0
  %v1704 = vadd.f32 %v1676, %v1703
  %v1705 = vpop.f32.mrf.mxu0
  %1706 = vdwg.mxu0
  %1707 = vmatpush.bf16.msra.mxu0 %v1501
  %1708 = vmatpush.bf16.msra.mxu0 %v1498
  %1709 = vmatpush.bf16.msra.mxu0 %v1495
  %1710 = vmatpush.bf16.msra.mxu0 %v1492
  %1711 = vmatpush.bf16.msra.mxu0 %v1489
  %1712 = vmatpush.bf16.msra.mxu0 %v1486
  %1713 = vmatpush.bf16.msra.mxu0 %v1483
  %1714 = vmatpush.bf16.msra.mxu0 %v1480
  %1715 = vmatmul.bf16.gmra.mxu0 %v1131
  %v1716 = vpop.f32.mrf.mxu0
  %v1717 = vadd.f32 0.0, %v1716
  %v1718 = vpop.f32.mrf.mxu0
  %v1719 = vadd.f32 0.0, %v1718
  %1720 = vmatmul.bf16.gmra.mxu0 %v1134
  %v1721 = vpop.f32.mrf.mxu0
  %v1722 = vadd.f32 0.0, %v1721
  %v1723 = vpop.f32.mrf.mxu0
  %v1724 = vadd.f32 0.0, %v1723
  %1725 = vmatmul.bf16.gmra.mxu0 %v1137
  %v1726 = vpop.f32.mrf.mxu0
  %v1727 = vadd.f32 0.0, %v1726
  %v1728 = vpop.f32.mrf.mxu0
  %v1729 = vadd.f32 0.0, %v1728
  %1730 = vmatmul.bf16.gmra.mxu0 %v1140
  %v1731 = vpop.f32.mrf.mxu0
  %v1732 = vadd.f32 0.0, %v1731
  %v1733 = vpop.f32.mrf.mxu0
  %1734 = vdwg.mxu0
  %1735 = vmatpush.bf16.msra.mxu0 %v1525
  %1736 = vmatpush.bf16.msra.mxu0 %v1522
  %1737 = vmatpush.bf16.msra.mxu0 %v1519
  %1738 = vmatpush.bf16.msra.mxu0 %v1516
  %1739 = vmatpush.bf16.msra.mxu0 %v1513
  %1740 = vmatpush.bf16.msra.mxu0 %v1510
  %1741 = vmatpush.bf16.msra.mxu0 %v1507
  %1742 = vmatpush.bf16.msra.mxu0 %v1504
  %1743 = vmatmul.bf16.gmra.mxu0 %v1132
  %v1744 = vpop.f32.mrf.mxu0
  %v1745 = vadd.f32 %v1717, %v1744
  %v1746 = vpop.f32.mrf.mxu0
  %v1747 = vadd.f32 %v1719, %v1746
  %1748 = vmatmul.bf16.gmra.mxu0 %v1135
  %v1749 = vpop.f32.mrf.mxu0
  %v1750 = vadd.f32 %v1722, %v1749
  %v1751 = vpop.f32.mrf.mxu0
  %v1752 = vadd.f32 %v1724, %v1751
  %1753 = vmatmul.bf16.gmra.mxu0 %v1138
  %v1754 = vpop.f32.mrf.mxu0
  %v1755 = vadd.f32 %v1727, %v1754
  %v1756 = vpop.f32.mrf.mxu0
  %v1757 = vadd.f32 %v1729, %v1756
  %1758 = vmatmul.bf16.gmra.mxu0 %v1141
  %v1759 = vpop.f32.mrf.mxu0
  %v1760 = vadd.f32 %v1732, %v1759
  %v1761 = vpop.f32.mrf.mxu0
  %1762 = vdwg.mxu0
  %1763 = vmatpush.bf16.msra.mxu0 %v1549
  %1764 = vmatpush.bf16.msra.mxu0 %v1546
  %1765 = vmatpush.bf16.msra.mxu0 %v1543
  %1766 = vmatpush.bf16.msra.mxu0 %v1540
  %1767 = vmatpush.bf16.msra.mxu0 %v1537
  %1768 = vmatpush.bf16.msra.mxu0 %v1534
  %1769 = vmatpush.bf16.msra.mxu0 %v1531
  %1770 = vmatpush.bf16.msra.mxu0 %v1528
  %1771 = vmatmul.bf16.gmra.mxu0 %v1133
  %v1772 = vpop.f32.mrf.mxu0
  %v1773 = vadd.f32 %v1745, %v1772
  %v1774 = vpop.f32.mrf.mxu0
  %v1775 = vadd.f32 %v1747, %v1774
  %1776 = vmatmul.bf16.gmra.mxu0 %v1136
  %v1777 = vpop.f32.mrf.mxu0
  %v1778 = vadd.f32 %v1750, %v1777
  %v1779 = vpop.f32.mrf.mxu0
  %v1780 = vadd.f32 %v1752, %v1779
  %1781 = vmatmul.bf16.gmra.mxu0 %v1139
  %v1782 = vpop.f32.mrf.mxu0
  %v1783 = vadd.f32 %v1755, %v1782
  %v1784 = vpop.f32.mrf.mxu0
  %v1785 = vadd.f32 %v1757, %v1784
  %1786 = vmatmul.bf16.gmra.mxu0 %v1142
  %v1787 = vpop.f32.mrf.mxu0
  %v1788 = vadd.f32 %v1760, %v1787
  %v1789 = vpop.f32.mrf.mxu0
  %1790 = vdwg.mxu0
  %1791 = vmatpush.bf16.msra.mxu0 %v1502
  %1792 = vmatpush.bf16.msra.mxu0 %v1499
  %1793 = vmatpush.bf16.msra.mxu0 %v1496
  %1794 = vmatpush.bf16.msra.mxu0 %v1493
  %1795 = vmatpush.bf16.msra.mxu0 %v1490
  %1796 = vmatpush.bf16.msra.mxu0 %v1487
  %1797 = vmatpush.bf16.msra.mxu0 %v1484
  %1798 = vmatpush.bf16.msra.mxu0 %v1481
  %1799 = vmatmul.bf16.gmra.mxu0 %v1131
  %v1800 = vpop.f32.mrf.mxu0
  %v1801 = vadd.f32 0.0, %v1800
  %v1802 = vpop.f32.mrf.mxu0
  %v1803 = vadd.f32 0.0, %v1802
  %1804 = vmatmul.bf16.gmra.mxu0 %v1134
  %v1805 = vpop.f32.mrf.mxu0
  %v1806 = vadd.f32 0.0, %v1805
  %v1807 = vpop.f32.mrf.mxu0
  %v1808 = vadd.f32 0.0, %v1807
  %1809 = vmatmul.bf16.gmra.mxu0 %v1137
  %v1810 = vpop.f32.mrf.mxu0
  %v1811 = vadd.f32 0.0, %v1810
  %v1812 = vpop.f32.mrf.mxu0
  %v1813 = vadd.f32 0.0, %v1812
  %1814 = vmatmul.bf16.gmra.mxu0 %v1140
  %v1815 = vpop.f32.mrf.mxu0
  %v1816 = vadd.f32 0.0, %v1815
  %v1817 = vpop.f32.mrf.mxu0
  %1818 = vdwg.mxu0
  %1819 = vmatpush.bf16.msra.mxu0 %v1526
  %1820 = vmatpush.bf16.msra.mxu0 %v1523
  %1821 = vmatpush.bf16.msra.mxu0 %v1520
  %1822 = vmatpush.bf16.msra.mxu0 %v1517
  %1823 = vmatpush.bf16.msra.mxu0 %v1514
  %1824 = vmatpush.bf16.msra.mxu0 %v1511
  %1825 = vmatpush.bf16.msra.mxu0 %v1508
  %1826 = vmatpush.bf16.msra.mxu0 %v1505
  %1827 = vmatmul.bf16.gmra.mxu0 %v1132
  %v1828 = vpop.f32.mrf.mxu0
  %v1829 = vadd.f32 %v1801, %v1828
  %v1830 = vpop.f32.mrf.mxu0
  %v1831 = vadd.f32 %v1803, %v1830
  %1832 = vmatmul.bf16.gmra.mxu0 %v1135
  %v1833 = vpop.f32.mrf.mxu0
  %v1834 = vadd.f32 %v1806, %v1833
  %v1835 = vpop.f32.mrf.mxu0
  %v1836 = vadd.f32 %v1808, %v1835
  %1837 = vmatmul.bf16.gmra.mxu0 %v1138
  %v1838 = vpop.f32.mrf.mxu0
  %v1839 = vadd.f32 %v1811, %v1838
  %v1840 = vpop.f32.mrf.mxu0
  %v1841 = vadd.f32 %v1813, %v1840
  %1842 = vmatmul.bf16.gmra.mxu0 %v1141
  %v1843 = vpop.f32.mrf.mxu0
  %v1844 = vadd.f32 %v1816, %v1843
  %v1845 = vpop.f32.mrf.mxu0
  %1846 = vdwg.mxu0
  %1847 = vmatpush.bf16.msra.mxu0 %v1550
  %1848 = vmatpush.bf16.msra.mxu0 %v1547
  %1849 = vmatpush.bf16.msra.mxu0 %v1544
  %1850 = vmatpush.bf16.msra.mxu0 %v1541
  %1851 = vmatpush.bf16.msra.mxu0 %v1538
  %1852 = vmatpush.bf16.msra.mxu0 %v1535
  %1853 = vmatpush.bf16.msra.mxu0 %v1532
  %1854 = vmatpush.bf16.msra.mxu0 %v1529
  %1855 = vmatmul.bf16.gmra.mxu0 %v1133
  %v1856 = vpop.f32.mrf.mxu0
  %v1857 = vadd.f32 %v1829, %v1856
  %v1858 = vpop.f32.mrf.mxu0
  %v1859 = vadd.f32 %v1831, %v1858
  %1860 = vmatmul.bf16.gmra.mxu0 %v1136
  %v1861 = vpop.f32.mrf.mxu0
  %v1862 = vadd.f32 %v1834, %v1861
  %v1863 = vpop.f32.mrf.mxu0
  %v1864 = vadd.f32 %v1836, %v1863
  %1865 = vmatmul.bf16.gmra.mxu0 %v1139
  %v1866 = vpop.f32.mrf.mxu0
  %v1867 = vadd.f32 %v1839, %v1866
  %v1868 = vpop.f32.mrf.mxu0
  %v1869 = vadd.f32 %v1841, %v1868
  %1870 = vmatmul.bf16.gmra.mxu0 %v1142
  %v1871 = vpop.f32.mrf.mxu0
  %v1872 = vadd.f32 %v1844, %v1871
  %v1873 = vpop.f32.mrf.mxu0
  %1874 = vdwg.mxu0
  %1875 = vst [vmem:[%s5] sm:$0xff] %v1689
  %1876 = vst [vmem:[%s5 + $0x8] sm:$0xff] %v1773
  %1877 = vst [vmem:[%s5 + $0x10] sm:$0xff] %v1857
  %1878 = vst [vmem:[%s5 + $0x18] sm:$0xff] %v1691
  %1879 = vst [vmem:[%s5 + $0x20] sm:$0xff] %v1775
  %1880 = vst [vmem:[%s5 + $0x28] sm:$0xff] %v1859
  %1881 = vst [vmem:[%s5 + $0x30] sm:$0xff] %v1694
  %1882 = vst [vmem:[%s5 + $0x38] sm:$0xff] %v1778
  %1883 = vst [vmem:[%s5 + $0x40] sm:$0xff] %v1862
  %1884 = vst [vmem:[%s5 + $0x48] sm:$0xff] %v1696
  %1885 = vst [vmem:[%s5 + $0x50] sm:$0xff] %v1780
  %1886 = vst [vmem:[%s5 + $0x58] sm:$0xff] %v1864
  %1887 = vst [vmem:[%s5 + $0x60] sm:$0xff] %v1699
  %1888 = vst [vmem:[%s5 + $0x68] sm:$0xff] %v1783
  %1889 = vst [vmem:[%s5 + $0x70] sm:$0xff] %v1867
  %1890 = vst [vmem:[%s5 + $0x78] sm:$0xff] %v1701
  %1891 = vst [vmem:[%s5 + $0x80] sm:$0xff] %v1785
  %1892 = vst [vmem:[%s5 + $0x88] sm:$0xff] %v1869
  %1893 = vst [vmem:[%s5 + $0x90] sm:$0x1] %v1704
  %1894 = vst [vmem:[%s5 + $0x98] sm:$0x1] %v1788
  %1895 = vst [vmem:[%s5 + $0xa0] sm:$0x1] %v1872
  %v1896 = vld [vmem:[%s0 + $0x18] sm:$0xff]
  %v1897 = vld [vmem:[%s0 + $0x20] sm:$0xff]
  %v1898 = vld [vmem:[%s0 + $0x28] sm:$0xff]
  %v1899 = vld [vmem:[%s0 + $0x60] sm:$0xff]
  %v1900 = vld [vmem:[%s0 + $0x68] sm:$0xff]
  %v1901 = vld [vmem:[%s0 + $0x70] sm:$0xff]
  %v1902 = vld [vmem:[%s0 + $0xa8] sm:$0xff]
  %v1903 = vld [vmem:[%s0 + $0xb0] sm:$0xff]
  %v1904 = vld [vmem:[%s0 + $0xb8] sm:$0xff]
  %v1905 = vld [vmem:[%s0 + $0xf0] sm:$0xff]
  %v1906 = vld [vmem:[%s0 + $0xf8] sm:$0xff]
  %v1907 = vld [vmem:[%s0 + $0x100] sm:$0xff]
  %v1908 = vld [vmem:[%s0 + $0x138] sm:$0xff]
  %v1909 = vld [vmem:[%s0 + $0x140] sm:$0xff]
  %v1910 = vld [vmem:[%s0 + $0x148] sm:$0xff]
  %v1911 = vld [vmem:[%s0 + $0x180] sm:$0xff]
  %v1912 = vld [vmem:[%s0 + $0x188] sm:$0xff]
  %v1913 = vld [vmem:[%s0 + $0x190] sm:$0xff]
  %v1914 = vld [vmem:[%s0 + $0x1c8] sm:$0x1]
  %v1915 = vld [vmem:[%s0 + $0x1d0] sm:$0x1]
  %v1916 = vld [vmem:[%s0 + $0x1d8] sm:$0x1]
  %v1917 = vmax.f32 %v1896, 0.0
  %v1918 = vmax.f32 %v1897, 0.0
  %v1919 = vmax.f32 %v1898, 0.0
  %v1920 = vmax.f32 %v1899, 0.0
  %v1921 = vmax.f32 %v1900, 0.0
  %v1922 = vmax.f32 %v1901, 0.0
  %v1923 = vmax.f32 %v1902, 0.0
  %v1924 = vmax.f32 %v1903, 0.0
  %v1925 = vmax.f32 %v1904, 0.0
  %v1926 = vmax.f32 %v1905, 0.0
  %v1927 = vmax.f32 %v1906, 0.0
  %v1928 = vmax.f32 %v1907, 0.0
  %v1929 = vmax.f32 %v1908, 0.0
  %v1930 = vmax.f32 %v1909, 0.0
  %v1931 = vmax.f32 %v1910, 0.0
  %v1932 = vmax.f32 %v1911, 0.0
  %v1933 = vmax.f32 %v1912, 0.0
  %v1934 = vmax.f32 %v1913, 0.0
  %v1935 = vmax.f32 %v1914, 0.0
  %v1936 = vmax.f32 %v1915, 0.0
  %v1937 = vmax.f32 %v1916, 0.0
  %s1938 = scalar_lea.vmem %s1, 24
  %v1939 = vld [vmem:[%s1938] ss:$8 sm:$0x7]
  %v1941 = vperm.slane %v1939, 0
  %v1942 = vperm.slane %v1939, 1
  %v1943 = vperm.slane %v1939, 2
  %v1947 = vmul.f32 %v1917, %v1941
  %v1948 = vmul.f32 %v1918, %v1942
  %v1949 = vmul.f32 %v1919, %v1943
  %v1950 = vmul.f32 %v1920, %v1941
  %v1951 = vmul.f32 %v1921, %v1942
  %v1952 = vmul.f32 %v1922, %v1943
  %v1953 = vmul.f32 %v1923, %v1941
  %v1954 = vmul.f32 %v1924, %v1942
  %v1955 = vmul.f32 %v1925, %v1943
  %v1956 = vmul.f32 %v1926, %v1941
  %v1957 = vmul.f32 %v1927, %v1942
  %v1958 = vmul.f32 %v1928, %v1943
  %v1959 = vmul.f32 %v1929, %v1941
  %v1960 = vmul.f32 %v1930, %v1942
  %v1961 = vmul.f32 %v1931, %v1943
  %v1962 = vmul.f32 %v1932, %v1941
  %v1963 = vmul.f32 %v1933, %v1942
  %v1964 = vmul.f32 %v1934, %v1943
  %v1965 = vmul.f32 %v1935, %v1941
  %v1966 = vmul.f32 %v1936, %v1942
  %v1967 = vmul.f32 %v1937, %v1943
  %v1968 = vadd.f32 %v1947, 0.0
  %v1969 = vadd.f32 %v1948, 0.0
  %v1970 = vadd.f32 %v1949, 0.0
  %v1971 = vadd.f32 %v1950, 0.0
  %v1972 = vadd.f32 %v1951, 0.0
  %v1973 = vadd.f32 %v1952, 0.0
  %v1974 = vadd.f32 %v1953, 0.0
  %v1975 = vadd.f32 %v1954, 0.0
  %v1976 = vadd.f32 %v1955, 0.0
  %v1977 = vadd.f32 %v1956, 0.0
  %v1978 = vadd.f32 %v1957, 0.0
  %v1979 = vadd.f32 %v1958, 0.0
  %v1980 = vadd.f32 %v1959, 0.0
  %v1981 = vadd.f32 %v1960, 0.0
  %v1982 = vadd.f32 %v1961, 0.0
  %v1983 = vadd.f32 %v1962, 0.0
  %v1984 = vadd.f32 %v1963, 0.0
  %v1985 = vadd.f32 %v1964, 0.0
  %v1986 = vadd.f32 %v1965, 0.0
  %v1987 = vadd.f32 %v1966, 0.0
  %v1988 = vadd.f32 %v1967, 0.0
  %v1989 = vld [vmem:[%s112 + $0x18] sm:$0xff]
  %v1990 = vld [vmem:[%s112 + $0x20] sm:$0xff]
  %v1991 = vld [vmem:[%s112 + $0x28] sm:$0xff]
  %v1992 = vld [vmem:[%s112 + $0x60] sm:$0xff]
  %v1993 = vld [vmem:[%s112 + $0x68] sm:$0xff]
  %v1994 = vld [vmem:[%s112 + $0x70] sm:$0xff]
  %v1995 = vld [vmem:[%s112 + $0xa8] sm:$0xff]
  %v1996 = vld [vmem:[%s112 + $0xb0] sm:$0xff]
  %v1997 = vld [vmem:[%s112 + $0xb8] sm:$0xff]
  %v1998 = vld [vmem:[%s112 + $0xf0] sm:$0xff]
  %v1999 = vld [vmem:[%s112 + $0xf8] sm:$0xff]
  %v2000 = vld [vmem:[%s112 + $0x100] sm:$0xff]
  %v2001 = vld [vmem:[%s112 + $0x138] sm:$0xff]
  %v2002 = vld [vmem:[%s112 + $0x140] sm:$0xff]
  %v2003 = vld [vmem:[%s112 + $0x148] sm:$0xff]
  %v2004 = vld [vmem:[%s112 + $0x180] sm:$0xff]
  %v2005 = vld [vmem:[%s112 + $0x188] sm:$0xff]
  %v2006 = vld [vmem:[%s112 + $0x190] sm:$0xff]
  %v2007 = vld [vmem:[%s112 + $0x1c8] sm:$0x1]
  %v2008 = vld [vmem:[%s112 + $0x1d0] sm:$0x1]
  %v2009 = vld [vmem:[%s112 + $0x1d8] sm:$0x1]
  %v2010 = vmax.f32 %v1989, 0.0
  %v2011 = vmax.f32 %v1990, 0.0
  %v2012 = vmax.f32 %v1991, 0.0
  %v2013 = vmax.f32 %v1992, 0.0
  %v2014 = vmax.f32 %v1993, 0.0
  %v2015 = vmax.f32 %v1994, 0.0
  %v2016 = vmax.f32 %v1995, 0.0
  %v2017 = vmax.f32 %v1996, 0.0
  %v2018 = vmax.f32 %v1997, 0.0
  %v2019 = vmax.f32 %v1998, 0.0
  %v2020 = vmax.f32 %v1999, 0.0
  %v2021 = vmax.f32 %v2000, 0.0
  %v2022 = vmax.f32 %v2001, 0.0
  %v2023 = vmax.f32 %v2002, 0.0
  %v2024 = vmax.f32 %v2003, 0.0
  %v2025 = vmax.f32 %v2004, 0.0
  %v2026 = vmax.f32 %v2005, 0.0
  %v2027 = vmax.f32 %v2006, 0.0
  %v2028 = vmax.f32 %v2007, 0.0
  %v2029 = vmax.f32 %v2008, 0.0
  %v2030 = vmax.f32 %v2009, 0.0
  %s2031 = scalar_lea.vmem %s1, 25
  %v2032 = vld [vmem:[%s2031] ss:$8 sm:$0x7]
  %v2034 = vperm.slane %v2032, 0
  %v2035 = vperm.slane %v2032, 1
  %v2036 = vperm.slane %v2032, 2
  %v2040 = vmul.f32 %v2010, %v2034
  %v2041 = vmul.f32 %v2011, %v2035
  %v2042 = vmul.f32 %v2012, %v2036
  %v2043 = vmul.f32 %v2013, %v2034
  %v2044 = vmul.f32 %v2014, %v2035
  %v2045 = vmul.f32 %v2015, %v2036
  %v2046 = vmul.f32 %v2016, %v2034
  %v2047 = vmul.f32 %v2017, %v2035
  %v2048 = vmul.f32 %v2018, %v2036
  %v2049 = vmul.f32 %v2019, %v2034
  %v2050 = vmul.f32 %v2020, %v2035
  %v2051 = vmul.f32 %v2021, %v2036
  %v2052 = vmul.f32 %v2022, %v2034
  %v2053 = vmul.f32 %v2023, %v2035
  %v2054 = vmul.f32 %v2024, %v2036
  %v2055 = vmul.f32 %v2025, %v2034
  %v2056 = vmul.f32 %v2026, %v2035
  %v2057 = vmul.f32 %v2027, %v2036
  %v2058 = vmul.f32 %v2028, %v2034
  %v2059 = vmul.f32 %v2029, %v2035
  %v2060 = vmul.f32 %v2030, %v2036
  %v2061 = vadd.f32 %v1968, %v2040
  %v2062 = vadd.f32 %v1969, %v2041
  %v2063 = vadd.f32 %v1970, %v2042
  %v2064 = vadd.f32 %v1971, %v2043
  %v2065 = vadd.f32 %v1972, %v2044
  %v2066 = vadd.f32 %v1973, %v2045
  %v2067 = vadd.f32 %v1974, %v2046
  %v2068 = vadd.f32 %v1975, %v2047
  %v2069 = vadd.f32 %v1976, %v2048
  %v2070 = vadd.f32 %v1977, %v2049
  %v2071 = vadd.f32 %v1978, %v2050
  %v2072 = vadd.f32 %v1979, %v2051
  %v2073 = vadd.f32 %v1980, %v2052
  %v2074 = vadd.f32 %v1981, %v2053
  %v2075 = vadd.f32 %v1982, %v2054
  %v2076 = vadd.f32 %v1983, %v2055
  %v2077 = vadd.f32 %v1984, %v2056
  %v2078 = vadd.f32 %v1985, %v2057
  %v2079 = vadd.f32 %v1986, %v2058
  %v2080 = vadd.f32 %v1987, %v2059
  %v2081 = vadd.f32 %v1988, %v2060
  %v2082 = vld [vmem:[%s206 + $0x18] sm:$0xff]
  %v2083 = vld [vmem:[%s206 + $0x20] sm:$0xff]
  %v2084 = vld [vmem:[%s206 + $0x28] sm:$0xff]
  %v2085 = vld [vmem:[%s206 + $0x60] sm:$0xff]
  %v2086 = vld [vmem:[%s206 + $0x68] sm:$0xff]
  %v2087 = vld [vmem:[%s206 + $0x70] sm:$0xff]
  %v2088 = vld [vmem:[%s206 + $0xa8] sm:$0xff]
  %v2089 = vld [vmem:[%s206 + $0xb0] sm:$0xff]
  %v2090 = vld [vmem:[%s206 + $0xb8] sm:$0xff]
  %v2091 = vld [vmem:[%s206 + $0xf0] sm:$0xff]
  %v2092 = vld [vmem:[%s206 + $0xf8] sm:$0xff]
  %v2093 = vld [vmem:[%s206 + $0x100] sm:$0xff]
  %v2094 = vld [vmem:[%s206 + $0x138] sm:$0xff]
  %v2095 = vld [vmem:[%s206 + $0x140] sm:$0xff]
  %v2096 = vld [vmem:[%s206 + $0x148] sm:$0xff]
  %v2097 = vld [vmem:[%s206 + $0x180] sm:$0xff]
  %v2098 = vld [vmem:[%s206 + $0x188] sm:$0xff]
  %v2099 = vld [vmem:[%s206 + $0x190] sm:$0xff]
  %v2100 = vld [vmem:[%s206 + $0x1c8] sm:$0x1]
  %v2101 = vld [vmem:[%s206 + $0x1d0] sm:$0x1]
  %v2102 = vld [vmem:[%s206 + $0x1d8] sm:$0x1]
  %v2103 = vmax.f32 %v2082, 0.0
  %v2104 = vmax.f32 %v2083, 0.0
  %v2105 = vmax.f32 %v2084, 0.0
  %v2106 = vmax.f32 %v2085, 0.0
  %v2107 = vmax.f32 %v2086, 0.0
  %v2108 = vmax.f32 %v2087, 0.0
  %v2109 = vmax.f32 %v2088, 0.0
  %v2110 = vmax.f32 %v2089, 0.0
  %v2111 = vmax.f32 %v2090, 0.0
  %v2112 = vmax.f32 %v2091, 0.0
  %v2113 = vmax.f32 %v2092, 0.0
  %v2114 = vmax.f32 %v2093, 0.0
  %v2115 = vmax.f32 %v2094, 0.0
  %v2116 = vmax.f32 %v2095, 0.0
  %v2117 = vmax.f32 %v2096, 0.0
  %v2118 = vmax.f32 %v2097, 0.0
  %v2119 = vmax.f32 %v2098, 0.0
  %v2120 = vmax.f32 %v2099, 0.0
  %v2121 = vmax.f32 %v2100, 0.0
  %v2122 = vmax.f32 %v2101, 0.0
  %v2123 = vmax.f32 %v2102, 0.0
  %s2124 = scalar_lea.vmem %s1, 26
  %v2125 = vld [vmem:[%s2124] ss:$8 sm:$0x7]
  %v2127 = vperm.slane %v2125, 0
  %v2128 = vperm.slane %v2125, 1
  %v2129 = vperm.slane %v2125, 2
  %v2133 = vmul.f32 %v2103, %v2127
  %v2134 = vmul.f32 %v2104, %v2128
  %v2135 = vmul.f32 %v2105, %v2129
  %v2136 = vmul.f32 %v2106, %v2127
  %v2137 = vmul.f32 %v2107, %v2128
  %v2138 = vmul.f32 %v2108, %v2129
  %v2139 = vmul.f32 %v2109, %v2127
  %v2140 = vmul.f32 %v2110, %v2128
  %v2141 = vmul.f32 %v2111, %v2129
  %v2142 = vmul.f32 %v2112, %v2127
  %v2143 = vmul.f32 %v2113, %v2128
  %v2144 = vmul.f32 %v2114, %v2129
  %v2145 = vmul.f32 %v2115, %v2127
  %v2146 = vmul.f32 %v2116, %v2128
  %v2147 = vmul.f32 %v2117, %v2129
  %v2148 = vmul.f32 %v2118, %v2127
  %v2149 = vmul.f32 %v2119, %v2128
  %v2150 = vmul.f32 %v2120, %v2129
  %v2151 = vmul.f32 %v2121, %v2127
  %v2152 = vmul.f32 %v2122, %v2128
  %v2153 = vmul.f32 %v2123, %v2129
  %v2154 = vadd.f32 %v2061, %v2133
  %v2155 = vadd.f32 %v2062, %v2134
  %v2156 = vadd.f32 %v2063, %v2135
  %v2157 = vadd.f32 %v2064, %v2136
  %v2158 = vadd.f32 %v2065, %v2137
  %v2159 = vadd.f32 %v2066, %v2138
  %v2160 = vadd.f32 %v2067, %v2139
  %v2161 = vadd.f32 %v2068, %v2140
  %v2162 = vadd.f32 %v2069, %v2141
  %v2163 = vadd.f32 %v2070, %v2142
  %v2164 = vadd.f32 %v2071, %v2143
  %v2165 = vadd.f32 %v2072, %v2144
  %v2166 = vadd.f32 %v2073, %v2145
  %v2167 = vadd.f32 %v2074, %v2146
  %v2168 = vadd.f32 %v2075, %v2147
  %v2169 = vadd.f32 %v2076, %v2148
  %v2170 = vadd.f32 %v2077, %v2149
  %v2171 = vadd.f32 %v2078, %v2150
  %v2172 = vadd.f32 %v2079, %v2151
  %v2173 = vadd.f32 %v2080, %v2152
  %v2174 = vadd.f32 %v2081, %v2153
  %v2175 = vld [vmem:[%s300 + $0x18] sm:$0xff]
  %v2176 = vld [vmem:[%s300 + $0x20] sm:$0xff]
  %v2177 = vld [vmem:[%s300 + $0x28] sm:$0xff]
  %v2178 = vld [vmem:[%s300 + $0x60] sm:$0xff]
  %v2179 = vld [vmem:[%s300 + $0x68] sm:$0xff]
  %v2180 = vld [vmem:[%s300 + $0x70] sm:$0xff]
  %v2181 = vld [vmem:[%s300 + $0xa8] sm:$0xff]
  %v2182 = vld [vmem:[%s300 + $0xb0] sm:$0xff]
  %v2183 = vld [vmem:[%s300 + $0xb8] sm:$0xff]
  %v2184 = vld [vmem:[%s300 + $0xf0] sm:$0xff]
  %v2185 = vld [vmem:[%s300 + $0xf8] sm:$0xff]
  %v2186 = vld [vmem:[%s300 + $0x100] sm:$0xff]
  %v2187 = vld [vmem:[%s300 + $0x138] sm:$0xff]
  %v2188 = vld [vmem:[%s300 + $0x140] sm:$0xff]
  %v2189 = vld [vmem:[%s300 + $0x148] sm:$0xff]
  %v2190 = vld [vmem:[%s300 + $0x180] sm:$0xff]
  %v2191 = vld [vmem:[%s300 + $0x188] sm:$0xff]
  %v2192 = vld [vmem:[%s300 + $0x190] sm:$0xff]
  %v2193 = vld [vmem:[%s300 + $0x1c8] sm:$0x1]
  %v2194 = vld [vmem:[%s300 + $0x1d0] sm:$0x1]
  %v2195 = vld [vmem:[%s300 + $0x1d8] sm:$0x1]
  %v2196 = vmax.f32 %v2175, 0.0
  %v2197 = vmax.f32 %v2176, 0.0
  %v2198 = vmax.f32 %v2177, 0.0
  %v2199 = vmax.f32 %v2178, 0.0
  %v2200 = vmax.f32 %v2179, 0.0
  %v2201 = vmax.f32 %v2180, 0.0
  %v2202 = vmax.f32 %v2181, 0.0
  %v2203 = vmax.f32 %v2182, 0.0
  %v2204 = vmax.f32 %v2183, 0.0
  %v2205 = vmax.f32 %v2184, 0.0
  %v2206 = vmax.f32 %v2185, 0.0
  %v2207 = vmax.f32 %v2186, 0.0
  %v2208 = vmax.f32 %v2187, 0.0
  %v2209 = vmax.f32 %v2188, 0.0
  %v2210 = vmax.f32 %v2189, 0.0
  %v2211 = vmax.f32 %v2190, 0.0
  %v2212 = vmax.f32 %v2191, 0.0
  %v2213 = vmax.f32 %v2192, 0.0
  %v2214 = vmax.f32 %v2193, 0.0
  %v2215 = vmax.f32 %v2194, 0.0
  %v2216 = vmax.f32 %v2195, 0.0
  %s2217 = scalar_lea.vmem %s1, 27
  %v2218 = vld [vmem:[%s2217] ss:$8 sm:$0x7]
  %v2220 = vperm.slane %v2218, 0
  %v2221 = vperm.slane %v2218, 1
  %v2222 = vperm.slane %v2218, 2
  %v2226 = vmul.f32 %v2196, %v2220
  %v2227 = vmul.f32 %v2197, %v2221
  %v2228 = vmul.f32 %v2198, %v2222
  %v2229 = vmul.f32 %v2199, %v2220
  %v2230 = vmul.f32 %v2200, %v2221
  %v2231 = vmul.f32 %v2201, %v2222
  %v2232 = vmul.f32 %v2202, %v2220
  %v2233 = vmul.f32 %v2203, %v2221
  %v2234 = vmul.f32 %v2204, %v2222
  %v2235 = vmul.f32 %v2205, %v2220
  %v2236 = vmul.f32 %v2206, %v2221
  %v2237 = vmul.f32 %v2207, %v2222
  %v2238 = vmul.f32 %v2208, %v2220
  %v2239 = vmul.f32 %v2209, %v2221
  %v2240 = vmul.f32 %v2210, %v2222
  %v2241 = vmul.f32 %v2211, %v2220
  %v2242 = vmul.f32 %v2212, %v2221
  %v2243 = vmul.f32 %v2213, %v2222
  %v2244 = vmul.f32 %v2214, %v2220
  %v2245 = vmul.f32 %v2215, %v2221
  %v2246 = vmul.f32 %v2216, %v2222
  %v2247 = vadd.f32 %v2154, %v2226
  %v2248 = vadd.f32 %v2155, %v2227
  %v2249 = vadd.f32 %v2156, %v2228
  %v2250 = vadd.f32 %v2157, %v2229
  %v2251 = vadd.f32 %v2158, %v2230
  %v2252 = vadd.f32 %v2159, %v2231
  %v2253 = vadd.f32 %v2160, %v2232
  %v2254 = vadd.f32 %v2161, %v2233
  %v2255 = vadd.f32 %v2162, %v2234
  %v2256 = vadd.f32 %v2163, %v2235
  %v2257 = vadd.f32 %v2164, %v2236
  %v2258 = vadd.f32 %v2165, %v2237
  %v2259 = vadd.f32 %v2166, %v2238
  %v2260 = vadd.f32 %v2167, %v2239
  %v2261 = vadd.f32 %v2168, %v2240
  %v2262 = vadd.f32 %v2169, %v2241
  %v2263 = vadd.f32 %v2170, %v2242
  %v2264 = vadd.f32 %v2171, %v2243
  %v2265 = vadd.f32 %v2172, %v2244
  %v2266 = vadd.f32 %v2173, %v2245
  %v2267 = vadd.f32 %v2174, %v2246
  %v2268 = vld [vmem:[%s394 + $0x18] sm:$0xff]
  %v2269 = vld [vmem:[%s394 + $0x20] sm:$0xff]
  %v2270 = vld [vmem:[%s394 + $0x28] sm:$0xff]
  %v2271 = vld [vmem:[%s394 + $0x60] sm:$0xff]
  %v2272 = vld [vmem:[%s394 + $0x68] sm:$0xff]
  %v2273 = vld [vmem:[%s394 + $0x70] sm:$0xff]
  %v2274 = vld [vmem:[%s394 + $0xa8] sm:$0xff]
  %v2275 = vld [vmem:[%s394 + $0xb0] sm:$0xff]
  %v2276 = vld [vmem:[%s394 + $0xb8] sm:$0xff]
  %v2277 = vld [vmem:[%s394 + $0xf0] sm:$0xff]
  %v2278 = vld [vmem:[%s394 + $0xf8] sm:$0xff]
  %v2279 = vld [vmem:[%s394 + $0x100] sm:$0xff]
  %v2280 = vld [vmem:[%s394 + $0x138] sm:$0xff]
  %v2281 = vld [vmem:[%s394 + $0x140] sm:$0xff]
  %v2282 = vld [vmem:[%s394 + $0x148] sm:$0xff]
  %v2283 = vld [vmem:[%s394 + $0x180] sm:$0xff]
  %v2284 = vld [vmem:[%s394 + $0x188] sm:$0xff]
  %v2285 = vld [vmem:[%s394 + $0x190] sm:$0xff]
  %v2286 = vld [vmem:[%s394 + $0x1c8] sm:$0x1]
  %v2287 = vld [vmem:[%s394 + $0x1d0] sm:$0x1]
  %v2288 = vld [vmem:[%s394 + $0x1d8] sm:$0x1]
  %v2289 = vmax.f32 %v2268, 0.0
  %v2290 = vmax.f32 %v2269, 0.0
  %v2291 = vmax.f32 %v2270, 0.0
  %v2292 = vmax.f32 %v2271, 0.0
  %v2293 = vmax.f32 %v2272, 0.0
  %v2294 = vmax.f32 %v2273, 0.0
  %v2295 = vmax.f32 %v2274, 0.0
  %v2296 = vmax.f32 %v2275, 0.0
  %v2297 = vmax.f32 %v2276, 0.0
  %v2298 = vmax.f32 %v2277, 0.0
  %v2299 = vmax.f32 %v2278, 0.0
  %v2300 = vmax.f32 %v2279, 0.0
  %v2301 = vmax.f32 %v2280, 0.0
  %v2302 = vmax.f32 %v2281, 0.0
  %v2303 = vmax.f32 %v2282, 0.0
  %v2304 = vmax.f32 %v2283, 0.0
  %v2305 = vmax.f32 %v2284, 0.0
  %v2306 = vmax.f32 %v2285, 0.0
  %v2307 = vmax.f32 %v2286, 0.0
  %v2308 = vmax.f32 %v2287, 0.0
  %v2309 = vmax.f32 %v2288, 0.0
  %s2310 = scalar_lea.vmem %s1, 28
  %v2311 = vld [vmem:[%s2310] ss:$8 sm:$0x7]
  %v2313 = vperm.slane %v2311, 0
  %v2314 = vperm.slane %v2311, 1
  %v2315 = vperm.slane %v2311, 2
  %v2319 = vmul.f32 %v2289, %v2313
  %v2320 = vmul.f32 %v2290, %v2314
  %v2321 = vmul.f32 %v2291, %v2315
  %v2322 = vmul.f32 %v2292, %v2313
  %v2323 = vmul.f32 %v2293, %v2314
  %v2324 = vmul.f32 %v2294, %v2315
  %v2325 = vmul.f32 %v2295, %v2313
  %v2326 = vmul.f32 %v2296, %v2314
  %v2327 = vmul.f32 %v2297, %v2315
  %v2328 = vmul.f32 %v2298, %v2313
  %v2329 = vmul.f32 %v2299, %v2314
  %v2330 = vmul.f32 %v2300, %v2315
  %v2331 = vmul.f32 %v2301, %v2313
  %v2332 = vmul.f32 %v2302, %v2314
  %v2333 = vmul.f32 %v2303, %v2315
  %v2334 = vmul.f32 %v2304, %v2313
  %v2335 = vmul.f32 %v2305, %v2314
  %v2336 = vmul.f32 %v2306, %v2315
  %v2337 = vmul.f32 %v2307, %v2313
  %v2338 = vmul.f32 %v2308, %v2314
  %v2339 = vmul.f32 %v2309, %v2315
  %v2340 = vadd.f32 %v2247, %v2319
  %v2341 = vadd.f32 %v2248, %v2320
  %v2342 = vadd.f32 %v2249, %v2321
  %v2343 = vadd.f32 %v2250, %v2322
  %v2344 = vadd.f32 %v2251, %v2323
  %v2345 = vadd.f32 %v2252, %v2324
  %v2346 = vadd.f32 %v2253, %v2325
  %v2347 = vadd.f32 %v2254, %v2326
  %v2348 = vadd.f32 %v2255, %v2327
  %v2349 = vadd.f32 %v2256, %v2328
  %v2350 = vadd.f32 %v2257, %v2329
  %v2351 = vadd.f32 %v2258, %v2330
  %v2352 = vadd.f32 %v2259, %v2331
  %v2353 = vadd.f32 %v2260, %v2332
  %v2354 = vadd.f32 %v2261, %v2333
  %v2355 = vadd.f32 %v2262, %v2334
  %v2356 = vadd.f32 %v2263, %v2335
  %v2357 = vadd.f32 %v2264, %v2336
  %v2358 = vadd.f32 %v2265, %v2337
  %v2359 = vadd.f32 %v2266, %v2338
  %v2360 = vadd.f32 %v2267, %v2339
  %v2361 = vld [vmem:[%s488 + $0x18] sm:$0xff]
  %v2362 = vld [vmem:[%s488 + $0x20] sm:$0xff]
  %v2363 = vld [vmem:[%s488 + $0x28] sm:$0xff]
  %v2364 = vld [vmem:[%s488 + $0x60] sm:$0xff]
  %v2365 = vld [vmem:[%s488 + $0x68] sm:$0xff]
  %v2366 = vld [vmem:[%s488 + $0x70] sm:$0xff]
  %v2367 = vld [vmem:[%s488 + $0xa8] sm:$0xff]
  %v2368 = vld [vmem:[%s488 + $0xb0] sm:$0xff]
  %v2369 = vld [vmem:[%s488 + $0xb8] sm:$0xff]
  %v2370 = vld [vmem:[%s488 + $0xf0] sm:$0xff]
  %v2371 = vld [vmem:[%s488 + $0xf8] sm:$0xff]
  %v2372 = vld [vmem:[%s488 + $0x100] sm:$0xff]
  %v2373 = vld [vmem:[%s488 + $0x138] sm:$0xff]
  %v2374 = vld [vmem:[%s488 + $0x140] sm:$0xff]
  %v2375 = vld [vmem:[%s488 + $0x148] sm:$0xff]
  %v2376 = vld [vmem:[%s488 + $0x180] sm:$0xff]
  %v2377 = vld [vmem:[%s488 + $0x188] sm:$0xff]
  %v2378 = vld [vmem:[%s488 + $0x190] sm:$0xff]
  %v2379 = vld [vmem:[%s488 + $0x1c8] sm:$0x1]
  %v2380 = vld [vmem:[%s488 + $0x1d0] sm:$0x1]
  %v2381 = vld [vmem:[%s488 + $0x1d8] sm:$0x1]
  %v2382 = vmax.f32 %v2361, 0.0
  %v2383 = vmax.f32 %v2362, 0.0
  %v2384 = vmax.f32 %v2363, 0.0
  %v2385 = vmax.f32 %v2364, 0.0
  %v2386 = vmax.f32 %v2365, 0.0
  %v2387 = vmax.f32 %v2366, 0.0
  %v2388 = vmax.f32 %v2367, 0.0
  %v2389 = vmax.f32 %v2368, 0.0
  %v2390 = vmax.f32 %v2369, 0.0
  %v2391 = vmax.f32 %v2370, 0.0
  %v2392 = vmax.f32 %v2371, 0.0
  %v2393 = vmax.f32 %v2372, 0.0
  %v2394 = vmax.f32 %v2373, 0.0
  %v2395 = vmax.f32 %v2374, 0.0
  %v2396 = vmax.f32 %v2375, 0.0
  %v2397 = vmax.f32 %v2376, 0.0
  %v2398 = vmax.f32 %v2377, 0.0
  %v2399 = vmax.f32 %v2378, 0.0
  %v2400 = vmax.f32 %v2379, 0.0
  %v2401 = vmax.f32 %v2380, 0.0
  %v2402 = vmax.f32 %v2381, 0.0
  %s2403 = scalar_lea.vmem %s1, 29
  %v2404 = vld [vmem:[%s2403] ss:$8 sm:$0x7]
  %v2406 = vperm.slane %v2404, 0
  %v2407 = vperm.slane %v2404, 1
  %v2408 = vperm.slane %v2404, 2
  %v2412 = vmul.f32 %v2382, %v2406
  %v2413 = vmul.f32 %v2383, %v2407
  %v2414 = vmul.f32 %v2384, %v2408
  %v2415 = vmul.f32 %v2385, %v2406
  %v2416 = vmul.f32 %v2386, %v2407
  %v2417 = vmul.f32 %v2387, %v2408
  %v2418 = vmul.f32 %v2388, %v2406
  %v2419 = vmul.f32 %v2389, %v2407
  %v2420 = vmul.f32 %v2390, %v2408
  %v2421 = vmul.f32 %v2391, %v2406
  %v2422 = vmul.f32 %v2392, %v2407
  %v2423 = vmul.f32 %v2393, %v2408
  %v2424 = vmul.f32 %v2394, %v2406
  %v2425 = vmul.f32 %v2395, %v2407
  %v2426 = vmul.f32 %v2396, %v2408
  %v2427 = vmul.f32 %v2397, %v2406
  %v2428 = vmul.f32 %v2398, %v2407
  %v2429 = vmul.f32 %v2399, %v2408
  %v2430 = vmul.f32 %v2400, %v2406
  %v2431 = vmul.f32 %v2401, %v2407
  %v2432 = vmul.f32 %v2402, %v2408
  %v2433 = vadd.f32 %v2340, %v2412
  %v2434 = vadd.f32 %v2341, %v2413
  %v2435 = vadd.f32 %v2342, %v2414
  %v2436 = vadd.f32 %v2343, %v2415
  %v2437 = vadd.f32 %v2344, %v2416
  %v2438 = vadd.f32 %v2345, %v2417
  %v2439 = vadd.f32 %v2346, %v2418
  %v2440 = vadd.f32 %v2347, %v2419
  %v2441 = vadd.f32 %v2348, %v2420
  %v2442 = vadd.f32 %v2349, %v2421
  %v2443 = vadd.f32 %v2350, %v2422
  %v2444 = vadd.f32 %v2351, %v2423
  %v2445 = vadd.f32 %v2352, %v2424
  %v2446 = vadd.f32 %v2353, %v2425
  %v2447 = vadd.f32 %v2354, %v2426
  %v2448 = vadd.f32 %v2355, %v2427
  %v2449 = vadd.f32 %v2356, %v2428
  %v2450 = vadd.f32 %v2357, %v2429
  %v2451 = vadd.f32 %v2358, %v2430
  %v2452 = vadd.f32 %v2359, %v2431
  %v2453 = vadd.f32 %v2360, %v2432
  %v2454 = vld [vmem:[%s582 + $0x18] sm:$0xff]
  %v2455 = vld [vmem:[%s582 + $0x20] sm:$0xff]
  %v2456 = vld [vmem:[%s582 + $0x28] sm:$0xff]
  %v2457 = vld [vmem:[%s582 + $0x60] sm:$0xff]
  %v2458 = vld [vmem:[%s582 + $0x68] sm:$0xff]
  %v2459 = vld [vmem:[%s582 + $0x70] sm:$0xff]
  %v2460 = vld [vmem:[%s582 + $0xa8] sm:$0xff]
  %v2461 = vld [vmem:[%s582 + $0xb0] sm:$0xff]
  %v2462 = vld [vmem:[%s582 + $0xb8] sm:$0xff]
  %v2463 = vld [vmem:[%s582 + $0xf0] sm:$0xff]
  %v2464 = vld [vmem:[%s582 + $0xf8] sm:$0xff]
  %v2465 = vld [vmem:[%s582 + $0x100] sm:$0xff]
  %v2466 = vld [vmem:[%s582 + $0x138] sm:$0xff]
  %v2467 = vld [vmem:[%s582 + $0x140] sm:$0xff]
  %v2468 = vld [vmem:[%s582 + $0x148] sm:$0xff]
  %v2469 = vld [vmem:[%s582 + $0x180] sm:$0xff]
  %v2470 = vld [vmem:[%s582 + $0x188] sm:$0xff]
  %v2471 = vld [vmem:[%s582 + $0x190] sm:$0xff]
  %v2472 = vld [vmem:[%s582 + $0x1c8] sm:$0x1]
  %v2473 = vld [vmem:[%s582 + $0x1d0] sm:$0x1]
  %v2474 = vld [vmem:[%s582 + $0x1d8] sm:$0x1]
  %v2475 = vmax.f32 %v2454, 0.0
  %v2476 = vmax.f32 %v2455, 0.0
  %v2477 = vmax.f32 %v2456, 0.0
  %v2478 = vmax.f32 %v2457, 0.0
  %v2479 = vmax.f32 %v2458, 0.0
  %v2480 = vmax.f32 %v2459, 0.0
  %v2481 = vmax.f32 %v2460, 0.0
  %v2482 = vmax.f32 %v2461, 0.0
  %v2483 = vmax.f32 %v2462, 0.0
  %v2484 = vmax.f32 %v2463, 0.0
  %v2485 = vmax.f32 %v2464, 0.0
  %v2486 = vmax.f32 %v2465, 0.0
  %v2487 = vmax.f32 %v2466, 0.0
  %v2488 = vmax.f32 %v2467, 0.0
  %v2489 = vmax.f32 %v2468, 0.0
  %v2490 = vmax.f32 %v2469, 0.0
  %v2491 = vmax.f32 %v2470, 0.0
  %v2492 = vmax.f32 %v2471, 0.0
  %v2493 = vmax.f32 %v2472, 0.0
  %v2494 = vmax.f32 %v2473, 0.0
  %v2495 = vmax.f32 %v2474, 0.0
  %s2496 = scalar_lea.vmem %s1, 30
  %v2497 = vld [vmem:[%s2496] ss:$8 sm:$0x7]
  %v2499 = vperm.slane %v2497, 0
  %v2500 = vperm.slane %v2497, 1
  %v2501 = vperm.slane %v2497, 2
  %v2505 = vmul.f32 %v2475, %v2499
  %v2506 = vmul.f32 %v2476, %v2500
  %v2507 = vmul.f32 %v2477, %v2501
  %v2508 = vmul.f32 %v2478, %v2499
  %v2509 = vmul.f32 %v2479, %v2500
  %v2510 = vmul.f32 %v2480, %v2501
  %v2511 = vmul.f32 %v2481, %v2499
  %v2512 = vmul.f32 %v2482, %v2500
  %v2513 = vmul.f32 %v2483, %v2501
  %v2514 = vmul.f32 %v2484, %v2499
  %v2515 = vmul.f32 %v2485, %v2500
  %v2516 = vmul.f32 %v2486, %v2501
  %v2517 = vmul.f32 %v2487, %v2499
  %v2518 = vmul.f32 %v2488, %v2500
  %v2519 = vmul.f32 %v2489, %v2501
  %v2520 = vmul.f32 %v2490, %v2499
  %v2521 = vmul.f32 %v2491, %v2500
  %v2522 = vmul.f32 %v2492, %v2501
  %v2523 = vmul.f32 %v2493, %v2499
  %v2524 = vmul.f32 %v2494, %v2500
  %v2525 = vmul.f32 %v2495, %v2501
  %v2526 = vadd.f32 %v2433, %v2505
  %v2527 = vadd.f32 %v2434, %v2506
  %v2528 = vadd.f32 %v2435, %v2507
  %v2529 = vadd.f32 %v2436, %v2508
  %v2530 = vadd.f32 %v2437, %v2509
  %v2531 = vadd.f32 %v2438, %v2510
  %v2532 = vadd.f32 %v2439, %v2511
  %v2533 = vadd.f32 %v2440, %v2512
  %v2534 = vadd.f32 %v2441, %v2513
  %v2535 = vadd.f32 %v2442, %v2514
  %v2536 = vadd.f32 %v2443, %v2515
  %v2537 = vadd.f32 %v2444, %v2516
  %v2538 = vadd.f32 %v2445, %v2517
  %v2539 = vadd.f32 %v2446, %v2518
  %v2540 = vadd.f32 %v2447, %v2519
  %v2541 = vadd.f32 %v2448, %v2520
  %v2542 = vadd.f32 %v2449, %v2521
  %v2543 = vadd.f32 %v2450, %v2522
  %v2544 = vadd.f32 %v2451, %v2523
  %v2545 = vadd.f32 %v2452, %v2524
  %v2546 = vadd.f32 %v2453, %v2525
  %v2547 = vld [vmem:[%s676 + $0x18] sm:$0xff]
  %v2548 = vld [vmem:[%s676 + $0x20] sm:$0xff]
  %v2549 = vld [vmem:[%s676 + $0x28] sm:$0xff]
  %v2550 = vld [vmem:[%s676 + $0x60] sm:$0xff]
  %v2551 = vld [vmem:[%s676 + $0x68] sm:$0xff]
  %v2552 = vld [vmem:[%s676 + $0x70] sm:$0xff]
  %v2553 = vld [vmem:[%s676 + $0xa8] sm:$0xff]
  %v2554 = vld [vmem:[%s676 + $0xb0] sm:$0xff]
  %v2555 = vld [vmem:[%s676 + $0xb8] sm:$0xff]
  %v2556 = vld [vmem:[%s676 + $0xf0] sm:$0xff]
  %v2557 = vld [vmem:[%s676 + $0xf8] sm:$0xff]
  %v2558 = vld [vmem:[%s676 + $0x100] sm:$0xff]
  %v2559 = vld [vmem:[%s676 + $0x138] sm:$0xff]
  %v2560 = vld [vmem:[%s676 + $0x140] sm:$0xff]
  %v2561 = vld [vmem:[%s676 + $0x148] sm:$0xff]
  %v2562 = vld [vmem:[%s676 + $0x180] sm:$0xff]
  %v2563 = vld [vmem:[%s676 + $0x188] sm:$0xff]
  %v2564 = vld [vmem:[%s676 + $0x190] sm:$0xff]
  %v2565 = vld [vmem:[%s676 + $0x1c8] sm:$0x1]
  %v2566 = vld [vmem:[%s676 + $0x1d0] sm:$0x1]
  %v2567 = vld [vmem:[%s676 + $0x1d8] sm:$0x1]
  %v2568 = vmax.f32 %v2547, 0.0
  %v2569 = vmax.f32 %v2548, 0.0
  %v2570 = vmax.f32 %v2549, 0.0
  %v2571 = vmax.f32 %v2550, 0.0
  %v2572 = vmax.f32 %v2551, 0.0
  %v2573 = vmax.f32 %v2552, 0.0
  %v2574 = vmax.f32 %v2553, 0.0
  %v2575 = vmax.f32 %v2554, 0.0
  %v2576 = vmax.f32 %v2555, 0.0
  %v2577 = vmax.f32 %v2556, 0.0
  %v2578 = vmax.f32 %v2557, 0.0
  %v2579 = vmax.f32 %v2558, 0.0
  %v2580 = vmax.f32 %v2559, 0.0
  %v2581 = vmax.f32 %v2560, 0.0
  %v2582 = vmax.f32 %v2561, 0.0
  %v2583 = vmax.f32 %v2562, 0.0
  %v2584 = vmax.f32 %v2563, 0.0
  %v2585 = vmax.f32 %v2564, 0.0
  %v2586 = vmax.f32 %v2565, 0.0
  %v2587 = vmax.f32 %v2566, 0.0
  %v2588 = vmax.f32 %v2567, 0.0
  %s2589 = scalar_lea.vmem %s1, 31
  %v2590 = vld [vmem:[%s2589] ss:$8 sm:$0x7]
  %v2592 = vperm.slane %v2590, 0
  %v2593 = vperm.slane %v2590, 1
  %v2594 = vperm.slane %v2590, 2
  %v2598 = vmul.f32 %v2568, %v2592
  %v2599 = vmul.f32 %v2569, %v2593
  %v2600 = vmul.f32 %v2570, %v2594
  %v2601 = vmul.f32 %v2571, %v2592
  %v2602 = vmul.f32 %v2572, %v2593
  %v2603 = vmul.f32 %v2573, %v2594
  %v2604 = vmul.f32 %v2574, %v2592
  %v2605 = vmul.f32 %v2575, %v2593
  %v2606 = vmul.f32 %v2576, %v2594
  %v2607 = vmul.f32 %v2577, %v2592
  %v2608 = vmul.f32 %v2578, %v2593
  %v2609 = vmul.f32 %v2579, %v2594
  %v2610 = vmul.f32 %v2580, %v2592
  %v2611 = vmul.f32 %v2581, %v2593
  %v2612 = vmul.f32 %v2582, %v2594
  %v2613 = vmul.f32 %v2583, %v2592
  %v2614 = vmul.f32 %v2584, %v2593
  %v2615 = vmul.f32 %v2585, %v2594
  %v2616 = vmul.f32 %v2586, %v2592
  %v2617 = vmul.f32 %v2587, %v2593
  %v2618 = vmul.f32 %v2588, %v2594
  %v2619 = vadd.f32 %v2526, %v2598
  %v2620 = vadd.f32 %v2527, %v2599
  %v2621 = vadd.f32 %v2528, %v2600
  %v2622 = vadd.f32 %v2529, %v2601
  %v2623 = vadd.f32 %v2530, %v2602
  %v2624 = vadd.f32 %v2531, %v2603
  %v2625 = vadd.f32 %v2532, %v2604
  %v2626 = vadd.f32 %v2533, %v2605
  %v2627 = vadd.f32 %v2534, %v2606
  %v2628 = vadd.f32 %v2535, %v2607
  %v2629 = vadd.f32 %v2536, %v2608
  %v2630 = vadd.f32 %v2537, %v2609
  %v2631 = vadd.f32 %v2538, %v2610
  %v2632 = vadd.f32 %v2539, %v2611
  %v2633 = vadd.f32 %v2540, %v2612
  %v2634 = vadd.f32 %v2541, %v2613
  %v2635 = vadd.f32 %v2542, %v2614
  %v2636 = vadd.f32 %v2543, %v2615
  %v2637 = vadd.f32 %v2544, %v2616
  %v2638 = vadd.f32 %v2545, %v2617
  %v2639 = vadd.f32 %v2546, %v2618
  %v2640 = vld [vmem:[%s770 + $0x18] sm:$0xff]
  %v2641 = vld [vmem:[%s770 + $0x20] sm:$0xff]
  %v2642 = vld [vmem:[%s770 + $0x28] sm:$0xff]
  %v2643 = vld [vmem:[%s770 + $0x60] sm:$0xff]
  %v2644 = vld [vmem:[%s770 + $0x68] sm:$0xff]
  %v2645 = vld [vmem:[%s770 + $0x70] sm:$0xff]
  %v2646 = vld [vmem:[%s770 + $0xa8] sm:$0xff]
  %v2647 = vld [vmem:[%s770 + $0xb0] sm:$0xff]
  %v2648 = vld [vmem:[%s770 + $0xb8] sm:$0xff]
  %v2649 = vld [vmem:[%s770 + $0xf0] sm:$0xff]
  %v2650 = vld [vmem:[%s770 + $0xf8] sm:$0xff]
  %v2651 = vld [vmem:[%s770 + $0x100] sm:$0xff]
  %v2652 = vld [vmem:[%s770 + $0x138] sm:$0xff]
  %v2653 = vld [vmem:[%s770 + $0x140] sm:$0xff]
  %v2654 = vld [vmem:[%s770 + $0x148] sm:$0xff]
  %v2655 = vld [vmem:[%s770 + $0x180] sm:$0xff]
  %v2656 = vld [vmem:[%s770 + $0x188] sm:$0xff]
  %v2657 = vld [vmem:[%s770 + $0x190] sm:$0xff]
  %v2658 = vld [vmem:[%s770 + $0x1c8] sm:$0x1]
  %v2659 = vld [vmem:[%s770 + $0x1d0] sm:$0x1]
  %v2660 = vld [vmem:[%s770 + $0x1d8] sm:$0x1]
  %v2661 = vmax.f32 %v2640, 0.0
  %v2662 = vmax.f32 %v2641, 0.0
  %v2663 = vmax.f32 %v2642, 0.0
  %v2664 = vmax.f32 %v2643, 0.0
  %v2665 = vmax.f32 %v2644, 0.0
  %v2666 = vmax.f32 %v2645, 0.0
  %v2667 = vmax.f32 %v2646, 0.0
  %v2668 = vmax.f32 %v2647, 0.0
  %v2669 = vmax.f32 %v2648, 0.0
  %v2670 = vmax.f32 %v2649, 0.0
  %v2671 = vmax.f32 %v2650, 0.0
  %v2672 = vmax.f32 %v2651, 0.0
  %v2673 = vmax.f32 %v2652, 0.0
  %v2674 = vmax.f32 %v2653, 0.0
  %v2675 = vmax.f32 %v2654, 0.0
  %v2676 = vmax.f32 %v2655, 0.0
  %v2677 = vmax.f32 %v2656, 0.0
  %v2678 = vmax.f32 %v2657, 0.0
  %v2679 = vmax.f32 %v2658, 0.0
  %v2680 = vmax.f32 %v2659, 0.0
  %v2681 = vmax.f32 %v2660, 0.0
  %s2682 = scalar_lea.vmem %s1, 96
  %v2683 = vld [vmem:[%s2682] ss:$8 sm:$0x7]
  %v2685 = vperm.slane %v2683, 0
  %v2686 = vperm.slane %v2683, 1
  %v2687 = vperm.slane %v2683, 2
  %v2691 = vmul.f32 %v2661, %v2685
  %v2692 = vmul.f32 %v2662, %v2686
  %v2693 = vmul.f32 %v2663, %v2687
  %v2694 = vmul.f32 %v2664, %v2685
  %v2695 = vmul.f32 %v2665, %v2686
  %v2696 = vmul.f32 %v2666, %v2687
  %v2697 = vmul.f32 %v2667, %v2685
  %v2698 = vmul.f32 %v2668, %v2686
  %v2699 = vmul.f32 %v2669, %v2687
  %v2700 = vmul.f32 %v2670, %v2685
  %v2701 = vmul.f32 %v2671, %v2686
  %v2702 = vmul.f32 %v2672, %v2687
  %v2703 = vmul.f32 %v2673, %v2685
  %v2704 = vmul.f32 %v2674, %v2686
  %v2705 = vmul.f32 %v2675, %v2687
  %v2706 = vmul.f32 %v2676, %v2685
  %v2707 = vmul.f32 %v2677, %v2686
  %v2708 = vmul.f32 %v2678, %v2687
  %v2709 = vmul.f32 %v2679, %v2685
  %v2710 = vmul.f32 %v2680, %v2686
  %v2711 = vmul.f32 %v2681, %v2687
  %v2712 = vadd.f32 %v2619, %v2691
  %v2713 = vadd.f32 %v2620, %v2692
  %v2714 = vadd.f32 %v2621, %v2693
  %v2715 = vadd.f32 %v2622, %v2694
  %v2716 = vadd.f32 %v2623, %v2695
  %v2717 = vadd.f32 %v2624, %v2696
  %v2718 = vadd.f32 %v2625, %v2697
  %v2719 = vadd.f32 %v2626, %v2698
  %v2720 = vadd.f32 %v2627, %v2699
  %v2721 = vadd.f32 %v2628, %v2700
  %v2722 = vadd.f32 %v2629, %v2701
  %v2723 = vadd.f32 %v2630, %v2702
  %v2724 = vadd.f32 %v2631, %v2703
  %v2725 = vadd.f32 %v2632, %v2704
  %v2726 = vadd.f32 %v2633, %v2705
  %v2727 = vadd.f32 %v2634, %v2706
  %v2728 = vadd.f32 %v2635, %v2707
  %v2729 = vadd.f32 %v2636, %v2708
  %v2730 = vadd.f32 %v2637, %v2709
  %v2731 = vadd.f32 %v2638, %v2710
  %v2732 = vadd.f32 %v2639, %v2711
  %v2733 = vadd.f32 %v2712, %v2715
  %v2734 = vadd.f32 %v2733, %v2718
  %v2735 = vadd.f32 %v2734, %v2721
  %v2736 = vadd.f32 %v2735, %v2724
  %v2737 = vadd.f32 %v2736, %v2727
  %v2738 = vsel %vm869, %v2730, 0.0
  %v2739 = vadd.f32 %v2737, %v2738
  %v2740 = vrot.slane %v2739, 4
  %v2741 = vadd.f32 %v2739, %v2740
  %v2742 = vrot.slane %v2741, 2
  %v2743 = vadd.f32 %v2741, %v2742
  %v2744 = vrot.slane %v2743, 1
  %v2745 = vadd.f32 %v2743, %v2744
  %v2746 = vadd.f32 %v2713, %v2716
  %v2747 = vadd.f32 %v2746, %v2719
  %v2748 = vadd.f32 %v2747, %v2722
  %v2749 = vadd.f32 %v2748, %v2725
  %v2750 = vadd.f32 %v2749, %v2728
  %v2751 = vsel %vm869, %v2731, 0.0
  %v2752 = vadd.f32 %v2750, %v2751
  %v2753 = vrot.slane %v2752, 4
  %v2754 = vadd.f32 %v2752, %v2753
  %v2755 = vrot.slane %v2754, 2
  %v2756 = vadd.f32 %v2754, %v2755
  %v2757 = vrot.slane %v2756, 1
  %v2758 = vadd.f32 %v2756, %v2757
  %v2759 = vadd.f32 %v2714, %v2717
  %v2760 = vadd.f32 %v2759, %v2720
  %v2761 = vadd.f32 %v2760, %v2723
  %v2762 = vadd.f32 %v2761, %v2726
  %v2763 = vadd.f32 %v2762, %v2729
  %v2764 = vsel %vm869, %v2732, 0.0
  %v2765 = vadd.f32 %v2763, %v2764
  %v2766 = vrot.slane %v2765, 4
  %v2767 = vadd.f32 %v2765, %v2766
  %v2768 = vrot.slane %v2767, 2
  %v2769 = vadd.f32 %v2767, %v2768
  %v2770 = vrot.slane %v2769, 1
  %v2771 = vadd.f32 %v2769, %v2770
  %v2772 = vmul.f32 %v2745, %v910
  %v2773 = vmul.f32 %v2758, %v910
  %v2774 = vmul.f32 %v2771, %v910
  %v2775 = vsub.f32 %v2712, %v2772
  %v2776 = vsub.f32 %v2713, %v2773
  %v2777 = vsub.f32 %v2714, %v2774
  %v2778 = vsub.f32 %v2715, %v2772
  %v2779 = vsub.f32 %v2716, %v2773
  %v2780 = vsub.f32 %v2717, %v2774
  %v2781 = vsub.f32 %v2718, %v2772
  %v2782 = vsub.f32 %v2719, %v2773
  %v2783 = vsub.f32 %v2720, %v2774
  %v2784 = vsub.f32 %v2721, %v2772
  %v2785 = vsub.f32 %v2722, %v2773
  %v2786 = vsub.f32 %v2723, %v2774
  %v2787 = vsub.f32 %v2724, %v2772
  %v2788 = vsub.f32 %v2725, %v2773
  %v2789 = vsub.f32 %v2726, %v2774
  %v2790 = vsub.f32 %v2727, %v2772
  %v2791 = vsub.f32 %v2728, %v2773
  %v2792 = vsub.f32 %v2729, %v2774
  %v2793 = vsub.f32 %v2730, %v2772
  %v2794 = vsub.f32 %v2731, %v2773
  %v2795 = vsub.f32 %v2732, %v2774
  %v2796 = vmul.f32 %v2775, %v2775
  %v2797 = vmul.f32 %v2776, %v2776
  %v2798 = vmul.f32 %v2777, %v2777
  %v2799 = vmul.f32 %v2778, %v2778
  %v2800 = vmul.f32 %v2779, %v2779
  %v2801 = vmul.f32 %v2780, %v2780
  %v2802 = vmul.f32 %v2781, %v2781
  %v2803 = vmul.f32 %v2782, %v2782
  %v2804 = vmul.f32 %v2783, %v2783
  %v2805 = vmul.f32 %v2784, %v2784
  %v2806 = vmul.f32 %v2785, %v2785
  %v2807 = vmul.f32 %v2786, %v2786
  %v2808 = vmul.f32 %v2787, %v2787
  %v2809 = vmul.f32 %v2788, %v2788
  %v2810 = vmul.f32 %v2789, %v2789
  %v2811 = vmul.f32 %v2790, %v2790
  %v2812 = vmul.f32 %v2791, %v2791
  %v2813 = vmul.f32 %v2792, %v2792
  %v2814 = vmul.f32 %v2793, %v2793
  %v2815 = vmul.f32 %v2794, %v2794
  %v2816 = vmul.f32 %v2795, %v2795
  %v2817 = vadd.f32 %v2796, %v2799
  %v2818 = vadd.f32 %v2817, %v2802
  %v2819 = vadd.f32 %v2818, %v2805
  %v2820 = vadd.f32 %v2819, %v2808
  %v2821 = vadd.f32 %v2820, %v2811
  %v2822 = vsel %vm869, %v2814, 0.0
  %v2823 = vadd.f32 %v2821, %v2822
  %v2824 = vrot.slane %v2823, 4
  %v2825 = vadd.f32 %v2823, %v2824
  %v2826 = vrot.slane %v2825, 2
  %v2827 = vadd.f32 %v2825, %v2826
  %v2828 = vrot.slane %v2827, 1
  %v2829 = vadd.f32 %v2827, %v2828
  %v2830 = vadd.f32 %v2797, %v2800
  %v2831 = vadd.f32 %v2830, %v2803
  %v2832 = vadd.f32 %v2831, %v2806
  %v2833 = vadd.f32 %v2832, %v2809
  %v2834 = vadd.f32 %v2833, %v2812
  %v2835 = vsel %vm869, %v2815, 0.0
  %v2836 = vadd.f32 %v2834, %v2835
  %v2837 = vrot.slane %v2836, 4
  %v2838 = vadd.f32 %v2836, %v2837
  %v2839 = vrot.slane %v2838, 2
  %v2840 = vadd.f32 %v2838, %v2839
  %v2841 = vrot.slane %v2840, 1
  %v2842 = vadd.f32 %v2840, %v2841
  %v2843 = vadd.f32 %v2798, %v2801
  %v2844 = vadd.f32 %v2843, %v2804
  %v2845 = vadd.f32 %v2844, %v2807
  %v2846 = vadd.f32 %v2845, %v2810
  %v2847 = vadd.f32 %v2846, %v2813
  %v2848 = vsel %vm869, %v2816, 0.0
  %v2849 = vadd.f32 %v2847, %v2848
  %v2850 = vrot.slane %v2849, 4
  %v2851 = vadd.f32 %v2849, %v2850
  %v2852 = vrot.slane %v2851, 2
  %v2853 = vadd.f32 %v2851, %v2852
  %v2854 = vrot.slane %v2853, 1
  %v2855 = vadd.f32 %v2853, %v2854
  %v2856 = vmul.f32 %v2829, %v910
  %v2857 = vmul.f32 %v2842, %v910
  %v2858 = vmul.f32 %v2855, %v910
  %v2859 = vadd.f32 %v2856, 1e-05
  %v2860 = vadd.f32 %v2857, 1e-05
  %v2861 = vadd.f32 %v2858, 1e-05
  %v2862 = vrsqrt.pop %v2859
  %v2863 = vmul.f32 %v2862, %v2859
  %v2864 = vmul.f32 %v2863, %v2862
  %v2865 = vmul.f32 0.5, %v2864
  %v2866 = vsub.f32 1.5, %v2865
  %v2867 = vmul.f32 %v2862, %v2866
  %vm2868 = vweird.f32 %v2859
  %vm2869 = vweird.f32 %v2862
  %vm2870 = vmor %vm2868, %vm2869
  %v2871 = vsel %vm2870, %v2862, %v2867
  %v2872 = vrsqrt.pop %v2860
  %v2873 = vmul.f32 %v2872, %v2860
  %v2874 = vmul.f32 %v2873, %v2872
  %v2875 = vmul.f32 0.5, %v2874
  %v2876 = vsub.f32 1.5, %v2875
  %v2877 = vmul.f32 %v2872, %v2876
  %vm2878 = vweird.f32 %v2860
  %vm2879 = vweird.f32 %v2872
  %vm2880 = vmor %vm2878, %vm2879
  %v2881 = vsel %vm2880, %v2872, %v2877
  %v2882 = vrsqrt.pop %v2861
  %v2883 = vmul.f32 %v2882, %v2861
  %v2884 = vmul.f32 %v2883, %v2882
  %v2885 = vmul.f32 0.5, %v2884
  %v2886 = vsub.f32 1.5, %v2885
  %v2887 = vmul.f32 %v2882, %v2886
  %vm2888 = vweird.f32 %v2861
  %vm2889 = vweird.f32 %v2882
  %vm2890 = vmor %vm2888, %vm2889
  %v2891 = vsel %vm2890, %v2882, %v2887
  %v2892 = vmul.f32 %v2775, %v2871
  %v2893 = vmul.f32 %v2776, %v2881
  %v2894 = vmul.f32 %v2777, %v2891
  %v2895 = vmul.f32 %v2778, %v2871
  %v2896 = vmul.f32 %v2779, %v2881
  %v2897 = vmul.f32 %v2780, %v2891
  %v2898 = vmul.f32 %v2781, %v2871
  %v2899 = vmul.f32 %v2782, %v2881
  %v2900 = vmul.f32 %v2783, %v2891
  %v2901 = vmul.f32 %v2784, %v2871
  %v2902 = vmul.f32 %v2785, %v2881
  %v2903 = vmul.f32 %v2786, %v2891
  %v2904 = vmul.f32 %v2787, %v2871
  %v2905 = vmul.f32 %v2788, %v2881
  %v2906 = vmul.f32 %v2789, %v2891
  %v2907 = vmul.f32 %v2790, %v2871
  %v2908 = vmul.f32 %v2791, %v2881
  %v2909 = vmul.f32 %v2792, %v2891
  %v2910 = vmul.f32 %v2793, %v2871
  %v2911 = vmul.f32 %v2794, %v2881
  %v2912 = vmul.f32 %v2795, %v2891
  %v2913 = vld [vmem:[%s2 + $0x3] sm:$0x7]
  %v2915 = vperm.slane %v2913, 0
  %v2916 = vperm.slane %v2913, 1
  %v2917 = vperm.slane %v2913, 2
  %v2921 = vmul.f32 %v2892, %v2915
  %v2922 = vmul.f32 %v2893, %v2916
  %v2923 = vmul.f32 %v2894, %v2917
  %v2924 = vmul.f32 %v2895, %v2915
  %v2925 = vmul.f32 %v2896, %v2916
  %v2926 = vmul.f32 %v2897, %v2917
  %v2927 = vmul.f32 %v2898, %v2915
  %v2928 = vmul.f32 %v2899, %v2916
  %v2929 = vmul.f32 %v2900, %v2917
  %v2930 = vmul.f32 %v2901, %v2915
  %v2931 = vmul.f32 %v2902, %v2916
  %v2932 = vmul.f32 %v2903, %v2917
  %v2933 = vmul.f32 %v2904, %v2915
  %v2934 = vmul.f32 %v2905, %v2916
  %v2935 = vmul.f32 %v2906, %v2917
  %v2936 = vmul.f32 %v2907, %v2915
  %v2937 = vmul.f32 %v2908, %v2916
  %v2938 = vmul.f32 %v2909, %v2917
  %v2939 = vmul.f32 %v2910, %v2915
  %v2940 = vmul.f32 %v2911, %v2916
  %v2941 = vmul.f32 %v2912, %v2917
  %v2942 = vld [vmem:[%s3 + $0x3] sm:$0x7]
  %v2944 = vperm.slane %v2942, 0
  %v2945 = vperm.slane %v2942, 1
  %v2946 = vperm.slane %v2942, 2
  %v2950 = vadd.f32 %v2921, %v2944
  %v2951 = vadd.f32 %v2922, %v2945
  %v2952 = vadd.f32 %v2923, %v2946
  %v2953 = vadd.f32 %v2924, %v2944
  %v2954 = vadd.f32 %v2925, %v2945
  %v2955 = vadd.f32 %v2926, %v2946
  %v2956 = vadd.f32 %v2927, %v2944
  %v2957 = vadd.f32 %v2928, %v2945
  %v2958 = vadd.f32 %v2929, %v2946
  %v2959 = vadd.f32 %v2930, %v2944
  %v2960 = vadd.f32 %v2931, %v2945
  %v2961 = vadd.f32 %v2932, %v2946
  %v2962 = vadd.f32 %v2933, %v2944
  %v2963 = vadd.f32 %v2934, %v2945
  %v2964 = vadd.f32 %v2935, %v2946
  %v2965 = vadd.f32 %v2936, %v2944
  %v2966 = vadd.f32 %v2937, %v2945
  %v2967 = vadd.f32 %v2938, %v2946
  %v2968 = vadd.f32 %v2939, %v2944
  %v2969 = vadd.f32 %v2940, %v2945
  %v2970 = vadd.f32 %v2941, %v2946
  %v2971 = vmax.f32 %v2950, 0.0
  %v2972 = vmax.f32 %v2951, 0.0
  %v2973 = vmax.f32 %v2952, 0.0
  %v2974 = vmax.f32 %v2953, 0.0
  %v2975 = vmax.f32 %v2954, 0.0
  %v2976 = vmax.f32 %v2955, 0.0
  %v2977 = vmax.f32 %v2956, 0.0
  %v2978 = vmax.f32 %v2957, 0.0
  %v2979 = vmax.f32 %v2958, 0.0
  %v2980 = vmax.f32 %v2959, 0.0
  %v2981 = vmax.f32 %v2960, 0.0
  %v2982 = vmax.f32 %v2961, 0.0
  %v2983 = vmax.f32 %v2962, 0.0
  %v2984 = vmax.f32 %v2963, 0.0
  %v2985 = vmax.f32 %v2964, 0.0
  %v2986 = vmax.f32 %v2965, 0.0
  %v2987 = vmax.f32 %v2966, 0.0
  %v2988 = vmax.f32 %v2967, 0.0
  %v2989 = vmax.f32 %v2968, 0.0
  %v2990 = vmax.f32 %v2969, 0.0
  %v2991 = vmax.f32 %v2970, 0.0
  %v2992 = vpack.c.bf16 %v2974, %v2971
  %v2993 = vpack.c.bf16 %v2975, %v2972
  %v2994 = vpack.c.bf16 %v2976, %v2973
  %v2995 = vpack.c.bf16 %v2980, %v2977
  %v2996 = vpack.c.bf16 %v2981, %v2978
  %v2997 = vpack.c.bf16 %v2982, %v2979
  %v2998 = vpack.c.bf16 %v2986, %v2983
  %v2999 = vpack.c.bf16 %v2987, %v2984
  %v3000 = vpack.c.bf16 %v2988, %v2985
  %v3001 = vpack.c.bf16 %v2989, %v2989
  %v3002 = vpack.c.bf16 %v2990, %v2990
  %v3003 = vpack.c.bf16 %v2991, %v2991
  %v3004 = vld [vmem:[%s4 + $0x240] sm:$0xff]
  %v3005 = vld [vmem:[%s4 + $0x248] sm:$0xf]
  %v3006 = vld [vmem:[%s4 + $0x24c] sm:$0xff]
  %v3007 = vld [vmem:[%s4 + $0x254] sm:$0xf]
  %v3008 = vld [vmem:[%s4 + $0x258] sm:$0xff]
  %v3009 = vld [vmem:[%s4 + $0x260] sm:$0xf]
  %v3010 = vld [vmem:[%s4 + $0x264] sm:$0xff]
  %v3011 = vld [vmem:[%s4 + $0x26c] sm:$0xf]
  %v3012 = vld [vmem:[%s4 + $0x270] sm:$0xff]
  %v3013 = vld [vmem:[%s4 + $0x278] sm:$0xf]
  %v3014 = vld [vmem:[%s4 + $0x27c] sm:$0xff]
  %v3015 = vld [vmem:[%s4 + $0x284] sm:$0xf]
  %v3016 = vld [vmem:[%s4 + $0x288] sm:$0xff]
  %v3017 = vld [vmem:[%s4 + $0x290] sm:$0xf]
  %v3018 = vld [vmem:[%s4 + $0x294] sm:$0xff]
  %v3019 = vld [vmem:[%s4 + $0x29c] sm:$0xf]
  %v3020 = vld [vmem:[%s4 + $0x2a0] sm:$0xff]
  %v3021 = vld [vmem:[%s4 + $0x2a8] sm:$0xf]
  %v3022 = vld [vmem:[%s4 + $0x2ac] sm:$0xff]
  %v3023 = vld [vmem:[%s4 + $0x2b4] sm:$0xf]
  %v3024 = vld [vmem:[%s4 + $0x2b8] sm:$0xff]
  %v3025 = vld [vmem:[%s4 + $0x2c0] sm:$0xf]
  %v3026 = vld [vmem:[%s4 + $0x2c4] sm:$0xff]
  %v3027 = vld [vmem:[%s4 + $0x2cc] sm:$0xf]
  %v3028 = vld [vmem:[%s4 + $0x2d0] sm:$0xff]
  %v3029 = vld [vmem:[%s4 + $0x2d8] sm:$0xf]
  %v3030 = vld [vmem:[%s4 + $0x2dc] sm:$0xff]
  %v3031 = vld [vmem:[%s4 + $0x2e4] sm:$0xf]
  %v3032 = vld [vmem:[%s4 + $0x2e8] sm:$0xff]
  %v3033 = vld [vmem:[%s4 + $0x2f0] sm:$0xf]
  %v3034 = vld [vmem:[%s4 + $0x2f4] sm:$0xff]
  %v3035 = vld [vmem:[%s4 + $0x2fc] sm:$0xf]
  %v3036 = vld [vmem:[%s4 + $0x300] sm:$0xff]
  %v3037 = vld [vmem:[%s4 + $0x308] sm:$0xf]
  %v3038 = vld [vmem:[%s4 + $0x30c] sm:$0xff]
  %v3039 = vld [vmem:[%s4 + $0x314] sm:$0xf]
  %v3040 = vld [vmem:[%s4 + $0x318] sm:$0xff]
  %v3041 = vld [vmem:[%s4 + $0x320] sm:$0xf]
  %v3042 = vld [vmem:[%s4 + $0x324] sm:$0xff]
  %v3043 = vld [vmem:[%s4 + $0x32c] sm:$0xf]
  %v3044 = vld [vmem:[%s4 + $0x330] sm:$0xff]
  %v3045 = vld [vmem:[%s4 + $0x338] sm:$0xf]
  %v3046 = vld [vmem:[%s4 + $0x33c] sm:$0xff]
  %v3047 = vld [vmem:[%s4 + $0x344] sm:$0xf]
  %v3048 = vld [vmem:[%s4 + $0x348] sm:$0xff]
  %v3049 = vld [vmem:[%s4 + $0x350] sm:$0xf]
  %v3050 = vld [vmem:[%s4 + $0x354] sm:$0xff]
  %v3051 = vld [vmem:[%s4 + $0x35c] sm:$0xf]
  %v3052 = vld [vmem:[%s4 + $0x360] sm:$0xff]
  %v3053 = vld [vmem:[%s4 + $0x368] sm:$0xf]
  %v3054 = vld [vmem:[%s4 + $0x36c] sm:$0xff]
  %v3055 = vld [vmem:[%s4 + $0x374] sm:$0xf]
  %v3056 = vld [vmem:[%s4 + $0x378] sm:$0xff]
  %v3057 = vld [vmem:[%s4 + $0x380] sm:$0xf]
  %v3058 = vld [vmem:[%s4 + $0x384] sm:$0xff]
  %v3059 = vld [vmem:[%s4 + $0x38c] sm:$0xf]
  %v3060 = vld [vmem:[%s4 + $0x390] sm:$0xff]
  %v3061 = vld [vmem:[%s4 + $0x398] sm:$0xf]
  %v3062 = vld [vmem:[%s4 + $0x39c] sm:$0xff]
  %v3063 = vld [vmem:[%s4 + $0x3a4] sm:$0xf]
  %v3064 = vld [vmem:[%s4 + $0x3a8] sm:$0xff]
  %v3065 = vld [vmem:[%s4 + $0x3b0] sm:$0xf]
  %v3066 = vld [vmem:[%s4 + $0x3b4] sm:$0xff]
  %v3067 = vld [vmem:[%s4 + $0x3bc] sm:$0xf]
  %v3068 = vld [vmem:[%s4 + $0x3c0] sm:$0xff]
  %v3069 = vld [vmem:[%s4 + $0x3c8] sm:$0xf]
  %v3070 = vld [vmem:[%s4 + $0x3cc] sm:$0xff]
  %v3071 = vld [vmem:[%s4 + $0x3d4] sm:$0xf]
  %v3072 = vld [vmem:[%s4 + $0x3d8] sm:$0xff]
  %v3073 = vld [vmem:[%s4 + $0x3e0] sm:$0xf]
  %v3074 = vld [vmem:[%s4 + $0x3e4] sm:$0xff]
  %v3075 = vld [vmem:[%s4 + $0x3ec] sm:$0xf]
  %v3076 = vld [vmem:[%s4 + $0x3f0] sm:$0xff]
  %v3077 = vld [vmem:[%s4 + $0x3f8] sm:$0xf]
  %v3078 = vld [vmem:[%s4 + $0x3fc] sm:$0xff]
  %v3079 = vld [vmem:[%s4 + $0x404] sm:$0xf]
  %v3080 = vld [vmem:[%s4 + $0x408] sm:$0xff]
  %v3081 = vld [vmem:[%s4 + $0x410] sm:$0xf]
  %v3082 = vld [vmem:[%s4 + $0x414] sm:$0xff]
  %v3083 = vld [vmem:[%s4 + $0x41c] sm:$0xf]
  %v3084 = vld [vmem:[%s4 + $0x420] sm:$0xff]
  %v3085 = vld [vmem:[%s4 + $0x428] sm:$0xf]
  %v3086 = vld [vmem:[%s4 + $0x42c] sm:$0xff]
  %v3087 = vld [vmem:[%s4 + $0x434] sm:$0xf]
  %v3088 = vld [vmem:[%s4 + $0x438] sm:$0xff]
  %v3089 = vld [vmem:[%s4 + $0x440] sm:$0xf]
  %v3090 = vld [vmem:[%s4 + $0x444] sm:$0xff]
  %v3091 = vld [vmem:[%s4 + $0x44c] sm:$0xf]
  %v3092 = vld [vmem:[%s4 + $0x450] sm:$0xff]
  %v3093 = vld [vmem:[%s4 + $0x458] sm:$0xf]
  %v3094 = vld [vmem:[%s4 + $0x45c] sm:$0xff]
  %v3095 = vld [vmem:[%s4 + $0x464] sm:$0xf]
  %v3096 = vld [vmem:[%s4 + $0x468] sm:$0xff]
  %v3097 = vld [vmem:[%s4 + $0x470] sm:$0xf]
  %v3098 = vld [vmem:[%s4 + $0x474] sm:$0xff]
  %v3099 = vld [vmem:[%s4 + $0x47c] sm:$0xf]
  %v3196 = vunpack.c.l.b16 %v3004
  %v3197 = vunpack.c.h.b16 %v3004
  %v3198 = vunpack.c.l.b16 %v3005
  %v3199 = vunpack.c.l.b16 %v3006
  %v3200 = vunpack.c.h.b16 %v3006
  %v3201 = vunpack.c.l.b16 %v3007
  %v3202 = vunpack.c.l.b16 %v3008
  %v3203 = vunpack.c.h.b16 %v3008
  %v3204 = vunpack.c.l.b16 %v3009
  %v3205 = vunpack.c.l.b16 %v3010
  %v3206 = vunpack.c.h.b16 %v3010
  %v3207 = vunpack.c.l.b16 %v3011
  %v3208 = vunpack.c.l.b16 %v3012
  %v3209 = vunpack.c.h.b16 %v3012
  %v3210 = vunpack.c.l.b16 %v3013
  %v3211 = vunpack.c.l.b16 %v3014
  %v3212 = vunpack.c.h.b16 %v3014
  %v3213 = vunpack.c.l.b16 %v3015
  %v3214 = vunpack.c.l.b16 %v3016
  %v3215 = vunpack.c.h.b16 %v3016
  %v3216 = vunpack.c.l.b16 %v3017
  %v3217 = vunpack.c.l.b16 %v3018
  %v3218 = vunpack.c.h.b16 %v3018
  %v3219 = vunpack.c.l.b16 %v3019
  %v3220 = vunpack.c.l.b16 %v3020
  %v3221 = vunpack.c.h.b16 %v3020
  %v3222 = vunpack.c.l.b16 %v3021
  %v3223 = vunpack.c.l.b16 %v3022
  %v3224 = vunpack.c.h.b16 %v3022
  %v3225 = vunpack.c.l.b16 %v3023
  %v3226 = vunpack.c.l.b16 %v3024
  %v3227 = vunpack.c.h.b16 %v3024
  %v3228 = vunpack.c.l.b16 %v3025
  %v3229 = vunpack.c.l.b16 %v3026
  %v3230 = vunpack.c.h.b16 %v3026
  %v3231 = vunpack.c.l.b16 %v3027
  %v3232 = vunpack.c.l.b16 %v3028
  %v3233 = vunpack.c.h.b16 %v3028
  %v3234 = vunpack.c.l.b16 %v3029
  %v3235 = vunpack.c.l.b16 %v3030
  %v3236 = vunpack.c.h.b16 %v3030
  %v3237 = vunpack.c.l.b16 %v3031
  %v3238 = vunpack.c.l.b16 %v3032
  %v3239 = vunpack.c.h.b16 %v3032
  %v3240 = vunpack.c.l.b16 %v3033
  %v3241 = vunpack.c.l.b16 %v3034
  %v3242 = vunpack.c.h.b16 %v3034
  %v3243 = vunpack.c.l.b16 %v3035
  %v3244 = vunpack.c.l.b16 %v3036
  %v3245 = vunpack.c.h.b16 %v3036
  %v3246 = vunpack.c.l.b16 %v3037
  %v3247 = vunpack.c.l.b16 %v3038
  %v3248 = vunpack.c.h.b16 %v3038
  %v3249 = vunpack.c.l.b16 %v3039
  %v3250 = vunpack.c.l.b16 %v3040
  %v3251 = vunpack.c.h.b16 %v3040
  %v3252 = vunpack.c.l.b16 %v3041
  %v3253 = vunpack.c.l.b16 %v3042
  %v3254 = vunpack.c.h.b16 %v3042
  %v3255 = vunpack.c.l.b16 %v3043
  %v3256 = vunpack.c.l.b16 %v3044
  %v3257 = vunpack.c.h.b16 %v3044
  %v3258 = vunpack.c.l.b16 %v3045
  %v3259 = vunpack.c.l.b16 %v3046
  %v3260 = vunpack.c.h.b16 %v3046
  %v3261 = vunpack.c.l.b16 %v3047
  %v3262 = vunpack.c.l.b16 %v3048
  %v3263 = vunpack.c.h.b16 %v3048
  %v3264 = vunpack.c.l.b16 %v3049
  %v3265 = vunpack.c.l.b16 %v3050
  %v3266 = vunpack.c.h.b16 %v3050
  %v3267 = vunpack.c.l.b16 %v3051
  %v3268 = vunpack.c.l.b16 %v3052
  %v3269 = vunpack.c.h.b16 %v3052
  %v3270 = vunpack.c.l.b16 %v3053
  %v3271 = vunpack.c.l.b16 %v3054
  %v3272 = vunpack.c.h.b16 %v3054
  %v3273 = vunpack.c.l.b16 %v3055
  %v3274 = vunpack.c.l.b16 %v3056
  %v3275 = vunpack.c.h.b16 %v3056
  %v3276 = vunpack.c.l.b16 %v3057
  %v3277 = vunpack.c.l.b16 %v3058
  %v3278 = vunpack.c.h.b16 %v3058
  %v3279 = vunpack.c.l.b16 %v3059
  %v3280 = vunpack.c.l.b16 %v3060
  %v3281 = vunpack.c.h.b16 %v3060
  %v3282 = vunpack.c.l.b16 %v3061
  %v3283 = vunpack.c.l.b16 %v3062
  %v3284 = vunpack.c.h.b16 %v3062
  %v3285 = vunpack.c.l.b16 %v3063
  %v3286 = vunpack.c.l.b16 %v3064
  %v3287 = vunpack.c.h.b16 %v3064
  %v3288 = vunpack.c.l.b16 %v3065
  %v3289 = vunpack.c.l.b16 %v3066
  %v3290 = vunpack.c.h.b16 %v3066
  %v3291 = vunpack.c.l.b16 %v3067
  %v3292 = vunpack.c.l.b16 %v3068
  %v3293 = vunpack.c.h.b16 %v3068
  %v3294 = vunpack.c.l.b16 %v3069
  %v3295 = vunpack.c.l.b16 %v3070
  %v3296 = vunpack.c.h.b16 %v3070
  %v3297 = vunpack.c.l.b16 %v3071
  %v3298 = vunpack.c.l.b16 %v3072
  %v3299 = vunpack.c.h.b16 %v3072
  %v3300 = vunpack.c.l.b16 %v3073
  %v3301 = vunpack.c.l.b16 %v3074
  %v3302 = vunpack.c.h.b16 %v3074
  %v3303 = vunpack.c.l.b16 %v3075
  %v3304 = vunpack.c.l.b16 %v3076
  %v3305 = vunpack.c.h.b16 %v3076
  %v3306 = vunpack.c.l.b16 %v3077
  %v3307 = vunpack.c.l.b16 %v3078
  %v3308 = vunpack.c.h.b16 %v3078
  %v3309 = vunpack.c.l.b16 %v3079
  %v3310 = vunpack.c.l.b16 %v3080
  %v3311 = vunpack.c.h.b16 %v3080
  %v3312 = vunpack.c.l.b16 %v3081
  %v3313 = vunpack.c.l.b16 %v3082
  %v3314 = vunpack.c.h.b16 %v3082
  %v3315 = vunpack.c.l.b16 %v3083
  %v3316 = vunpack.c.l.b16 %v3084
  %v3317 = vunpack.c.h.b16 %v3084
  %v3318 = vunpack.c.l.b16 %v3085
  %v3319 = vunpack.c.l.b16 %v3086
  %v3320 = vunpack.c.h.b16 %v3086
  %v3321 = vunpack.c.l.b16 %v3087
  %v3322 = vunpack.c.l.b16 %v3088
  %v3323 = vunpack.c.h.b16 %v3088
  %v3324 = vunpack.c.l.b16 %v3089
  %v3325 = vunpack.c.l.b16 %v3090
  %v3326 = vunpack.c.h.b16 %v3090
  %v3327 = vunpack.c.l.b16 %v3091
  %v3328 = vunpack.c.l.b16 %v3092
  %v3329 = vunpack.c.h.b16 %v3092
  %v3330 = vunpack.c.l.b16 %v3093
  %v3331 = vunpack.c.l.b16 %v3094
  %v3332 = vunpack.c.h.b16 %v3094
  %v3333 = vunpack.c.l.b16 %v3095
  %v3334 = vunpack.c.l.b16 %v3096
  %v3335 = vunpack.c.h.b16 %v3096
  %v3336 = vunpack.c.l.b16 %v3097
  %v3337 = vunpack.c.l.b16 %v3098
  %v3338 = vunpack.c.h.b16 %v3098
  %v3339 = vunpack.c.l.b16 %v3099
  %v3340 = vpack.c.b16 %v3199, %v3196
  %v3341 = vpack.c.b16 %v3200, %v3197
  %v3342 = vpack.c.b16 %v3201, %v3198
  %v3343 = vpack.c.b16 %v3205, %v3202
  %v3344 = vpack.c.b16 %v3206, %v3203
  %v3345 = vpack.c.b16 %v3207, %v3204
  %v3346 = vpack.c.b16 %v3211, %v3208
  %v3347 = vpack.c.b16 %v3212, %v3209
  %v3348 = vpack.c.b16 %v3213, %v3210
  %v3349 = vpack.c.b16 %v3217, %v3214
  %v3350 = vpack.c.b16 %v3218, %v3215
  %v3351 = vpack.c.b16 %v3219, %v3216
  %v3352 = vpack.c.b16 %v3223, %v3220
  %v3353 = vpack.c.b16 %v3224, %v3221
  %v3354 = vpack.c.b16 %v3225, %v3222
  %v3355 = vpack.c.b16 %v3229, %v3226
  %v3356 = vpack.c.b16 %v3230, %v3227
  %v3357 = vpack.c.b16 %v3231, %v3228
  %v3358 = vpack.c.b16 %v3235, %v3232
  %v3359 = vpack.c.b16 %v3236, %v3233
  %v3360 = vpack.c.b16 %v3237, %v3234
  %v3361 = vpack.c.b16 %v3241, %v3238
  %v3362 = vpack.c.b16 %v3242, %v3239
  %v3363 = vpack.c.b16 %v3243, %v3240
  %v3364 = vpack.c.b16 %v3247, %v3244
  %v3365 = vpack.c.b16 %v3248, %v3245
  %v3366 = vpack.c.b16 %v3249, %v3246
  %v3367 = vpack.c.b16 %v3253, %v3250
  %v3368 = vpack.c.b16 %v3254, %v3251
  %v3369 = vpack.c.b16 %v3255, %v3252
  %v3370 = vpack.c.b16 %v3259, %v3256
  %v3371 = vpack.c.b16 %v3260, %v3257
  %v3372 = vpack.c.b16 %v3261, %v3258
  %v3373 = vpack.c.b16 %v3265, %v3262
  %v3374 = vpack.c.b16 %v3266, %v3263
  %v3375 = vpack.c.b16 %v3267, %v3264
  %v3376 = vpack.c.b16 %v3271, %v3268
  %v3377 = vpack.c.b16 %v3272, %v3269
  %v3378 = vpack.c.b16 %v3273, %v3270
  %v3379 = vpack.c.b16 %v3277, %v3274
  %v3380 = vpack.c.b16 %v3278, %v3275
  %v3381 = vpack.c.b16 %v3279, %v3276
  %v3382 = vpack.c.b16 %v3283, %v3280
  %v3383 = vpack.c.b16 %v3284, %v3281
  %v3384 = vpack.c.b16 %v3285, %v3282
  %v3385 = vpack.c.b16 %v3289, %v3286
  %v3386 = vpack.c.b16 %v3290, %v3287
  %v3387 = vpack.c.b16 %v3291, %v3288
  %v3388 = vpack.c.b16 %v3295, %v3292
  %v3389 = vpack.c.b16 %v3296, %v3293
  %v3390 = vpack.c.b16 %v3297, %v3294
  %v3391 = vpack.c.b16 %v3301, %v3298
  %v3392 = vpack.c.b16 %v3302, %v3299
  %v3393 = vpack.c.b16 %v3303, %v3300
  %v3394 = vpack.c.b16 %v3307, %v3304
  %v3395 = vpack.c.b16 %v3308, %v3305
  %v3396 = vpack.c.b16 %v3309, %v3306
  %v3397 = vpack.c.b16 %v3313, %v3310
  %v3398 = vpack.c.b16 %v3314, %v3311
  %v3399 = vpack.c.b16 %v3315, %v3312
  %v3400 = vpack.c.b16 %v3319, %v3316
  %v3401 = vpack.c.b16 %v3320, %v3317
  %v3402 = vpack.c.b16 %v3321, %v3318
  %v3403 = vpack.c.b16 %v3325, %v3322
  %v3404 = vpack.c.b16 %v3326, %v3323
  %v3405 = vpack.c.b16 %v3327, %v3324
  %v3406 = vpack.c.b16 %v3331, %v3328
  %v3407 = vpack.c.b16 %v3332, %v3329
  %v3408 = vpack.c.b16 %v3333, %v3330
  %v3409 = vpack.c.b16 %v3337, %v3334
  %v3410 = vpack.c.b16 %v3338, %v3335
  %v3411 = vpack.c.b16 %v3339, %v3336
  %3484 = vmatpush.bf16.msra.mxu0 %v3361
  %3485 = vmatpush.bf16.msra.mxu0 %v3358
  %3486 = vmatpush.bf16.msra.mxu0 %v3355
  %3487 = vmatpush.bf16.msra.mxu0 %v3352
  %3488 = vmatpush.bf16.msra.mxu0 %v3349
  %3489 = vmatpush.bf16.msra.mxu0 %v3346
  %3490 = vmatpush.bf16.msra.mxu0 %v3343
  %3491 = vmatpush.bf16.msra.mxu0 %v3340
  %3492 = vmatmul.bf16.gmra.mxu0 %v2992
  %v3493 = vpop.f32.mrf.mxu0
  %v3494 = vadd.f32 0.0, %v3493
  %v3495 = vpop.f32.mrf.mxu0
  %v3496 = vadd.f32 0.0, %v3495
  %3497 = vmatmul.bf16.gmra.mxu0 %v2995
  %v3498 = vpop.f32.mrf.mxu0
  %v3499 = vadd.f32 0.0, %v3498
  %v3500 = vpop.f32.mrf.mxu0
  %v3501 = vadd.f32 0.0, %v3500
  %3502 = vmatmul.bf16.gmra.mxu0 %v2998
  %v3503 = vpop.f32.mrf.mxu0
  %v3504 = vadd.f32 0.0, %v3503
  %v3505 = vpop.f32.mrf.mxu0
  %v3506 = vadd.f32 0.0, %v3505
  %3507 = vmatmul.bf16.gmra.mxu0 %v3001
  %v3508 = vpop.f32.mrf.mxu0
  %v3509 = vadd.f32 0.0, %v3508
  %v3510 = vpop.f32.mrf.mxu0
  %3511 = vdwg.mxu0
  %3512 = vmatpush.bf16.msra.mxu0 %v3385
  %3513 = vmatpush.bf16.msra.mxu0 %v3382
  %3514 = vmatpush.bf16.msra.mxu0 %v3379
  %3515 = vmatpush.bf16.msra.mxu0 %v3376
  %3516 = vmatpush.bf16.msra.mxu0 %v3373
  %3517 = vmatpush.bf16.msra.mxu0 %v3370
  %3518 = vmatpush.bf16.msra.mxu0 %v3367
  %3519 = vmatpush.bf16.msra.mxu0 %v3364
  %3520 = vmatmul.bf16.gmra.mxu0 %v2993
  %v3521 = vpop.f32.mrf.mxu0
  %v3522 = vadd.f32 %v3494, %v3521
  %v3523 = vpop.f32.mrf.mxu0
  %v3524 = vadd.f32 %v3496, %v3523
  %3525 = vmatmul.bf16.gmra.mxu0 %v2996
  %v3526 = vpop.f32.mrf.mxu0
  %v3527 = vadd.f32 %v3499, %v3526
  %v3528 = vpop.f32.mrf.mxu0
  %v3529 = vadd.f32 %v3501, %v3528
  %3530 = vmatmul.bf16.gmra.mxu0 %v2999
  %v3531 = vpop.f32.mrf.mxu0
  %v3532 = vadd.f32 %v3504, %v3531
  %v3533 = vpop.f32.mrf.mxu0
  %v3534 = vadd.f32 %v3506, %v3533
  %3535 = vmatmul.bf16.gmra.mxu0 %v3002
  %v3536 = vpop.f32.mrf.mxu0
  %v3537 = vadd.f32 %v3509, %v3536
  %v3538 = vpop.f32.mrf.mxu0
  %3539 = vdwg.mxu0
  %3540 = vmatpush.bf16.msra.mxu0 %v3409
  %3541 = vmatpush.bf16.msra.mxu0 %v3406
  %3542 = vmatpush.bf16.msra.mxu0 %v3403
  %3543 = vmatpush.bf16.msra.mxu0 %v3400
  %3544 = vmatpush.bf16.msra.mxu0 %v3397
  %3545 = vmatpush.bf16.msra.mxu0 %v3394
  %3546 = vmatpush.bf16.msra.mxu0 %v3391
  %3547 = vmatpush.bf16.msra.mxu0 %v3388
  %3548 = vmatmul.bf16.gmra.mxu0 %v2994
  %v3549 = vpop.f32.mrf.mxu0
  %v3550 = vadd.f32 %v3522, %v3549
  %v3551 = vpop.f32.mrf.mxu0
  %v3552 = vadd.f32 %v3524, %v3551
  %3553 = vmatmul.bf16.gmra.mxu0 %v2997
  %v3554 = vpop.f32.mrf.mxu0
  %v3555 = vadd.f32 %v3527, %v3554
  %v3556 = vpop.f32.mrf.mxu0
  %v3557 = vadd.f32 %v3529, %v3556
  %3558 = vmatmul.bf16.gmra.mxu0 %v3000
  %v3559 = vpop.f32.mrf.mxu0
  %v3560 = vadd.f32 %v3532, %v3559
  %v3561 = vpop.f32.mrf.mxu0
  %v3562 = vadd.f32 %v3534, %v3561
  %3563 = vmatmul.bf16.gmra.mxu0 %v3003
  %v3564 = vpop.f32.mrf.mxu0
  %v3565 = vadd.f32 %v3537, %v3564
  %v3566 = vpop.f32.mrf.mxu0
  %3567 = vdwg.mxu0
  %3568 = vmatpush.bf16.msra.mxu0 %v3362
  %3569 = vmatpush.bf16.msra.mxu0 %v3359
  %3570 = vmatpush.bf16.msra.mxu0 %v3356
  %3571 = vmatpush.bf16.msra.mxu0 %v3353
  %3572 = vmatpush.bf16.msra.mxu0 %v3350
  %3573 = vmatpush.bf16.msra.mxu0 %v3347
  %3574 = vmatpush.bf16.msra.mxu0 %v3344
  %3575 = vmatpush.bf16.msra.mxu0 %v3341
  %3576 = vmatmul.bf16.gmra.mxu0 %v2992
  %v3577 = vpop.f32.mrf.mxu0
  %v3578 = vadd.f32 0.0, %v3577
  %v3579 = vpop.f32.mrf.mxu0
  %v3580 = vadd.f32 0.0, %v3579
  %3581 = vmatmul.bf16.gmra.mxu0 %v2995
  %v3582 = vpop.f32.mrf.mxu0
  %v3583 = vadd.f32 0.0, %v3582
  %v3584 = vpop.f32.mrf.mxu0
  %v3585 = vadd.f32 0.0, %v3584
  %3586 = vmatmul.bf16.gmra.mxu0 %v2998
  %v3587 = vpop.f32.mrf.mxu0
  %v3588 = vadd.f32 0.0, %v3587
  %v3589 = vpop.f32.mrf.mxu0
  %v3590 = vadd.f32 0.0, %v3589
  %3591 = vmatmul.bf16.gmra.mxu0 %v3001
  %v3592 = vpop.f32.mrf.mxu0
  %v3593 = vadd.f32 0.0, %v3592
  %v3594 = vpop.f32.mrf.mxu0
  %3595 = vdwg.mxu0
  %3596 = vmatpush.bf16.msra.mxu0 %v3386
  %3597 = vmatpush.bf16.msra.mxu0 %v3383
  %3598 = vmatpush.bf16.msra.mxu0 %v3380
  %3599 = vmatpush.bf16.msra.mxu0 %v3377
  %3600 = vmatpush.bf16.msra.mxu0 %v3374
  %3601 = vmatpush.bf16.msra.mxu0 %v3371
  %3602 = vmatpush.bf16.msra.mxu0 %v3368
  %3603 = vmatpush.bf16.msra.mxu0 %v3365
  %3604 = vmatmul.bf16.gmra.mxu0 %v2993
  %v3605 = vpop.f32.mrf.mxu0
  %v3606 = vadd.f32 %v3578, %v3605
  %v3607 = vpop.f32.mrf.mxu0
  %v3608 = vadd.f32 %v3580, %v3607
  %3609 = vmatmul.bf16.gmra.mxu0 %v2996
  %v3610 = vpop.f32.mrf.mxu0
  %v3611 = vadd.f32 %v3583, %v3610
  %v3612 = vpop.f32.mrf.mxu0
  %v3613 = vadd.f32 %v3585, %v3612
  %3614 = vmatmul.bf16.gmra.mxu0 %v2999
  %v3615 = vpop.f32.mrf.mxu0
  %v3616 = vadd.f32 %v3588, %v3615
  %v3617 = vpop.f32.mrf.mxu0
  %v3618 = vadd.f32 %v3590, %v3617
  %3619 = vmatmul.bf16.gmra.mxu0 %v3002
  %v3620 = vpop.f32.mrf.mxu0
  %v3621 = vadd.f32 %v3593, %v3620
  %v3622 = vpop.f32.mrf.mxu0
  %3623 = vdwg.mxu0
  %3624 = vmatpush.bf16.msra.mxu0 %v3410
  %3625 = vmatpush.bf16.msra.mxu0 %v3407
  %3626 = vmatpush.bf16.msra.mxu0 %v3404
  %3627 = vmatpush.bf16.msra.mxu0 %v3401
  %3628 = vmatpush.bf16.msra.mxu0 %v3398
  %3629 = vmatpush.bf16.msra.mxu0 %v3395
  %3630 = vmatpush.bf16.msra.mxu0 %v3392
  %3631 = vmatpush.bf16.msra.mxu0 %v3389
  %3632 = vmatmul.bf16.gmra.mxu0 %v2994
  %v3633 = vpop.f32.mrf.mxu0
  %v3634 = vadd.f32 %v3606, %v3633
  %v3635 = vpop.f32.mrf.mxu0
  %v3636 = vadd.f32 %v3608, %v3635
  %3637 = vmatmul.bf16.gmra.mxu0 %v2997
  %v3638 = vpop.f32.mrf.mxu0
  %v3639 = vadd.f32 %v3611, %v3638
  %v3640 = vpop.f32.mrf.mxu0
  %v3641 = vadd.f32 %v3613, %v3640
  %3642 = vmatmul.bf16.gmra.mxu0 %v3000
  %v3643 = vpop.f32.mrf.mxu0
  %v3644 = vadd.f32 %v3616, %v3643
  %v3645 = vpop.f32.mrf.mxu0
  %v3646 = vadd.f32 %v3618, %v3645
  %3647 = vmatmul.bf16.gmra.mxu0 %v3003
  %v3648 = vpop.f32.mrf.mxu0
  %v3649 = vadd.f32 %v3621, %v3648
  %v3650 = vpop.f32.mrf.mxu0
  %3651 = vdwg.mxu0
  %3652 = vmatpush.bf16.msra.mxu0 %v3363
  %3653 = vmatpush.bf16.msra.mxu0 %v3360
  %3654 = vmatpush.bf16.msra.mxu0 %v3357
  %3655 = vmatpush.bf16.msra.mxu0 %v3354
  %3656 = vmatpush.bf16.msra.mxu0 %v3351
  %3657 = vmatpush.bf16.msra.mxu0 %v3348
  %3658 = vmatpush.bf16.msra.mxu0 %v3345
  %3659 = vmatpush.bf16.msra.mxu0 %v3342
  %3660 = vmatmul.bf16.gmra.mxu0 %v2992
  %v3661 = vpop.f32.mrf.mxu0
  %v3662 = vadd.f32 0.0, %v3661
  %v3663 = vpop.f32.mrf.mxu0
  %v3664 = vadd.f32 0.0, %v3663
  %3665 = vmatmul.bf16.gmra.mxu0 %v2995
  %v3666 = vpop.f32.mrf.mxu0
  %v3667 = vadd.f32 0.0, %v3666
  %v3668 = vpop.f32.mrf.mxu0
  %v3669 = vadd.f32 0.0, %v3668
  %3670 = vmatmul.bf16.gmra.mxu0 %v2998
  %v3671 = vpop.f32.mrf.mxu0
  %v3672 = vadd.f32 0.0, %v3671
  %v3673 = vpop.f32.mrf.mxu0
  %v3674 = vadd.f32 0.0, %v3673
  %3675 = vmatmul.bf16.gmra.mxu0 %v3001
  %v3676 = vpop.f32.mrf.mxu0
  %v3677 = vadd.f32 0.0, %v3676
  %v3678 = vpop.f32.mrf.mxu0
  %3679 = vdwg.mxu0
  %3680 = vmatpush.bf16.msra.mxu0 %v3387
  %3681 = vmatpush.bf16.msra.mxu0 %v3384
  %3682 = vmatpush.bf16.msra.mxu0 %v3381
  %3683 = vmatpush.bf16.msra.mxu0 %v3378
  %3684 = vmatpush.bf16.msra.mxu0 %v3375
  %3685 = vmatpush.bf16.msra.mxu0 %v3372
  %3686 = vmatpush.bf16.msra.mxu0 %v3369
  %3687 = vmatpush.bf16.msra.mxu0 %v3366
  %3688 = vmatmul.bf16.gmra.mxu0 %v2993
  %v3689 = vpop.f32.mrf.mxu0
  %v3690 = vadd.f32 %v3662, %v3689
  %v3691 = vpop.f32.mrf.mxu0
  %v3692 = vadd.f32 %v3664, %v3691
  %3693 = vmatmul.bf16.gmra.mxu0 %v2996
  %v3694 = vpop.f32.mrf.mxu0
  %v3695 = vadd.f32 %v3667, %v3694
  %v3696 = vpop.f32.mrf.mxu0
  %v3697 = vadd.f32 %v3669, %v3696
  %3698 = vmatmul.bf16.gmra.mxu0 %v2999
  %v3699 = vpop.f32.mrf.mxu0
  %v3700 = vadd.f32 %v3672, %v3699
  %v3701 = vpop.f32.mrf.mxu0
  %v3702 = vadd.f32 %v3674, %v3701
  %3703 = vmatmul.bf16.gmra.mxu0 %v3002
  %v3704 = vpop.f32.mrf.mxu0
  %v3705 = vadd.f32 %v3677, %v3704
  %v3706 = vpop.f32.mrf.mxu0
  %3707 = vdwg.mxu0
  %3708 = vmatpush.bf16.msra.mxu0 %v3411
  %3709 = vmatpush.bf16.msra.mxu0 %v3408
  %3710 = vmatpush.bf16.msra.mxu0 %v3405
  %3711 = vmatpush.bf16.msra.mxu0 %v3402
  %3712 = vmatpush.bf16.msra.mxu0 %v3399
  %3713 = vmatpush.bf16.msra.mxu0 %v3396
  %3714 = vmatpush.bf16.msra.mxu0 %v3393
  %3715 = vmatpush.bf16.msra.mxu0 %v3390
  %3716 = vmatmul.bf16.gmra.mxu0 %v2994
  %v3717 = vpop.f32.mrf.mxu0
  %v3718 = vadd.f32 %v3690, %v3717
  %v3719 = vpop.f32.mrf.mxu0
  %v3720 = vadd.f32 %v3692, %v3719
  %3721 = vmatmul.bf16.gmra.mxu0 %v2997
  %v3722 = vpop.f32.mrf.mxu0
  %v3723 = vadd.f32 %v3695, %v3722
  %v3724 = vpop.f32.mrf.mxu0
  %v3725 = vadd.f32 %v3697, %v3724
  %3726 = vmatmul.bf16.gmra.mxu0 %v3000
  %v3727 = vpop.f32.mrf.mxu0
  %v3728 = vadd.f32 %v3700, %v3727
  %v3729 = vpop.f32.mrf.mxu0
  %v3730 = vadd.f32 %v3702, %v3729
  %3731 = vmatmul.bf16.gmra.mxu0 %v3003
  %v3732 = vpop.f32.mrf.mxu0
  %v3733 = vadd.f32 %v3705, %v3732
  %v3734 = vpop.f32.mrf.mxu0
  %3735 = vdwg.mxu0
  %v3736 = vld [vmem:[%s5] sm:$0xff]
  %v3737 = vld [vmem:[%s5 + $0x8] sm:$0xff]
  %v3738 = vld [vmem:[%s5 + $0x10] sm:$0xff]
  %v3739 = vld [vmem:[%s5 + $0x18] sm:$0xff]
  %v3740 = vld [vmem:[%s5 + $0x20] sm:$0xff]
  %v3741 = vld [vmem:[%s5 + $0x28] sm:$0xff]
  %v3742 = vld [vmem:[%s5 + $0x30] sm:$0xff]
  %v3743 = vld [vmem:[%s5 + $0x38] sm:$0xff]
  %v3744 = vld [vmem:[%s5 + $0x40] sm:$0xff]
  %v3745 = vld [vmem:[%s5 + $0x48] sm:$0xff]
  %v3746 = vld [vmem:[%s5 + $0x50] sm:$0xff]
  %v3747 = vld [vmem:[%s5 + $0x58] sm:$0xff]
  %v3748 = vld [vmem:[%s5 + $0x60] sm:$0xff]
  %v3749 = vld [vmem:[%s5 + $0x68] sm:$0xff]
  %v3750 = vld [vmem:[%s5 + $0x70] sm:$0xff]
  %v3751 = vld [vmem:[%s5 + $0x78] sm:$0xff]
  %v3752 = vld [vmem:[%s5 + $0x80] sm:$0xff]
  %v3753 = vld [vmem:[%s5 + $0x88] sm:$0xff]
  %v3754 = vld [vmem:[%s5 + $0x90] sm:$0x1]
  %v3755 = vld [vmem:[%s5 + $0x98] sm:$0x1]
  %v3756 = vld [vmem:[%s5 + $0xa0] sm:$0x1]
  %v3757 = vadd.f32 %v3736, %v3550
  %v3758 = vadd.f32 %v3737, %v3634
  %v3759 = vadd.f32 %v3738, %v3718
  %v3760 = vadd.f32 %v3739, %v3552
  %v3761 = vadd.f32 %v3740, %v3636
  %v3762 = vadd.f32 %v3741, %v3720
  %v3763 = vadd.f32 %v3742, %v3555
  %v3764 = vadd.f32 %v3743, %v3639
  %v3765 = vadd.f32 %v3744, %v3723
  %v3766 = vadd.f32 %v3745, %v3557
  %v3767 = vadd.f32 %v3746, %v3641
  %v3768 = vadd.f32 %v3747, %v3725
  %v3769 = vadd.f32 %v3748, %v3560
  %v3770 = vadd.f32 %v3749, %v3644
  %v3771 = vadd.f32 %v3750, %v3728
  %v3772 = vadd.f32 %v3751, %v3562
  %v3773 = vadd.f32 %v3752, %v3646
  %v3774 = vadd.f32 %v3753, %v3730
  %v3775 = vadd.f32 %v3754, %v3565
  %v3776 = vadd.f32 %v3755, %v3649
  %v3777 = vadd.f32 %v3756, %v3733
  %3778 = vst [vmem:[%s5] sm:$0xff] %v3757
  %3779 = vst [vmem:[%s5 + $0x8] sm:$0xff] %v3758
  %3780 = vst [vmem:[%s5 + $0x10] sm:$0xff] %v3759
  %3781 = vst [vmem:[%s5 + $0x18] sm:$0xff] %v3760
  %3782 = vst [vmem:[%s5 + $0x20] sm:$0xff] %v3761
  %3783 = vst [vmem:[%s5 + $0x28] sm:$0xff] %v3762
  %3784 = vst [vmem:[%s5 + $0x30] sm:$0xff] %v3763
  %3785 = vst [vmem:[%s5 + $0x38] sm:$0xff] %v3764
  %3786 = vst [vmem:[%s5 + $0x40] sm:$0xff] %v3765
  %3787 = vst [vmem:[%s5 + $0x48] sm:$0xff] %v3766
  %3788 = vst [vmem:[%s5 + $0x50] sm:$0xff] %v3767
  %3789 = vst [vmem:[%s5 + $0x58] sm:$0xff] %v3768
  %3790 = vst [vmem:[%s5 + $0x60] sm:$0xff] %v3769
  %3791 = vst [vmem:[%s5 + $0x68] sm:$0xff] %v3770
  %3792 = vst [vmem:[%s5 + $0x70] sm:$0xff] %v3771
  %3793 = vst [vmem:[%s5 + $0x78] sm:$0xff] %v3772
  %3794 = vst [vmem:[%s5 + $0x80] sm:$0xff] %v3773
  %3795 = vst [vmem:[%s5 + $0x88] sm:$0xff] %v3774
  %3796 = vst [vmem:[%s5 + $0x90] sm:$0x1] %v3775
  %3797 = vst [vmem:[%s5 + $0x98] sm:$0x1] %v3776
  %3798 = vst [vmem:[%s5 + $0xa0] sm:$0x1] %v3777
  %v3799 = vld [vmem:[%s0 + $0x30] sm:$0xff]
  %v3800 = vld [vmem:[%s0 + $0x38] sm:$0xff]
  %v3801 = vld [vmem:[%s0 + $0x40] sm:$0xff]
  %v3802 = vld [vmem:[%s0 + $0x78] sm:$0xff]
  %v3803 = vld [vmem:[%s0 + $0x80] sm:$0xff]
  %v3804 = vld [vmem:[%s0 + $0x88] sm:$0xff]
  %v3805 = vld [vmem:[%s0 + $0xc0] sm:$0xff]
  %v3806 = vld [vmem:[%s0 + $0xc8] sm:$0xff]
  %v3807 = vld [vmem:[%s0 + $0xd0] sm:$0xff]
  %v3808 = vld [vmem:[%s0 + $0x108] sm:$0xff]
  %v3809 = vld [vmem:[%s0 + $0x110] sm:$0xff]
  %v3810 = vld [vmem:[%s0 + $0x118] sm:$0xff]
  %v3811 = vld [vmem:[%s0 + $0x150] sm:$0xff]
  %v3812 = vld [vmem:[%s0 + $0x158] sm:$0xff]
  %v3813 = vld [vmem:[%s0 + $0x160] sm:$0xff]
  %v3814 = vld [vmem:[%s0 + $0x198] sm:$0xff]
  %v3815 = vld [vmem:[%s0 + $0x1a0] sm:$0xff]
  %v3816 = vld [vmem:[%s0 + $0x1a8] sm:$0xff]
  %v3817 = vld [vmem:[%s0 + $0x1e0] sm:$0x1]
  %v3818 = vld [vmem:[%s0 + $0x1e8] sm:$0x1]
  %v3819 = vld [vmem:[%s0 + $0x1f0] sm:$0x1]
  %v3820 = vmax.f32 %v3799, 0.0
  %v3821 = vmax.f32 %v3800, 0.0
  %v3822 = vmax.f32 %v3801, 0.0
  %v3823 = vmax.f32 %v3802, 0.0
  %v3824 = vmax.f32 %v3803, 0.0
  %v3825 = vmax.f32 %v3804, 0.0
  %v3826 = vmax.f32 %v3805, 0.0
  %v3827 = vmax.f32 %v3806, 0.0
  %v3828 = vmax.f32 %v3807, 0.0
  %v3829 = vmax.f32 %v3808, 0.0
  %v3830 = vmax.f32 %v3809, 0.0
  %v3831 = vmax.f32 %v3810, 0.0
  %v3832 = vmax.f32 %v3811, 0.0
  %v3833 = vmax.f32 %v3812, 0.0
  %v3834 = vmax.f32 %v3813, 0.0
  %v3835 = vmax.f32 %v3814, 0.0
  %v3836 = vmax.f32 %v3815, 0.0
  %v3837 = vmax.f32 %v3816, 0.0
  %v3838 = vmax.f32 %v3817, 0.0
  %v3839 = vmax.f32 %v3818, 0.0
  %v3840 = vmax.f32 %v3819, 0.0
  %s3841 = scalar_lea.vmem %s1, 48
  %v3842 = vld [vmem:[%s3841] ss:$8 sm:$0x7]
  %v3844 = vperm.slane %v3842, 0
  %v3845 = vperm.slane %v3842, 1
  %v3846 = vperm.slane %v3842, 2
  %v3850 = vmul.f32 %v3820, %v3844
  %v3851 = vmul.f32 %v3821, %v3845
  %v3852 = vmul.f32 %v3822, %v3846
  %v3853 = vmul.f32 %v3823, %v3844
  %v3854 = vmul.f32 %v3824, %v3845
  %v3855 = vmul.f32 %v3825, %v3846
  %v3856 = vmul.f32 %v3826, %v3844
  %v3857 = vmul.f32 %v3827, %v3845
  %v3858 = vmul.f32 %v3828, %v3846
  %v3859 = vmul.f32 %v3829, %v3844
  %v3860 = vmul.f32 %v3830, %v3845
  %v3861 = vmul.f32 %v3831, %v3846
  %v3862 = vmul.f32 %v3832, %v3844
  %v3863 = vmul.f32 %v3833, %v3845
  %v3864 = vmul.f32 %v3834, %v3846
  %v3865 = vmul.f32 %v3835, %v3844
  %v3866 = vmul.f32 %v3836, %v3845
  %v3867 = vmul.f32 %v3837, %v3846
  %v3868 = vmul.f32 %v3838, %v3844
  %v3869 = vmul.f32 %v3839, %v3845
  %v3870 = vmul.f32 %v3840, %v3846
  %v3871 = vadd.f32 %v3850, 0.0
  %v3872 = vadd.f32 %v3851, 0.0
  %v3873 = vadd.f32 %v3852, 0.0
  %v3874 = vadd.f32 %v3853, 0.0
  %v3875 = vadd.f32 %v3854, 0.0
  %v3876 = vadd.f32 %v3855, 0.0
  %v3877 = vadd.f32 %v3856, 0.0
  %v3878 = vadd.f32 %v3857, 0.0
  %v3879 = vadd.f32 %v3858, 0.0
  %v3880 = vadd.f32 %v3859, 0.0
  %v3881 = vadd.f32 %v3860, 0.0
  %v3882 = vadd.f32 %v3861, 0.0
  %v3883 = vadd.f32 %v3862, 0.0
  %v3884 = vadd.f32 %v3863, 0.0
  %v3885 = vadd.f32 %v3864, 0.0
  %v3886 = vadd.f32 %v3865, 0.0
  %v3887 = vadd.f32 %v3866, 0.0
  %v3888 = vadd.f32 %v3867, 0.0
  %v3889 = vadd.f32 %v3868, 0.0
  %v3890 = vadd.f32 %v3869, 0.0
  %v3891 = vadd.f32 %v3870, 0.0
  %v3892 = vld [vmem:[%s112 + $0x30] sm:$0xff]
  %v3893 = vld [vmem:[%s112 + $0x38] sm:$0xff]
  %v3894 = vld [vmem:[%s112 + $0x40] sm:$0xff]
  %v3895 = vld [vmem:[%s112 + $0x78] sm:$0xff]
  %v3896 = vld [vmem:[%s112 + $0x80] sm:$0xff]
  %v3897 = vld [vmem:[%s112 + $0x88] sm:$0xff]
  %v3898 = vld [vmem:[%s112 + $0xc0] sm:$0xff]
  %v3899 = vld [vmem:[%s112 + $0xc8] sm:$0xff]
  %v3900 = vld [vmem:[%s112 + $0xd0] sm:$0xff]
  %v3901 = vld [vmem:[%s112 + $0x108] sm:$0xff]
  %v3902 = vld [vmem:[%s112 + $0x110] sm:$0xff]
  %v3903 = vld [vmem:[%s112 + $0x118] sm:$0xff]
  %v3904 = vld [vmem:[%s112 + $0x150] sm:$0xff]
  %v3905 = vld [vmem:[%s112 + $0x158] sm:$0xff]
  %v3906 = vld [vmem:[%s112 + $0x160] sm:$0xff]
  %v3907 = vld [vmem:[%s112 + $0x198] sm:$0xff]
  %v3908 = vld [vmem:[%s112 + $0x1a0] sm:$0xff]
  %v3909 = vld [vmem:[%s112 + $0x1a8] sm:$0xff]
  %v3910 = vld [vmem:[%s112 + $0x1e0] sm:$0x1]
  %v3911 = vld [vmem:[%s112 + $0x1e8] sm:$0x1]
  %v3912 = vld [vmem:[%s112 + $0x1f0] sm:$0x1]
  %v3913 = vmax.f32 %v3892, 0.0
  %v3914 = vmax.f32 %v3893, 0.0
  %v3915 = vmax.f32 %v3894, 0.0
  %v3916 = vmax.f32 %v3895, 0.0
  %v3917 = vmax.f32 %v3896, 0.0
  %v3918 = vmax.f32 %v3897, 0.0
  %v3919 = vmax.f32 %v3898, 0.0
  %v3920 = vmax.f32 %v3899, 0.0
  %v3921 = vmax.f32 %v3900, 0.0
  %v3922 = vmax.f32 %v3901, 0.0
  %v3923 = vmax.f32 %v3902, 0.0
  %v3924 = vmax.f32 %v3903, 0.0
  %v3925 = vmax.f32 %v3904, 0.0
  %v3926 = vmax.f32 %v3905, 0.0
  %v3927 = vmax.f32 %v3906, 0.0
  %v3928 = vmax.f32 %v3907, 0.0
  %v3929 = vmax.f32 %v3908, 0.0
  %v3930 = vmax.f32 %v3909, 0.0
  %v3931 = vmax.f32 %v3910, 0.0
  %v3932 = vmax.f32 %v3911, 0.0
  %v3933 = vmax.f32 %v3912, 0.0
  %s3934 = scalar_lea.vmem %s1, 49
  %v3935 = vld [vmem:[%s3934] ss:$8 sm:$0x7]
  %v3937 = vperm.slane %v3935, 0
  %v3938 = vperm.slane %v3935, 1
  %v3939 = vperm.slane %v3935, 2
  %v3943 = vmul.f32 %v3913, %v3937
  %v3944 = vmul.f32 %v3914, %v3938
  %v3945 = vmul.f32 %v3915, %v3939
  %v3946 = vmul.f32 %v3916, %v3937
  %v3947 = vmul.f32 %v3917, %v3938
  %v3948 = vmul.f32 %v3918, %v3939
  %v3949 = vmul.f32 %v3919, %v3937
  %v3950 = vmul.f32 %v3920, %v3938
  %v3951 = vmul.f32 %v3921, %v3939
  %v3952 = vmul.f32 %v3922, %v3937
  %v3953 = vmul.f32 %v3923, %v3938
  %v3954 = vmul.f32 %v3924, %v3939
  %v3955 = vmul.f32 %v3925, %v3937
  %v3956 = vmul.f32 %v3926, %v3938
  %v3957 = vmul.f32 %v3927, %v3939
  %v3958 = vmul.f32 %v3928, %v3937
  %v3959 = vmul.f32 %v3929, %v3938
  %v3960 = vmul.f32 %v3930, %v3939
  %v3961 = vmul.f32 %v3931, %v3937
  %v3962 = vmul.f32 %v3932, %v3938
  %v3963 = vmul.f32 %v3933, %v3939
  %v3964 = vadd.f32 %v3871, %v3943
  %v3965 = vadd.f32 %v3872, %v3944
  %v3966 = vadd.f32 %v3873, %v3945
  %v3967 = vadd.f32 %v3874, %v3946
  %v3968 = vadd.f32 %v3875, %v3947
  %v3969 = vadd.f32 %v3876, %v3948
  %v3970 = vadd.f32 %v3877, %v3949
  %v3971 = vadd.f32 %v3878, %v3950
  %v3972 = vadd.f32 %v3879, %v3951
  %v3973 = vadd.f32 %v3880, %v3952
  %v3974 = vadd.f32 %v3881, %v3953
  %v3975 = vadd.f32 %v3882, %v3954
  %v3976 = vadd.f32 %v3883, %v3955
  %v3977 = vadd.f32 %v3884, %v3956
  %v3978 = vadd.f32 %v3885, %v3957
  %v3979 = vadd.f32 %v3886, %v3958
  %v3980 = vadd.f32 %v3887, %v3959
  %v3981 = vadd.f32 %v3888, %v3960
  %v3982 = vadd.f32 %v3889, %v3961
  %v3983 = vadd.f32 %v3890, %v3962
  %v3984 = vadd.f32 %v3891, %v3963
  %v3985 = vld [vmem:[%s206 + $0x30] sm:$0xff]
  %v3986 = vld [vmem:[%s206 + $0x38] sm:$0xff]
  %v3987 = vld [vmem:[%s206 + $0x40] sm:$0xff]
  %v3988 = vld [vmem:[%s206 + $0x78] sm:$0xff]
  %v3989 = vld [vmem:[%s206 + $0x80] sm:$0xff]
  %v3990 = vld [vmem:[%s206 + $0x88] sm:$0xff]
  %v3991 = vld [vmem:[%s206 + $0xc0] sm:$0xff]
  %v3992 = vld [vmem:[%s206 + $0xc8] sm:$0xff]
  %v3993 = vld [vmem:[%s206 + $0xd0] sm:$0xff]
  %v3994 = vld [vmem:[%s206 + $0x108] sm:$0xff]
  %v3995 = vld [vmem:[%s206 + $0x110] sm:$0xff]
  %v3996 = vld [vmem:[%s206 + $0x118] sm:$0xff]
  %v3997 = vld [vmem:[%s206 + $0x150] sm:$0xff]
  %v3998 = vld [vmem:[%s206 + $0x158] sm:$0xff]
  %v3999 = vld [vmem:[%s206 + $0x160] sm:$0xff]
  %v4000 = vld [vmem:[%s206 + $0x198] sm:$0xff]
  %v4001 = vld [vmem:[%s206 + $0x1a0] sm:$0xff]
  %v4002 = vld [vmem:[%s206 + $0x1a8] sm:$0xff]
  %v4003 = vld [vmem:[%s206 + $0x1e0] sm:$0x1]
  %v4004 = vld [vmem:[%s206 + $0x1e8] sm:$0x1]
  %v4005 = vld [vmem:[%s206 + $0x1f0] sm:$0x1]
  %v4006 = vmax.f32 %v3985, 0.0
  %v4007 = vmax.f32 %v3986, 0.0
  %v4008 = vmax.f32 %v3987, 0.0
  %v4009 = vmax.f32 %v3988, 0.0
  %v4010 = vmax.f32 %v3989, 0.0
  %v4011 = vmax.f32 %v3990, 0.0
  %v4012 = vmax.f32 %v3991, 0.0
  %v4013 = vmax.f32 %v3992, 0.0
  %v4014 = vmax.f32 %v3993, 0.0
  %v4015 = vmax.f32 %v3994, 0.0
  %v4016 = vmax.f32 %v3995, 0.0
  %v4017 = vmax.f32 %v3996, 0.0
  %v4018 = vmax.f32 %v3997, 0.0
  %v4019 = vmax.f32 %v3998, 0.0
  %v4020 = vmax.f32 %v3999, 0.0
  %v4021 = vmax.f32 %v4000, 0.0
  %v4022 = vmax.f32 %v4001, 0.0
  %v4023 = vmax.f32 %v4002, 0.0
  %v4024 = vmax.f32 %v4003, 0.0
  %v4025 = vmax.f32 %v4004, 0.0
  %v4026 = vmax.f32 %v4005, 0.0
  %s4027 = scalar_lea.vmem %s1, 50
  %v4028 = vld [vmem:[%s4027] ss:$8 sm:$0x7]
  %v4030 = vperm.slane %v4028, 0
  %v4031 = vperm.slane %v4028, 1
  %v4032 = vperm.slane %v4028, 2
  %v4036 = vmul.f32 %v4006, %v4030
  %v4037 = vmul.f32 %v4007, %v4031
  %v4038 = vmul.f32 %v4008, %v4032
  %v4039 = vmul.f32 %v4009, %v4030
  %v4040 = vmul.f32 %v4010, %v4031
  %v4041 = vmul.f32 %v4011, %v4032
  %v4042 = vmul.f32 %v4012, %v4030
  %v4043 = vmul.f32 %v4013, %v4031
  %v4044 = vmul.f32 %v4014, %v4032
  %v4045 = vmul.f32 %v4015, %v4030
  %v4046 = vmul.f32 %v4016, %v4031
  %v4047 = vmul.f32 %v4017, %v4032
  %v4048 = vmul.f32 %v4018, %v4030
  %v4049 = vmul.f32 %v4019, %v4031
  %v4050 = vmul.f32 %v4020, %v4032
  %v4051 = vmul.f32 %v4021, %v4030
  %v4052 = vmul.f32 %v4022, %v4031
  %v4053 = vmul.f32 %v4023, %v4032
  %v4054 = vmul.f32 %v4024, %v4030
  %v4055 = vmul.f32 %v4025, %v4031
  %v4056 = vmul.f32 %v4026, %v4032
  %v4057 = vadd.f32 %v3964, %v4036
  %v4058 = vadd.f32 %v3965, %v4037
  %v4059 = vadd.f32 %v3966, %v4038
  %v4060 = vadd.f32 %v3967, %v4039
  %v4061 = vadd.f32 %v3968, %v4040
  %v4062 = vadd.f32 %v3969, %v4041
  %v4063 = vadd.f32 %v3970, %v4042
  %v4064 = vadd.f32 %v3971, %v4043
  %v4065 = vadd.f32 %v3972, %v4044
  %v4066 = vadd.f32 %v3973, %v4045
  %v4067 = vadd.f32 %v3974, %v4046
  %v4068 = vadd.f32 %v3975, %v4047
  %v4069 = vadd.f32 %v3976, %v4048
  %v4070 = vadd.f32 %v3977, %v4049
  %v4071 = vadd.f32 %v3978, %v4050
  %v4072 = vadd.f32 %v3979, %v4051
  %v4073 = vadd.f32 %v3980, %v4052
  %v4074 = vadd.f32 %v3981, %v4053
  %v4075 = vadd.f32 %v3982, %v4054
  %v4076 = vadd.f32 %v3983, %v4055
  %v4077 = vadd.f32 %v3984, %v4056
  %v4078 = vld [vmem:[%s300 + $0x30] sm:$0xff]
  %v4079 = vld [vmem:[%s300 + $0x38] sm:$0xff]
  %v4080 = vld [vmem:[%s300 + $0x40] sm:$0xff]
  %v4081 = vld [vmem:[%s300 + $0x78] sm:$0xff]
  %v4082 = vld [vmem:[%s300 + $0x80] sm:$0xff]
  %v4083 = vld [vmem:[%s300 + $0x88] sm:$0xff]
  %v4084 = vld [vmem:[%s300 + $0xc0] sm:$0xff]
  %v4085 = vld [vmem:[%s300 + $0xc8] sm:$0xff]
  %v4086 = vld [vmem:[%s300 + $0xd0] sm:$0xff]
  %v4087 = vld [vmem:[%s300 + $0x108] sm:$0xff]
  %v4088 = vld [vmem:[%s300 + $0x110] sm:$0xff]
  %v4089 = vld [vmem:[%s300 + $0x118] sm:$0xff]
  %v4090 = vld [vmem:[%s300 + $0x150] sm:$0xff]
  %v4091 = vld [vmem:[%s300 + $0x158] sm:$0xff]
  %v4092 = vld [vmem:[%s300 + $0x160] sm:$0xff]
  %v4093 = vld [vmem:[%s300 + $0x198] sm:$0xff]
  %v4094 = vld [vmem:[%s300 + $0x1a0] sm:$0xff]
  %v4095 = vld [vmem:[%s300 + $0x1a8] sm:$0xff]
  %v4096 = vld [vmem:[%s300 + $0x1e0] sm:$0x1]
  %v4097 = vld [vmem:[%s300 + $0x1e8] sm:$0x1]
  %v4098 = vld [vmem:[%s300 + $0x1f0] sm:$0x1]
  %v4099 = vmax.f32 %v4078, 0.0
  %v4100 = vmax.f32 %v4079, 0.0
  %v4101 = vmax.f32 %v4080, 0.0
  %v4102 = vmax.f32 %v4081, 0.0
  %v4103 = vmax.f32 %v4082, 0.0
  %v4104 = vmax.f32 %v4083, 0.0
  %v4105 = vmax.f32 %v4084, 0.0
  %v4106 = vmax.f32 %v4085, 0.0
  %v4107 = vmax.f32 %v4086, 0.0
  %v4108 = vmax.f32 %v4087, 0.0
  %v4109 = vmax.f32 %v4088, 0.0
  %v4110 = vmax.f32 %v4089, 0.0
  %v4111 = vmax.f32 %v4090, 0.0
  %v4112 = vmax.f32 %v4091, 0.0
  %v4113 = vmax.f32 %v4092, 0.0
  %v4114 = vmax.f32 %v4093, 0.0
  %v4115 = vmax.f32 %v4094, 0.0
  %v4116 = vmax.f32 %v4095, 0.0
  %v4117 = vmax.f32 %v4096, 0.0
  %v4118 = vmax.f32 %v4097, 0.0
  %v4119 = vmax.f32 %v4098, 0.0
  %s4120 = scalar_lea.vmem %s1, 51
  %v4121 = vld [vmem:[%s4120] ss:$8 sm:$0x7]
  %v4123 = vperm.slane %v4121, 0
  %v4124 = vperm.slane %v4121, 1
  %v4125 = vperm.slane %v4121, 2
  %v4129 = vmul.f32 %v4099, %v4123
  %v4130 = vmul.f32 %v4100, %v4124
  %v4131 = vmul.f32 %v4101, %v4125
  %v4132 = vmul.f32 %v4102, %v4123
  %v4133 = vmul.f32 %v4103, %v4124
  %v4134 = vmul.f32 %v4104, %v4125
  %v4135 = vmul.f32 %v4105, %v4123
  %v4136 = vmul.f32 %v4106, %v4124
  %v4137 = vmul.f32 %v4107, %v4125
  %v4138 = vmul.f32 %v4108, %v4123
  %v4139 = vmul.f32 %v4109, %v4124
  %v4140 = vmul.f32 %v4110, %v4125
  %v4141 = vmul.f32 %v4111, %v4123
  %v4142 = vmul.f32 %v4112, %v4124
  %v4143 = vmul.f32 %v4113, %v4125
  %v4144 = vmul.f32 %v4114, %v4123
  %v4145 = vmul.f32 %v4115, %v4124
  %v4146 = vmul.f32 %v4116, %v4125
  %v4147 = vmul.f32 %v4117, %v4123
  %v4148 = vmul.f32 %v4118, %v4124
  %v4149 = vmul.f32 %v4119, %v4125
  %v4150 = vadd.f32 %v4057, %v4129
  %v4151 = vadd.f32 %v4058, %v4130
  %v4152 = vadd.f32 %v4059, %v4131
  %v4153 = vadd.f32 %v4060, %v4132
  %v4154 = vadd.f32 %v4061, %v4133
  %v4155 = vadd.f32 %v4062, %v4134
  %v4156 = vadd.f32 %v4063, %v4135
  %v4157 = vadd.f32 %v4064, %v4136
  %v4158 = vadd.f32 %v4065, %v4137
  %v4159 = vadd.f32 %v4066, %v4138
  %v4160 = vadd.f32 %v4067, %v4139
  %v4161 = vadd.f32 %v4068, %v4140
  %v4162 = vadd.f32 %v4069, %v4141
  %v4163 = vadd.f32 %v4070, %v4142
  %v4164 = vadd.f32 %v4071, %v4143
  %v4165 = vadd.f32 %v4072, %v4144
  %v4166 = vadd.f32 %v4073, %v4145
  %v4167 = vadd.f32 %v4074, %v4146
  %v4168 = vadd.f32 %v4075, %v4147
  %v4169 = vadd.f32 %v4076, %v4148
  %v4170 = vadd.f32 %v4077, %v4149
  %v4171 = vld [vmem:[%s394 + $0x30] sm:$0xff]
  %v4172 = vld [vmem:[%s394 + $0x38] sm:$0xff]
  %v4173 = vld [vmem:[%s394 + $0x40] sm:$0xff]
  %v4174 = vld [vmem:[%s394 + $0x78] sm:$0xff]
  %v4175 = vld [vmem:[%s394 + $0x80] sm:$0xff]
  %v4176 = vld [vmem:[%s394 + $0x88] sm:$0xff]
  %v4177 = vld [vmem:[%s394 + $0xc0] sm:$0xff]
  %v4178 = vld [vmem:[%s394 + $0xc8] sm:$0xff]
  %v4179 = vld [vmem:[%s394 + $0xd0] sm:$0xff]
  %v4180 = vld [vmem:[%s394 + $0x108] sm:$0xff]
  %v4181 = vld [vmem:[%s394 + $0x110] sm:$0xff]
  %v4182 = vld [vmem:[%s394 + $0x118] sm:$0xff]
  %v4183 = vld [vmem:[%s394 + $0x150] sm:$0xff]
  %v4184 = vld [vmem:[%s394 + $0x158] sm:$0xff]
  %v4185 = vld [vmem:[%s394 + $0x160] sm:$0xff]
  %v4186 = vld [vmem:[%s394 + $0x198] sm:$0xff]
  %v4187 = vld [vmem:[%s394 + $0x1a0] sm:$0xff]
  %v4188 = vld [vmem:[%s394 + $0x1a8] sm:$0xff]
  %v4189 = vld [vmem:[%s394 + $0x1e0] sm:$0x1]
  %v4190 = vld [vmem:[%s394 + $0x1e8] sm:$0x1]
  %v4191 = vld [vmem:[%s394 + $0x1f0] sm:$0x1]
  %v4192 = vmax.f32 %v4171, 0.0
  %v4193 = vmax.f32 %v4172, 0.0
  %v4194 = vmax.f32 %v4173, 0.0
  %v4195 = vmax.f32 %v4174, 0.0
  %v4196 = vmax.f32 %v4175, 0.0
  %v4197 = vmax.f32 %v4176, 0.0
  %v4198 = vmax.f32 %v4177, 0.0
  %v4199 = vmax.f32 %v4178, 0.0
  %v4200 = vmax.f32 %v4179, 0.0
  %v4201 = vmax.f32 %v4180, 0.0
  %v4202 = vmax.f32 %v4181, 0.0
  %v4203 = vmax.f32 %v4182, 0.0
  %v4204 = vmax.f32 %v4183, 0.0
  %v4205 = vmax.f32 %v4184, 0.0
  %v4206 = vmax.f32 %v4185, 0.0
  %v4207 = vmax.f32 %v4186, 0.0
  %v4208 = vmax.f32 %v4187, 0.0
  %v4209 = vmax.f32 %v4188, 0.0
  %v4210 = vmax.f32 %v4189, 0.0
  %v4211 = vmax.f32 %v4190, 0.0
  %v4212 = vmax.f32 %v4191, 0.0
  %s4213 = scalar_lea.vmem %s1, 52
  %v4214 = vld [vmem:[%s4213] ss:$8 sm:$0x7]
  %v4216 = vperm.slane %v4214, 0
  %v4217 = vperm.slane %v4214, 1
  %v4218 = vperm.slane %v4214, 2
  %v4222 = vmul.f32 %v4192, %v4216
  %v4223 = vmul.f32 %v4193, %v4217
  %v4224 = vmul.f32 %v4194, %v4218
  %v4225 = vmul.f32 %v4195, %v4216
  %v4226 = vmul.f32 %v4196, %v4217
  %v4227 = vmul.f32 %v4197, %v4218
  %v4228 = vmul.f32 %v4198, %v4216
  %v4229 = vmul.f32 %v4199, %v4217
  %v4230 = vmul.f32 %v4200, %v4218
  %v4231 = vmul.f32 %v4201, %v4216
  %v4232 = vmul.f32 %v4202, %v4217
  %v4233 = vmul.f32 %v4203, %v4218
  %v4234 = vmul.f32 %v4204, %v4216
  %v4235 = vmul.f32 %v4205, %v4217
  %v4236 = vmul.f32 %v4206, %v4218
  %v4237 = vmul.f32 %v4207, %v4216
  %v4238 = vmul.f32 %v4208, %v4217
  %v4239 = vmul.f32 %v4209, %v4218
  %v4240 = vmul.f32 %v4210, %v4216
  %v4241 = vmul.f32 %v4211, %v4217
  %v4242 = vmul.f32 %v4212, %v4218
  %v4243 = vadd.f32 %v4150, %v4222
  %v4244 = vadd.f32 %v4151, %v4223
  %v4245 = vadd.f32 %v4152, %v4224
  %v4246 = vadd.f32 %v4153, %v4225
  %v4247 = vadd.f32 %v4154, %v4226
  %v4248 = vadd.f32 %v4155, %v4227
  %v4249 = vadd.f32 %v4156, %v4228
  %v4250 = vadd.f32 %v4157, %v4229
  %v4251 = vadd.f32 %v4158, %v4230
  %v4252 = vadd.f32 %v4159, %v4231
  %v4253 = vadd.f32 %v4160, %v4232
  %v4254 = vadd.f32 %v4161, %v4233
  %v4255 = vadd.f32 %v4162, %v4234
  %v4256 = vadd.f32 %v4163, %v4235
  %v4257 = vadd.f32 %v4164, %v4236
  %v4258 = vadd.f32 %v4165, %v4237
  %v4259 = vadd.f32 %v4166, %v4238
  %v4260 = vadd.f32 %v4167, %v4239
  %v4261 = vadd.f32 %v4168, %v4240
  %v4262 = vadd.f32 %v4169, %v4241
  %v4263 = vadd.f32 %v4170, %v4242
  %v4264 = vld [vmem:[%s488 + $0x30] sm:$0xff]
  %v4265 = vld [vmem:[%s488 + $0x38] sm:$0xff]
  %v4266 = vld [vmem:[%s488 + $0x40] sm:$0xff]
  %v4267 = vld [vmem:[%s488 + $0x78] sm:$0xff]
  %v4268 = vld [vmem:[%s488 + $0x80] sm:$0xff]
  %v4269 = vld [vmem:[%s488 + $0x88] sm:$0xff]
  %v4270 = vld [vmem:[%s488 + $0xc0] sm:$0xff]
  %v4271 = vld [vmem:[%s488 + $0xc8] sm:$0xff]
  %v4272 = vld [vmem:[%s488 + $0xd0] sm:$0xff]
  %v4273 = vld [vmem:[%s488 + $0x108] sm:$0xff]
  %v4274 = vld [vmem:[%s488 + $0x110] sm:$0xff]
  %v4275 = vld [vmem:[%s488 + $0x118] sm:$0xff]
  %v4276 = vld [vmem:[%s488 + $0x150] sm:$0xff]
  %v4277 = vld [vmem:[%s488 + $0x158] sm:$0xff]
  %v4278 = vld [vmem:[%s488 + $0x160] sm:$0xff]
  %v4279 = vld [vmem:[%s488 + $0x198] sm:$0xff]
  %v4280 = vld [vmem:[%s488 + $0x1a0] sm:$0xff]
  %v4281 = vld [vmem:[%s488 + $0x1a8] sm:$0xff]
  %v4282 = vld [vmem:[%s488 + $0x1e0] sm:$0x1]
  %v4283 = vld [vmem:[%s488 + $0x1e8] sm:$0x1]
  %v4284 = vld [vmem:[%s488 + $0x1f0] sm:$0x1]
  %v4285 = vmax.f32 %v4264, 0.0
  %v4286 = vmax.f32 %v4265, 0.0
  %v4287 = vmax.f32 %v4266, 0.0
  %v4288 = vmax.f32 %v4267, 0.0
  %v4289 = vmax.f32 %v4268, 0.0
  %v4290 = vmax.f32 %v4269, 0.0
  %v4291 = vmax.f32 %v4270, 0.0
  %v4292 = vmax.f32 %v4271, 0.0
  %v4293 = vmax.f32 %v4272, 0.0
  %v4294 = vmax.f32 %v4273, 0.0
  %v4295 = vmax.f32 %v4274, 0.0
  %v4296 = vmax.f32 %v4275, 0.0
  %v4297 = vmax.f32 %v4276, 0.0
  %v4298 = vmax.f32 %v4277, 0.0
  %v4299 = vmax.f32 %v4278, 0.0
  %v4300 = vmax.f32 %v4279, 0.0
  %v4301 = vmax.f32 %v4280, 0.0
  %v4302 = vmax.f32 %v4281, 0.0
  %v4303 = vmax.f32 %v4282, 0.0
  %v4304 = vmax.f32 %v4283, 0.0
  %v4305 = vmax.f32 %v4284, 0.0
  %s4306 = scalar_lea.vmem %s1, 53
  %v4307 = vld [vmem:[%s4306] ss:$8 sm:$0x7]
  %v4309 = vperm.slane %v4307, 0
  %v4310 = vperm.slane %v4307, 1
  %v4311 = vperm.slane %v4307, 2
  %v4315 = vmul.f32 %v4285, %v4309
  %v4316 = vmul.f32 %v4286, %v4310
  %v4317 = vmul.f32 %v4287, %v4311
  %v4318 = vmul.f32 %v4288, %v4309
  %v4319 = vmul.f32 %v4289, %v4310
  %v4320 = vmul.f32 %v4290, %v4311
  %v4321 = vmul.f32 %v4291, %v4309
  %v4322 = vmul.f32 %v4292, %v4310
  %v4323 = vmul.f32 %v4293, %v4311
  %v4324 = vmul.f32 %v4294, %v4309
  %v4325 = vmul.f32 %v4295, %v4310
  %v4326 = vmul.f32 %v4296, %v4311
  %v4327 = vmul.f32 %v4297, %v4309
  %v4328 = vmul.f32 %v4298, %v4310
  %v4329 = vmul.f32 %v4299, %v4311
  %v4330 = vmul.f32 %v4300, %v4309
  %v4331 = vmul.f32 %v4301, %v4310
  %v4332 = vmul.f32 %v4302, %v4311
  %v4333 = vmul.f32 %v4303, %v4309
  %v4334 = vmul.f32 %v4304, %v4310
  %v4335 = vmul.f32 %v4305, %v4311
  %v4336 = vadd.f32 %v4243, %v4315
  %v4337 = vadd.f32 %v4244, %v4316
  %v4338 = vadd.f32 %v4245, %v4317
  %v4339 = vadd.f32 %v4246, %v4318
  %v4340 = vadd.f32 %v4247, %v4319
  %v4341 = vadd.f32 %v4248, %v4320
  %v4342 = vadd.f32 %v4249, %v4321
  %v4343 = vadd.f32 %v4250, %v4322
  %v4344 = vadd.f32 %v4251, %v4323
  %v4345 = vadd.f32 %v4252, %v4324
  %v4346 = vadd.f32 %v4253, %v4325
  %v4347 = vadd.f32 %v4254, %v4326
  %v4348 = vadd.f32 %v4255, %v4327
  %v4349 = vadd.f32 %v4256, %v4328
  %v4350 = vadd.f32 %v4257, %v4329
  %v4351 = vadd.f32 %v4258, %v4330
  %v4352 = vadd.f32 %v4259, %v4331
  %v4353 = vadd.f32 %v4260, %v4332
  %v4354 = vadd.f32 %v4261, %v4333
  %v4355 = vadd.f32 %v4262, %v4334
  %v4356 = vadd.f32 %v4263, %v4335
  %v4357 = vld [vmem:[%s582 + $0x30] sm:$0xff]
  %v4358 = vld [vmem:[%s582 + $0x38] sm:$0xff]
  %v4359 = vld [vmem:[%s582 + $0x40] sm:$0xff]
  %v4360 = vld [vmem:[%s582 + $0x78] sm:$0xff]
  %v4361 = vld [vmem:[%s582 + $0x80] sm:$0xff]
  %v4362 = vld [vmem:[%s582 + $0x88] sm:$0xff]
  %v4363 = vld [vmem:[%s582 + $0xc0] sm:$0xff]
  %v4364 = vld [vmem:[%s582 + $0xc8] sm:$0xff]
  %v4365 = vld [vmem:[%s582 + $0xd0] sm:$0xff]
  %v4366 = vld [vmem:[%s582 + $0x108] sm:$0xff]
  %v4367 = vld [vmem:[%s582 + $0x110] sm:$0xff]
  %v4368 = vld [vmem:[%s582 + $0x118] sm:$0xff]
  %v4369 = vld [vmem:[%s582 + $0x150] sm:$0xff]
  %v4370 = vld [vmem:[%s582 + $0x158] sm:$0xff]
  %v4371 = vld [vmem:[%s582 + $0x160] sm:$0xff]
  %v4372 = vld [vmem:[%s582 + $0x198] sm:$0xff]
  %v4373 = vld [vmem:[%s582 + $0x1a0] sm:$0xff]
  %v4374 = vld [vmem:[%s582 + $0x1a8] sm:$0xff]
  %v4375 = vld [vmem:[%s582 + $0x1e0] sm:$0x1]
  %v4376 = vld [vmem:[%s582 + $0x1e8] sm:$0x1]
  %v4377 = vld [vmem:[%s582 + $0x1f0] sm:$0x1]
  %v4378 = vmax.f32 %v4357, 0.0
  %v4379 = vmax.f32 %v4358, 0.0
  %v4380 = vmax.f32 %v4359, 0.0
  %v4381 = vmax.f32 %v4360, 0.0
  %v4382 = vmax.f32 %v4361, 0.0
  %v4383 = vmax.f32 %v4362, 0.0
  %v4384 = vmax.f32 %v4363, 0.0
  %v4385 = vmax.f32 %v4364, 0.0
  %v4386 = vmax.f32 %v4365, 0.0
  %v4387 = vmax.f32 %v4366, 0.0
  %v4388 = vmax.f32 %v4367, 0.0
  %v4389 = vmax.f32 %v4368, 0.0
  %v4390 = vmax.f32 %v4369, 0.0
  %v4391 = vmax.f32 %v4370, 0.0
  %v4392 = vmax.f32 %v4371, 0.0
  %v4393 = vmax.f32 %v4372, 0.0
  %v4394 = vmax.f32 %v4373, 0.0
  %v4395 = vmax.f32 %v4374, 0.0
  %v4396 = vmax.f32 %v4375, 0.0
  %v4397 = vmax.f32 %v4376, 0.0
  %v4398 = vmax.f32 %v4377, 0.0
  %s4399 = scalar_lea.vmem %s1, 54
  %v4400 = vld [vmem:[%s4399] ss:$8 sm:$0x7]
  %v4402 = vperm.slane %v4400, 0
  %v4403 = vperm.slane %v4400, 1
  %v4404 = vperm.slane %v4400, 2
  %v4408 = vmul.f32 %v4378, %v4402
  %v4409 = vmul.f32 %v4379, %v4403
  %v4410 = vmul.f32 %v4380, %v4404
  %v4411 = vmul.f32 %v4381, %v4402
  %v4412 = vmul.f32 %v4382, %v4403
  %v4413 = vmul.f32 %v4383, %v4404
  %v4414 = vmul.f32 %v4384, %v4402
  %v4415 = vmul.f32 %v4385, %v4403
  %v4416 = vmul.f32 %v4386, %v4404
  %v4417 = vmul.f32 %v4387, %v4402
  %v4418 = vmul.f32 %v4388, %v4403
  %v4419 = vmul.f32 %v4389, %v4404
  %v4420 = vmul.f32 %v4390, %v4402
  %v4421 = vmul.f32 %v4391, %v4403
  %v4422 = vmul.f32 %v4392, %v4404
  %v4423 = vmul.f32 %v4393, %v4402
  %v4424 = vmul.f32 %v4394, %v4403
  %v4425 = vmul.f32 %v4395, %v4404
  %v4426 = vmul.f32 %v4396, %v4402
  %v4427 = vmul.f32 %v4397, %v4403
  %v4428 = vmul.f32 %v4398, %v4404
  %v4429 = vadd.f32 %v4336, %v4408
  %v4430 = vadd.f32 %v4337, %v4409
  %v4431 = vadd.f32 %v4338, %v4410
  %v4432 = vadd.f32 %v4339, %v4411
  %v4433 = vadd.f32 %v4340, %v4412
  %v4434 = vadd.f32 %v4341, %v4413
  %v4435 = vadd.f32 %v4342, %v4414
  %v4436 = vadd.f32 %v4343, %v4415
  %v4437 = vadd.f32 %v4344, %v4416
  %v4438 = vadd.f32 %v4345, %v4417
  %v4439 = vadd.f32 %v4346, %v4418
  %v4440 = vadd.f32 %v4347, %v4419
  %v4441 = vadd.f32 %v4348, %v4420
  %v4442 = vadd.f32 %v4349, %v4421
  %v4443 = vadd.f32 %v4350, %v4422
  %v4444 = vadd.f32 %v4351, %v4423
  %v4445 = vadd.f32 %v4352, %v4424
  %v4446 = vadd.f32 %v4353, %v4425
  %v4447 = vadd.f32 %v4354, %v4426
  %v4448 = vadd.f32 %v4355, %v4427
  %v4449 = vadd.f32 %v4356, %v4428
  %v4450 = vld [vmem:[%s676 + $0x30] sm:$0xff]
  %v4451 = vld [vmem:[%s676 + $0x38] sm:$0xff]
  %v4452 = vld [vmem:[%s676 + $0x40] sm:$0xff]
  %v4453 = vld [vmem:[%s676 + $0x78] sm:$0xff]
  %v4454 = vld [vmem:[%s676 + $0x80] sm:$0xff]
  %v4455 = vld [vmem:[%s676 + $0x88] sm:$0xff]
  %v4456 = vld [vmem:[%s676 + $0xc0] sm:$0xff]
  %v4457 = vld [vmem:[%s676 + $0xc8] sm:$0xff]
  %v4458 = vld [vmem:[%s676 + $0xd0] sm:$0xff]
  %v4459 = vld [vmem:[%s676 + $0x108] sm:$0xff]
  %v4460 = vld [vmem:[%s676 + $0x110] sm:$0xff]
  %v4461 = vld [vmem:[%s676 + $0x118] sm:$0xff]
  %v4462 = vld [vmem:[%s676 + $0x150] sm:$0xff]
  %v4463 = vld [vmem:[%s676 + $0x158] sm:$0xff]
  %v4464 = vld [vmem:[%s676 + $0x160] sm:$0xff]
  %v4465 = vld [vmem:[%s676 + $0x198] sm:$0xff]
  %v4466 = vld [vmem:[%s676 + $0x1a0] sm:$0xff]
  %v4467 = vld [vmem:[%s676 + $0x1a8] sm:$0xff]
  %v4468 = vld [vmem:[%s676 + $0x1e0] sm:$0x1]
  %v4469 = vld [vmem:[%s676 + $0x1e8] sm:$0x1]
  %v4470 = vld [vmem:[%s676 + $0x1f0] sm:$0x1]
  %v4471 = vmax.f32 %v4450, 0.0
  %v4472 = vmax.f32 %v4451, 0.0
  %v4473 = vmax.f32 %v4452, 0.0
  %v4474 = vmax.f32 %v4453, 0.0
  %v4475 = vmax.f32 %v4454, 0.0
  %v4476 = vmax.f32 %v4455, 0.0
  %v4477 = vmax.f32 %v4456, 0.0
  %v4478 = vmax.f32 %v4457, 0.0
  %v4479 = vmax.f32 %v4458, 0.0
  %v4480 = vmax.f32 %v4459, 0.0
  %v4481 = vmax.f32 %v4460, 0.0
  %v4482 = vmax.f32 %v4461, 0.0
  %v4483 = vmax.f32 %v4462, 0.0
  %v4484 = vmax.f32 %v4463, 0.0
  %v4485 = vmax.f32 %v4464, 0.0
  %v4486 = vmax.f32 %v4465, 0.0
  %v4487 = vmax.f32 %v4466, 0.0
  %v4488 = vmax.f32 %v4467, 0.0
  %v4489 = vmax.f32 %v4468, 0.0
  %v4490 = vmax.f32 %v4469, 0.0
  %v4491 = vmax.f32 %v4470, 0.0
  %s4492 = scalar_lea.vmem %s1, 55
  %v4493 = vld [vmem:[%s4492] ss:$8 sm:$0x7]
  %v4495 = vperm.slane %v4493, 0
  %v4496 = vperm.slane %v4493, 1
  %v4497 = vperm.slane %v4493, 2
  %v4501 = vmul.f32 %v4471, %v4495
  %v4502 = vmul.f32 %v4472, %v4496
  %v4503 = vmul.f32 %v4473, %v4497
  %v4504 = vmul.f32 %v4474, %v4495
  %v4505 = vmul.f32 %v4475, %v4496
  %v4506 = vmul.f32 %v4476, %v4497
  %v4507 = vmul.f32 %v4477, %v4495
  %v4508 = vmul.f32 %v4478, %v4496
  %v4509 = vmul.f32 %v4479, %v4497
  %v4510 = vmul.f32 %v4480, %v4495
  %v4511 = vmul.f32 %v4481, %v4496
  %v4512 = vmul.f32 %v4482, %v4497
  %v4513 = vmul.f32 %v4483, %v4495
  %v4514 = vmul.f32 %v4484, %v4496
  %v4515 = vmul.f32 %v4485, %v4497
  %v4516 = vmul.f32 %v4486, %v4495
  %v4517 = vmul.f32 %v4487, %v4496
  %v4518 = vmul.f32 %v4488, %v4497
  %v4519 = vmul.f32 %v4489, %v4495
  %v4520 = vmul.f32 %v4490, %v4496
  %v4521 = vmul.f32 %v4491, %v4497
  %v4522 = vadd.f32 %v4429, %v4501
  %v4523 = vadd.f32 %v4430, %v4502
  %v4524 = vadd.f32 %v4431, %v4503
  %v4525 = vadd.f32 %v4432, %v4504
  %v4526 = vadd.f32 %v4433, %v4505
  %v4527 = vadd.f32 %v4434, %v4506
  %v4528 = vadd.f32 %v4435, %v4507
  %v4529 = vadd.f32 %v4436, %v4508
  %v4530 = vadd.f32 %v4437, %v4509
  %v4531 = vadd.f32 %v4438, %v4510
  %v4532 = vadd.f32 %v4439, %v4511
  %v4533 = vadd.f32 %v4440, %v4512
  %v4534 = vadd.f32 %v4441, %v4513
  %v4535 = vadd.f32 %v4442, %v4514
  %v4536 = vadd.f32 %v4443, %v4515
  %v4537 = vadd.f32 %v4444, %v4516
  %v4538 = vadd.f32 %v4445, %v4517
  %v4539 = vadd.f32 %v4446, %v4518
  %v4540 = vadd.f32 %v4447, %v4519
  %v4541 = vadd.f32 %v4448, %v4520
  %v4542 = vadd.f32 %v4449, %v4521
  %v4543 = vld [vmem:[%s770 + $0x30] sm:$0xff]
  %v4544 = vld [vmem:[%s770 + $0x38] sm:$0xff]
  %v4545 = vld [vmem:[%s770 + $0x40] sm:$0xff]
  %v4546 = vld [vmem:[%s770 + $0x78] sm:$0xff]
  %v4547 = vld [vmem:[%s770 + $0x80] sm:$0xff]
  %v4548 = vld [vmem:[%s770 + $0x88] sm:$0xff]
  %v4549 = vld [vmem:[%s770 + $0xc0] sm:$0xff]
  %v4550 = vld [vmem:[%s770 + $0xc8] sm:$0xff]
  %v4551 = vld [vmem:[%s770 + $0xd0] sm:$0xff]
  %v4552 = vld [vmem:[%s770 + $0x108] sm:$0xff]
  %v4553 = vld [vmem:[%s770 + $0x110] sm:$0xff]
  %v4554 = vld [vmem:[%s770 + $0x118] sm:$0xff]
  %v4555 = vld [vmem:[%s770 + $0x150] sm:$0xff]
  %v4556 = vld [vmem:[%s770 + $0x158] sm:$0xff]
  %v4557 = vld [vmem:[%s770 + $0x160] sm:$0xff]
  %v4558 = vld [vmem:[%s770 + $0x198] sm:$0xff]
  %v4559 = vld [vmem:[%s770 + $0x1a0] sm:$0xff]
  %v4560 = vld [vmem:[%s770 + $0x1a8] sm:$0xff]
  %v4561 = vld [vmem:[%s770 + $0x1e0] sm:$0x1]
  %v4562 = vld [vmem:[%s770 + $0x1e8] sm:$0x1]
  %v4563 = vld [vmem:[%s770 + $0x1f0] sm:$0x1]
  %v4564 = vmax.f32 %v4543, 0.0
  %v4565 = vmax.f32 %v4544, 0.0
  %v4566 = vmax.f32 %v4545, 0.0
  %v4567 = vmax.f32 %v4546, 0.0
  %v4568 = vmax.f32 %v4547, 0.0
  %v4569 = vmax.f32 %v4548, 0.0
  %v4570 = vmax.f32 %v4549, 0.0
  %v4571 = vmax.f32 %v4550, 0.0
  %v4572 = vmax.f32 %v4551, 0.0
  %v4573 = vmax.f32 %v4552, 0.0
  %v4574 = vmax.f32 %v4553, 0.0
  %v4575 = vmax.f32 %v4554, 0.0
  %v4576 = vmax.f32 %v4555, 0.0
  %v4577 = vmax.f32 %v4556, 0.0
  %v4578 = vmax.f32 %v4557, 0.0
  %v4579 = vmax.f32 %v4558, 0.0
  %v4580 = vmax.f32 %v4559, 0.0
  %v4581 = vmax.f32 %v4560, 0.0
  %v4582 = vmax.f32 %v4561, 0.0
  %v4583 = vmax.f32 %v4562, 0.0
  %v4584 = vmax.f32 %v4563, 0.0
  %s4585 = scalar_lea.vmem %s1, 120
  %v4586 = vld [vmem:[%s4585] ss:$8 sm:$0x7]
  %v4588 = vperm.slane %v4586, 0
  %v4589 = vperm.slane %v4586, 1
  %v4590 = vperm.slane %v4586, 2
  %v4594 = vmul.f32 %v4564, %v4588
  %v4595 = vmul.f32 %v4565, %v4589
  %v4596 = vmul.f32 %v4566, %v4590
  %v4597 = vmul.f32 %v4567, %v4588
  %v4598 = vmul.f32 %v4568, %v4589
  %v4599 = vmul.f32 %v4569, %v4590
  %v4600 = vmul.f32 %v4570, %v4588
  %v4601 = vmul.f32 %v4571, %v4589
  %v4602 = vmul.f32 %v4572, %v4590
  %v4603 = vmul.f32 %v4573, %v4588
  %v4604 = vmul.f32 %v4574, %v4589
  %v4605 = vmul.f32 %v4575, %v4590
  %v4606 = vmul.f32 %v4576, %v4588
  %v4607 = vmul.f32 %v4577, %v4589
  %v4608 = vmul.f32 %v4578, %v4590
  %v4609 = vmul.f32 %v4579, %v4588
  %v4610 = vmul.f32 %v4580, %v4589
  %v4611 = vmul.f32 %v4581, %v4590
  %v4612 = vmul.f32 %v4582, %v4588
  %v4613 = vmul.f32 %v4583, %v4589
  %v4614 = vmul.f32 %v4584, %v4590
  %v4615 = vadd.f32 %v4522, %v4594
  %v4616 = vadd.f32 %v4523, %v4595
  %v4617 = vadd.f32 %v4524, %v4596
  %v4618 = vadd.f32 %v4525, %v4597
  %v4619 = vadd.f32 %v4526, %v4598
  %v4620 = vadd.f32 %v4527, %v4599
  %v4621 = vadd.f32 %v4528, %v4600
  %v4622 = vadd.f32 %v4529, %v4601
  %v4623 = vadd.f32 %v4530, %v4602
  %v4624 = vadd.f32 %v4531, %v4603
  %v4625 = vadd.f32 %v4532, %v4604
  %v4626 = vadd.f32 %v4533, %v4605
  %v4627 = vadd.f32 %v4534, %v4606
  %v4628 = vadd.f32 %v4535, %v4607
  %v4629 = vadd.f32 %v4536, %v4608
  %v4630 = vadd.f32 %v4537, %v4609
  %v4631 = vadd.f32 %v4538, %v4610
  %v4632 = vadd.f32 %v4539, %v4611
  %v4633 = vadd.f32 %v4540, %v4612
  %v4634 = vadd.f32 %v4541, %v4613
  %v4635 = vadd.f32 %v4542, %v4614
  %v4636 = vadd.f32 %v4615, %v4618
  %v4637 = vadd.f32 %v4636, %v4621
  %v4638 = vadd.f32 %v4637, %v4624
  %v4639 = vadd.f32 %v4638, %v4627
  %v4640 = vadd.f32 %v4639, %v4630
  %v4641 = vsel %vm869, %v4633, 0.0
  %v4642 = vadd.f32 %v4640, %v4641
  %v4643 = vrot.slane %v4642, 4
  %v4644 = vadd.f32 %v4642, %v4643
  %v4645 = vrot.slane %v4644, 2
  %v4646 = vadd.f32 %v4644, %v4645
  %v4647 = vrot.slane %v4646, 1
  %v4648 = vadd.f32 %v4646, %v4647
  %v4649 = vadd.f32 %v4616, %v4619
  %v4650 = vadd.f32 %v4649, %v4622
  %v4651 = vadd.f32 %v4650, %v4625
  %v4652 = vadd.f32 %v4651, %v4628
  %v4653 = vadd.f32 %v4652, %v4631
  %v4654 = vsel %vm869, %v4634, 0.0
  %v4655 = vadd.f32 %v4653, %v4654
  %v4656 = vrot.slane %v4655, 4
  %v4657 = vadd.f32 %v4655, %v4656
  %v4658 = vrot.slane %v4657, 2
  %v4659 = vadd.f32 %v4657, %v4658
  %v4660 = vrot.slane %v4659, 1
  %v4661 = vadd.f32 %v4659, %v4660
  %v4662 = vadd.f32 %v4617, %v4620
  %v4663 = vadd.f32 %v4662, %v4623
  %v4664 = vadd.f32 %v4663, %v4626
  %v4665 = vadd.f32 %v4664, %v4629
  %v4666 = vadd.f32 %v4665, %v4632
  %v4667 = vsel %vm869, %v4635, 0.0
  %v4668 = vadd.f32 %v4666, %v4667
  %v4669 = vrot.slane %v4668, 4
  %v4670 = vadd.f32 %v4668, %v4669
  %v4671 = vrot.slane %v4670, 2
  %v4672 = vadd.f32 %v4670, %v4671
  %v4673 = vrot.slane %v4672, 1
  %v4674 = vadd.f32 %v4672, %v4673
  %v4675 = vmul.f32 %v4648, %v910
  %v4676 = vmul.f32 %v4661, %v910
  %v4677 = vmul.f32 %v4674, %v910
  %v4678 = vsub.f32 %v4615, %v4675
  %v4679 = vsub.f32 %v4616, %v4676
  %v4680 = vsub.f32 %v4617, %v4677
  %v4681 = vsub.f32 %v4618, %v4675
  %v4682 = vsub.f32 %v4619, %v4676
  %v4683 = vsub.f32 %v4620, %v4677
  %v4684 = vsub.f32 %v4621, %v4675
  %v4685 = vsub.f32 %v4622, %v4676
  %v4686 = vsub.f32 %v4623, %v4677
  %v4687 = vsub.f32 %v4624, %v4675
  %v4688 = vsub.f32 %v4625, %v4676
  %v4689 = vsub.f32 %v4626, %v4677
  %v4690 = vsub.f32 %v4627, %v4675
  %v4691 = vsub.f32 %v4628, %v4676
  %v4692 = vsub.f32 %v4629, %v4677
  %v4693 = vsub.f32 %v4630, %v4675
  %v4694 = vsub.f32 %v4631, %v4676
  %v4695 = vsub.f32 %v4632, %v4677
  %v4696 = vsub.f32 %v4633, %v4675
  %v4697 = vsub.f32 %v4634, %v4676
  %v4698 = vsub.f32 %v4635, %v4677
  %v4699 = vmul.f32 %v4678, %v4678
  %v4700 = vmul.f32 %v4679, %v4679
  %v4701 = vmul.f32 %v4680, %v4680
  %v4702 = vmul.f32 %v4681, %v4681
  %v4703 = vmul.f32 %v4682, %v4682
  %v4704 = vmul.f32 %v4683, %v4683
  %v4705 = vmul.f32 %v4684, %v4684
  %v4706 = vmul.f32 %v4685, %v4685
  %v4707 = vmul.f32 %v4686, %v4686
  %v4708 = vmul.f32 %v4687, %v4687
  %v4709 = vmul.f32 %v4688, %v4688
  %v4710 = vmul.f32 %v4689, %v4689
  %v4711 = vmul.f32 %v4690, %v4690
  %v4712 = vmul.f32 %v4691, %v4691
  %v4713 = vmul.f32 %v4692, %v4692
  %v4714 = vmul.f32 %v4693, %v4693
  %v4715 = vmul.f32 %v4694, %v4694
  %v4716 = vmul.f32 %v4695, %v4695
  %v4717 = vmul.f32 %v4696, %v4696
  %v4718 = vmul.f32 %v4697, %v4697
  %v4719 = vmul.f32 %v4698, %v4698
  %v4720 = vadd.f32 %v4699, %v4702
  %v4721 = vadd.f32 %v4720, %v4705
  %v4722 = vadd.f32 %v4721, %v4708
  %v4723 = vadd.f32 %v4722, %v4711
  %v4724 = vadd.f32 %v4723, %v4714
  %v4725 = vsel %vm869, %v4717, 0.0
  %v4726 = vadd.f32 %v4724, %v4725
  %v4727 = vrot.slane %v4726, 4
  %v4728 = vadd.f32 %v4726, %v4727
  %v4729 = vrot.slane %v4728, 2
  %v4730 = vadd.f32 %v4728, %v4729
  %v4731 = vrot.slane %v4730, 1
  %v4732 = vadd.f32 %v4730, %v4731
  %v4733 = vadd.f32 %v4700, %v4703
  %v4734 = vadd.f32 %v4733, %v4706
  %v4735 = vadd.f32 %v4734, %v4709
  %v4736 = vadd.f32 %v4735, %v4712
  %v4737 = vadd.f32 %v4736, %v4715
  %v4738 = vsel %vm869, %v4718, 0.0
  %v4739 = vadd.f32 %v4737, %v4738
  %v4740 = vrot.slane %v4739, 4
  %v4741 = vadd.f32 %v4739, %v4740
  %v4742 = vrot.slane %v4741, 2
  %v4743 = vadd.f32 %v4741, %v4742
  %v4744 = vrot.slane %v4743, 1
  %v4745 = vadd.f32 %v4743, %v4744
  %v4746 = vadd.f32 %v4701, %v4704
  %v4747 = vadd.f32 %v4746, %v4707
  %v4748 = vadd.f32 %v4747, %v4710
  %v4749 = vadd.f32 %v4748, %v4713
  %v4750 = vadd.f32 %v4749, %v4716
  %v4751 = vsel %vm869, %v4719, 0.0
  %v4752 = vadd.f32 %v4750, %v4751
  %v4753 = vrot.slane %v4752, 4
  %v4754 = vadd.f32 %v4752, %v4753
  %v4755 = vrot.slane %v4754, 2
  %v4756 = vadd.f32 %v4754, %v4755
  %v4757 = vrot.slane %v4756, 1
  %v4758 = vadd.f32 %v4756, %v4757
  %v4759 = vmul.f32 %v4732, %v910
  %v4760 = vmul.f32 %v4745, %v910
  %v4761 = vmul.f32 %v4758, %v910
  %v4762 = vadd.f32 %v4759, 1e-05
  %v4763 = vadd.f32 %v4760, 1e-05
  %v4764 = vadd.f32 %v4761, 1e-05
  %v4765 = vrsqrt.pop %v4762
  %v4766 = vmul.f32 %v4765, %v4762
  %v4767 = vmul.f32 %v4766, %v4765
  %v4768 = vmul.f32 0.5, %v4767
  %v4769 = vsub.f32 1.5, %v4768
  %v4770 = vmul.f32 %v4765, %v4769
  %vm4771 = vweird.f32 %v4762
  %vm4772 = vweird.f32 %v4765
  %vm4773 = vmor %vm4771, %vm4772
  %v4774 = vsel %vm4773, %v4765, %v4770
  %v4775 = vrsqrt.pop %v4763
  %v4776 = vmul.f32 %v4775, %v4763
  %v4777 = vmul.f32 %v4776, %v4775
  %v4778 = vmul.f32 0.5, %v4777
  %v4779 = vsub.f32 1.5, %v4778
  %v4780 = vmul.f32 %v4775, %v4779
  %vm4781 = vweird.f32 %v4763
  %vm4782 = vweird.f32 %v4775
  %vm4783 = vmor %vm4781, %vm4782
  %v4784 = vsel %vm4783, %v4775, %v4780
  %v4785 = vrsqrt.pop %v4764
  %v4786 = vmul.f32 %v4785, %v4764
  %v4787 = vmul.f32 %v4786, %v4785
  %v4788 = vmul.f32 0.5, %v4787
  %v4789 = vsub.f32 1.5, %v4788
  %v4790 = vmul.f32 %v4785, %v4789
  %vm4791 = vweird.f32 %v4764
  %vm4792 = vweird.f32 %v4785
  %vm4793 = vmor %vm4791, %vm4792
  %v4794 = vsel %vm4793, %v4785, %v4790
  %v4795 = vmul.f32 %v4678, %v4774
  %v4796 = vmul.f32 %v4679, %v4784
  %v4797 = vmul.f32 %v4680, %v4794
  %v4798 = vmul.f32 %v4681, %v4774
  %v4799 = vmul.f32 %v4682, %v4784
  %v4800 = vmul.f32 %v4683, %v4794
  %v4801 = vmul.f32 %v4684, %v4774
  %v4802 = vmul.f32 %v4685, %v4784
  %v4803 = vmul.f32 %v4686, %v4794
  %v4804 = vmul.f32 %v4687, %v4774
  %v4805 = vmul.f32 %v4688, %v4784
  %v4806 = vmul.f32 %v4689, %v4794
  %v4807 = vmul.f32 %v4690, %v4774
  %v4808 = vmul.f32 %v4691, %v4784
  %v4809 = vmul.f32 %v4692, %v4794
  %v4810 = vmul.f32 %v4693, %v4774
  %v4811 = vmul.f32 %v4694, %v4784
  %v4812 = vmul.f32 %v4695, %v4794
  %v4813 = vmul.f32 %v4696, %v4774
  %v4814 = vmul.f32 %v4697, %v4784
  %v4815 = vmul.f32 %v4698, %v4794
  %v4816 = vld [vmem:[%s2 + $0x6] sm:$0x7]
  %v4818 = vperm.slane %v4816, 0
  %v4819 = vperm.slane %v4816, 1
  %v4820 = vperm.slane %v4816, 2
  %v4824 = vmul.f32 %v4795, %v4818
  %v4825 = vmul.f32 %v4796, %v4819
  %v4826 = vmul.f32 %v4797, %v4820
  %v4827 = vmul.f32 %v4798, %v4818
  %v4828 = vmul.f32 %v4799, %v4819
  %v4829 = vmul.f32 %v4800, %v4820
  %v4830 = vmul.f32 %v4801, %v4818
  %v4831 = vmul.f32 %v4802, %v4819
  %v4832 = vmul.f32 %v4803, %v4820
  %v4833 = vmul.f32 %v4804, %v4818
  %v4834 = vmul.f32 %v4805, %v4819
  %v4835 = vmul.f32 %v4806, %v4820
  %v4836 = vmul.f32 %v4807, %v4818
  %v4837 = vmul.f32 %v4808, %v4819
  %v4838 = vmul.f32 %v4809, %v4820
  %v4839 = vmul.f32 %v4810, %v4818
  %v4840 = vmul.f32 %v4811, %v4819
  %v4841 = vmul.f32 %v4812, %v4820
  %v4842 = vmul.f32 %v4813, %v4818
  %v4843 = vmul.f32 %v4814, %v4819
  %v4844 = vmul.f32 %v4815, %v4820
  %v4845 = vld [vmem:[%s3 + $0x6] sm:$0x7]
  %v4847 = vperm.slane %v4845, 0
  %v4848 = vperm.slane %v4845, 1
  %v4849 = vperm.slane %v4845, 2
  %v4853 = vadd.f32 %v4824, %v4847
  %v4854 = vadd.f32 %v4825, %v4848
  %v4855 = vadd.f32 %v4826, %v4849
  %v4856 = vadd.f32 %v4827, %v4847
  %v4857 = vadd.f32 %v4828, %v4848
  %v4858 = vadd.f32 %v4829, %v4849
  %v4859 = vadd.f32 %v4830, %v4847
  %v4860 = vadd.f32 %v4831, %v4848
  %v4861 = vadd.f32 %v4832, %v4849
  %v4862 = vadd.f32 %v4833, %v4847
  %v4863 = vadd.f32 %v4834, %v4848
  %v4864 = vadd.f32 %v4835, %v4849
  %v4865 = vadd.f32 %v4836, %v4847
  %v4866 = vadd.f32 %v4837, %v4848
  %v4867 = vadd.f32 %v4838, %v4849
  %v4868 = vadd.f32 %v4839, %v4847
  %v4869 = vadd.f32 %v4840, %v4848
  %v4870 = vadd.f32 %v4841, %v4849
  %v4871 = vadd.f32 %v4842, %v4847
  %v4872 = vadd.f32 %v4843, %v4848
  %v4873 = vadd.f32 %v4844, %v4849
  %v4874 = vmax.f32 %v4853, 0.0
  %v4875 = vmax.f32 %v4854, 0.0
  %v4876 = vmax.f32 %v4855, 0.0
  %v4877 = vmax.f32 %v4856, 0.0
  %v4878 = vmax.f32 %v4857, 0.0
  %v4879 = vmax.f32 %v4858, 0.0
  %v4880 = vmax.f32 %v4859, 0.0
  %v4881 = vmax.f32 %v4860, 0.0
  %v4882 = vmax.f32 %v4861, 0.0
  %v4883 = vmax.f32 %v4862, 0.0
  %v4884 = vmax.f32 %v4863, 0.0
  %v4885 = vmax.f32 %v4864, 0.0
  %v4886 = vmax.f32 %v4865, 0.0
  %v4887 = vmax.f32 %v4866, 0.0
  %v4888 = vmax.f32 %v4867, 0.0
  %v4889 = vmax.f32 %v4868, 0.0
  %v4890 = vmax.f32 %v4869, 0.0
  %v4891 = vmax.f32 %v4870, 0.0
  %v4892 = vmax.f32 %v4871, 0.0
  %v4893 = vmax.f32 %v4872, 0.0
  %v4894 = vmax.f32 %v4873, 0.0
  %v4895 = vpack.c.bf16 %v4877, %v4874
  %v4896 = vpack.c.bf16 %v4878, %v4875
  %v4897 = vpack.c.bf16 %v4879, %v4876
  %v4898 = vpack.c.bf16 %v4883, %v4880
  %v4899 = vpack.c.bf16 %v4884, %v4881
  %v4900 = vpack.c.bf16 %v4885, %v4882
  %v4901 = vpack.c.bf16 %v4889, %v4886
  %v4902 = vpack.c.bf16 %v4890, %v4887
  %v4903 = vpack.c.bf16 %v4891, %v4888
  %v4904 = vpack.c.bf16 %v4892, %v4892
  %v4905 = vpack.c.bf16 %v4893, %v4893
  %v4906 = vpack.c.bf16 %v4894, %v4894
  %v4907 = vld [vmem:[%s4 + $0x480] sm:$0xff]
  %v4908 = vld [vmem:[%s4 + $0x488] sm:$0xf]
  %v4909 = vld [vmem:[%s4 + $0x48c] sm:$0xff]
  %v4910 = vld [vmem:[%s4 + $0x494] sm:$0xf]
  %v4911 = vld [vmem:[%s4 + $0x498] sm:$0xff]
  %v4912 = vld [vmem:[%s4 + $0x4a0] sm:$0xf]
  %v4913 = vld [vmem:[%s4 + $0x4a4] sm:$0xff]
  %v4914 = vld [vmem:[%s4 + $0x4ac] sm:$0xf]
  %v4915 = vld [vmem:[%s4 + $0x4b0] sm:$0xff]
  %v4916 = vld [vmem:[%s4 + $0x4b8] sm:$0xf]
  %v4917 = vld [vmem:[%s4 + $0x4bc] sm:$0xff]
  %v4918 = vld [vmem:[%s4 + $0x4c4] sm:$0xf]
  %v4919 = vld [vmem:[%s4 + $0x4c8] sm:$0xff]
  %v4920 = vld [vmem:[%s4 + $0x4d0] sm:$0xf]
  %v4921 = vld [vmem:[%s4 + $0x4d4] sm:$0xff]
  %v4922 = vld [vmem:[%s4 + $0x4dc] sm:$0xf]
  %v4923 = vld [vmem:[%s4 + $0x4e0] sm:$0xff]
  %v4924 = vld [vmem:[%s4 + $0x4e8] sm:$0xf]
  %v4925 = vld [vmem:[%s4 + $0x4ec] sm:$0xff]
  %v4926 = vld [vmem:[%s4 + $0x4f4] sm:$0xf]
  %v4927 = vld [vmem:[%s4 + $0x4f8] sm:$0xff]
  %v4928 = vld [vmem:[%s4 + $0x500] sm:$0xf]
  %v4929 = vld [vmem:[%s4 + $0x504] sm:$0xff]
  %v4930 = vld [vmem:[%s4 + $0x50c] sm:$0xf]
  %v4931 = vld [vmem:[%s4 + $0x510] sm:$0xff]
  %v4932 = vld [vmem:[%s4 + $0x518] sm:$0xf]
  %v4933 = vld [vmem:[%s4 + $0x51c] sm:$0xff]
  %v4934 = vld [vmem:[%s4 + $0x524] sm:$0xf]
  %v4935 = vld [vmem:[%s4 + $0x528] sm:$0xff]
  %v4936 = vld [vmem:[%s4 + $0x530] sm:$0xf]
  %v4937 = vld [vmem:[%s4 + $0x534] sm:$0xff]
  %v4938 = vld [vmem:[%s4 + $0x53c] sm:$0xf]
  %v4939 = vld [vmem:[%s4 + $0x540] sm:$0xff]
  %v4940 = vld [vmem:[%s4 + $0x548] sm:$0xf]
  %v4941 = vld [vmem:[%s4 + $0x54c] sm:$0xff]
  %v4942 = vld [vmem:[%s4 + $0x554] sm:$0xf]
  %v4943 = vld [vmem:[%s4 + $0x558] sm:$0xff]
  %v4944 = vld [vmem:[%s4 + $0x560] sm:$0xf]
  %v4945 = vld [vmem:[%s4 + $0x564] sm:$0xff]
  %v4946 = vld [vmem:[%s4 + $0x56c] sm:$0xf]
  %v4947 = vld [vmem:[%s4 + $0x570] sm:$0xff]
  %v4948 = vld [vmem:[%s4 + $0x578] sm:$0xf]
  %v4949 = vld [vmem:[%s4 + $0x57c] sm:$0xff]
  %v4950 = vld [vmem:[%s4 + $0x584] sm:$0xf]
  %v4951 = vld [vmem:[%s4 + $0x588] sm:$0xff]
  %v4952 = vld [vmem:[%s4 + $0x590] sm:$0xf]
  %v4953 = vld [vmem:[%s4 + $0x594] sm:$0xff]
  %v4954 = vld [vmem:[%s4 + $0x59c] sm:$0xf]
  %v4955 = vld [vmem:[%s4 + $0x5a0] sm:$0xff]
  %v4956 = vld [vmem:[%s4 + $0x5a8] sm:$0xf]
  %v4957 = vld [vmem:[%s4 + $0x5ac] sm:$0xff]
  %v4958 = vld [vmem:[%s4 + $0x5b4] sm:$0xf]
  %v4959 = vld [vmem:[%s4 + $0x5b8] sm:$0xff]
  %v4960 = vld [vmem:[%s4 + $0x5c0] sm:$0xf]
  %v4961 = vld [vmem:[%s4 + $0x5c4] sm:$0xff]
  %v4962 = vld [vmem:[%s4 + $0x5cc] sm:$0xf]
  %v4963 = vld [vmem:[%s4 + $0x5d0] sm:$0xff]
  %v4964 = vld [vmem:[%s4 + $0x5d8] sm:$0xf]
  %v4965 = vld [vmem:[%s4 + $0x5dc] sm:$0xff]
  %v4966 = vld [vmem:[%s4 + $0x5e4] sm:$0xf]
  %v4967 = vld [vmem:[%s4 + $0x5e8] sm:$0xff]
  %v4968 = vld [vmem:[%s4 + $0x5f0] sm:$0xf]
  %v4969 = vld [vmem:[%s4 + $0x5f4] sm:$0xff]
  %v4970 = vld [vmem:[%s4 + $0x5fc] sm:$0xf]
  %v4971 = vld [vmem:[%s4 + $0x600] sm:$0xff]
  %v4972 = vld [vmem:[%s4 + $0x608] sm:$0xf]
  %v4973 = vld [vmem:[%s4 + $0x60c] sm:$0xff]
  %v4974 = vld [vmem:[%s4 + $0x614] sm:$0xf]
  %v4975 = vld [vmem:[%s4 + $0x618] sm:$0xff]
  %v4976 = vld [vmem:[%s4 + $0x620] sm:$0xf]
  %v4977 = vld [vmem:[%s4 + $0x624] sm:$0xff]
  %v4978 = vld [vmem:[%s4 + $0x62c] sm:$0xf]
  %v4979 = vld [vmem:[%s4 + $0x630] sm:$0xff]
  %v4980 = vld [vmem:[%s4 + $0x638] sm:$0xf]
  %v4981 = vld [vmem:[%s4 + $0x63c] sm:$0xff]
  %v4982 = vld [vmem:[%s4 + $0x644] sm:$0xf]
  %v4983 = vld [vmem:[%s4 + $0x648] sm:$0xff]
  %v4984 = vld [vmem:[%s4 + $0x650] sm:$0xf]
  %v4985 = vld [vmem:[%s4 + $0x654] sm:$0xff]
  %v4986 = vld [vmem:[%s4 + $0x65c] sm:$0xf]
  %v4987 = vld [vmem:[%s4 + $0x660] sm:$0xff]
  %v4988 = vld [vmem:[%s4 + $0x668] sm:$0xf]
  %v4989 = vld [vmem:[%s4 + $0x66c] sm:$0xff]
  %v4990 = vld [vmem:[%s4 + $0x674] sm:$0xf]
  %v4991 = vld [vmem:[%s4 + $0x678] sm:$0xff]
  %v4992 = vld [vmem:[%s4 + $0x680] sm:$0xf]
  %v4993 = vld [vmem:[%s4 + $0x684] sm:$0xff]
  %v4994 = vld [vmem:[%s4 + $0x68c] sm:$0xf]
  %v4995 = vld [vmem:[%s4 + $0x690] sm:$0xff]
  %v4996 = vld [vmem:[%s4 + $0x698] sm:$0xf]
  %v4997 = vld [vmem:[%s4 + $0x69c] sm:$0xff]
  %v4998 = vld [vmem:[%s4 + $0x6a4] sm:$0xf]
  %v4999 = vld [vmem:[%s4 + $0x6a8] sm:$0xff]
  %v5000 = vld [vmem:[%s4 + $0x6b0] sm:$0xf]
  %v5001 = vld [vmem:[%s4 + $0x6b4] sm:$0xff]
  %v5002 = vld [vmem:[%s4 + $0x6bc] sm:$0xf]
  %v5099 = vunpack.c.l.b16 %v4907
  %v5100 = vunpack.c.h.b16 %v4907
  %v5101 = vunpack.c.l.b16 %v4908
  %v5102 = vunpack.c.l.b16 %v4909
  %v5103 = vunpack.c.h.b16 %v4909
  %v5104 = vunpack.c.l.b16 %v4910
  %v5105 = vunpack.c.l.b16 %v4911
  %v5106 = vunpack.c.h.b16 %v4911
  %v5107 = vunpack.c.l.b16 %v4912
  %v5108 = vunpack.c.l.b16 %v4913
  %v5109 = vunpack.c.h.b16 %v4913
  %v5110 = vunpack.c.l.b16 %v4914
  %v5111 = vunpack.c.l.b16 %v4915
  %v5112 = vunpack.c.h.b16 %v4915
  %v5113 = vunpack.c.l.b16 %v4916
  %v5114 = vunpack.c.l.b16 %v4917
  %v5115 = vunpack.c.h.b16 %v4917
  %v5116 = vunpack.c.l.b16 %v4918
  %v5117 = vunpack.c.l.b16 %v4919
  %v5118 = vunpack.c.h.b16 %v4919
  %v5119 = vunpack.c.l.b16 %v4920
  %v5120 = vunpack.c.l.b16 %v4921
  %v5121 = vunpack.c.h.b16 %v4921
  %v5122 = vunpack.c.l.b16 %v4922
  %v5123 = vunpack.c.l.b16 %v4923
  %v5124 = vunpack.c.h.b16 %v4923
  %v5125 = vunpack.c.l.b16 %v4924
  %v5126 = vunpack.c.l.b16 %v4925
  %v5127 = vunpack.c.h.b16 %v4925
  %v5128 = vunpack.c.l.b16 %v4926
  %v5129 = vunpack.c.l.b16 %v4927
  %v5130 = vunpack.c.h.b16 %v4927
  %v5131 = vunpack.c.l.b16 %v4928
  %v5132 = vunpack.c.l.b16 %v4929
  %v5133 = vunpack.c.h.b16 %v4929
  %v5134 = vunpack.c.l.b16 %v4930
  %v5135 = vunpack.c.l.b16 %v4931
  %v5136 = vunpack.c.h.b16 %v4931
  %v5137 = vunpack.c.l.b16 %v4932
  %v5138 = vunpack.c.l.b16 %v4933
  %v5139 = vunpack.c.h.b16 %v4933
  %v5140 = vunpack.c.l.b16 %v4934
  %v5141 = vunpack.c.l.b16 %v4935
  %v5142 = vunpack.c.h.b16 %v4935
  %v5143 = vunpack.c.l.b16 %v4936
  %v5144 = vunpack.c.l.b16 %v4937
  %v5145 = vunpack.c.h.b16 %v4937
  %v5146 = vunpack.c.l.b16 %v4938
  %v5147 = vunpack.c.l.b16 %v4939
  %v5148 = vunpack.c.h.b16 %v4939
  %v5149 = vunpack.c.l.b16 %v4940
  %v5150 = vunpack.c.l.b16 %v4941
  %v5151 = vunpack.c.h.b16 %v4941
  %v5152 = vunpack.c.l.b16 %v4942
  %v5153 = vunpack.c.l.b16 %v4943
  %v5154 = vunpack.c.h.b16 %v4943
  %v5155 = vunpack.c.l.b16 %v4944
  %v5156 = vunpack.c.l.b16 %v4945
  %v5157 = vunpack.c.h.b16 %v4945
  %v5158 = vunpack.c.l.b16 %v4946
  %v5159 = vunpack.c.l.b16 %v4947
  %v5160 = vunpack.c.h.b16 %v4947
  %v5161 = vunpack.c.l.b16 %v4948
  %v5162 = vunpack.c.l.b16 %v4949
  %v5163 = vunpack.c.h.b16 %v4949
  %v5164 = vunpack.c.l.b16 %v4950
  %v5165 = vunpack.c.l.b16 %v4951
  %v5166 = vunpack.c.h.b16 %v4951
  %v5167 = vunpack.c.l.b16 %v4952
  %v5168 = vunpack.c.l.b16 %v4953
  %v5169 = vunpack.c.h.b16 %v4953
  %v5170 = vunpack.c.l.b16 %v4954
  %v5171 = vunpack.c.l.b16 %v4955
  %v5172 = vunpack.c.h.b16 %v4955
  %v5173 = vunpack.c.l.b16 %v4956
  %v5174 = vunpack.c.l.b16 %v4957
  %v5175 = vunpack.c.h.b16 %v4957
  %v5176 = vunpack.c.l.b16 %v4958
  %v5177 = vunpack.c.l.b16 %v4959
  %v5178 = vunpack.c.h.b16 %v4959
  %v5179 = vunpack.c.l.b16 %v4960
  %v5180 = vunpack.c.l.b16 %v4961
  %v5181 = vunpack.c.h.b16 %v4961
  %v5182 = vunpack.c.l.b16 %v4962
  %v5183 = vunpack.c.l.b16 %v4963
  %v5184 = vunpack.c.h.b16 %v4963
  %v5185 = vunpack.c.l.b16 %v4964
  %v5186 = vunpack.c.l.b16 %v4965
  %v5187 = vunpack.c.h.b16 %v4965
  %v5188 = vunpack.c.l.b16 %v4966
  %v5189 = vunpack.c.l.b16 %v4967
  %v5190 = vunpack.c.h.b16 %v4967
  %v5191 = vunpack.c.l.b16 %v4968
  %v5192 = vunpack.c.l.b16 %v4969
  %v5193 = vunpack.c.h.b16 %v4969
  %v5194 = vunpack.c.l.b16 %v4970
  %v5195 = vunpack.c.l.b16 %v4971
  %v5196 = vunpack.c.h.b16 %v4971
  %v5197 = vunpack.c.l.b16 %v4972
  %v5198 = vunpack.c.l.b16 %v4973
  %v5199 = vunpack.c.h.b16 %v4973
  %v5200 = vunpack.c.l.b16 %v4974
  %v5201 = vunpack.c.l.b16 %v4975
  %v5202 = vunpack.c.h.b16 %v4975
  %v5203 = vunpack.c.l.b16 %v4976
  %v5204 = vunpack.c.l.b16 %v4977
  %v5205 = vunpack.c.h.b16 %v4977
  %v5206 = vunpack.c.l.b16 %v4978
  %v5207 = vunpack.c.l.b16 %v4979
  %v5208 = vunpack.c.h.b16 %v4979
  %v5209 = vunpack.c.l.b16 %v4980
  %v5210 = vunpack.c.l.b16 %v4981
  %v5211 = vunpack.c.h.b16 %v4981
  %v5212 = vunpack.c.l.b16 %v4982
  %v5213 = vunpack.c.l.b16 %v4983
  %v5214 = vunpack.c.h.b16 %v4983
  %v5215 = vunpack.c.l.b16 %v4984
  %v5216 = vunpack.c.l.b16 %v4985
  %v5217 = vunpack.c.h.b16 %v4985
  %v5218 = vunpack.c.l.b16 %v4986
  %v5219 = vunpack.c.l.b16 %v4987
  %v5220 = vunpack.c.h.b16 %v4987
  %v5221 = vunpack.c.l.b16 %v4988
  %v5222 = vunpack.c.l.b16 %v4989
  %v5223 = vunpack.c.h.b16 %v4989
  %v5224 = vunpack.c.l.b16 %v4990
  %v5225 = vunpack.c.l.b16 %v4991
  %v5226 = vunpack.c.h.b16 %v4991
  %v5227 = vunpack.c.l.b16 %v4992
  %v5228 = vunpack.c.l.b16 %v4993
  %v5229 = vunpack.c.h.b16 %v4993
  %v5230 = vunpack.c.l.b16 %v4994
  %v5231 = vunpack.c.l.b16 %v4995
  %v5232 = vunpack.c.h.b16 %v4995
  %v5233 = vunpack.c.l.b16 %v4996
  %v5234 = vunpack.c.l.b16 %v4997
  %v5235 = vunpack.c.h.b16 %v4997
  %v5236 = vunpack.c.l.b16 %v4998
  %v5237 = vunpack.c.l.b16 %v4999
  %v5238 = vunpack.c.h.b16 %v4999
  %v5239 = vunpack.c.l.b16 %v5000
  %v5240 = vunpack.c.l.b16 %v5001
  %v5241 = vunpack.c.h.b16 %v5001
  %v5242 = vunpack.c.l.b16 %v5002
  %v5243 = vpack.c.b16 %v5102, %v5099
  %v5244 = vpack.c.b16 %v5103, %v5100
  %v5245 = vpack.c.b16 %v5104, %v5101
  %v5246 = vpack.c.b16 %v5108, %v5105
  %v5247 = vpack.c.b16 %v5109, %v5106
  %v5248 = vpack.c.b16 %v5110, %v5107
  %v5249 = vpack.c.b16 %v5114, %v5111
  %v5250 = vpack.c.b16 %v5115, %v5112
  %v5251 = vpack.c.b16 %v5116, %v5113
  %v5252 = vpack.c.b16 %v5120, %v5117
  %v5253 = vpack.c.b16 %v5121, %v5118
  %v5254 = vpack.c.b16 %v5122, %v5119
  %v5255 = vpack.c.b16 %v5126, %v5123
  %v5256 = vpack.c.b16 %v5127, %v5124
  %v5257 = vpack.c.b16 %v5128, %v5125
  %v5258 = vpack.c.b16 %v5132, %v5129
  %v5259 = vpack.c.b16 %v5133, %v5130
  %v5260 = vpack.c.b16 %v5134, %v5131
  %v5261 = vpack.c.b16 %v5138, %v5135
  %v5262 = vpack.c.b16 %v5139, %v5136
  %v5263 = vpack.c.b16 %v5140, %v5137
  %v5264 = vpack.c.b16 %v5144, %v5141
  %v5265 = vpack.c.b16 %v5145, %v5142
  %v5266 = vpack.c.b16 %v5146, %v5143
  %v5267 = vpack.c.b16 %v5150, %v5147
  %v5268 = vpack.c.b16 %v5151, %v5148
  %v5269 = vpack.c.b16 %v5152, %v5149
  %v5270 = vpack.c.b16 %v5156, %v5153
  %v5271 = vpack.c.b16 %v5157, %v5154
  %v5272 = vpack.c.b16 %v5158, %v5155
  %v5273 = vpack.c.b16 %v5162, %v5159
  %v5274 = vpack.c.b16 %v5163, %v5160
  %v5275 = vpack.c.b16 %v5164, %v5161
  %v5276 = vpack.c.b16 %v5168, %v5165
  %v5277 = vpack.c.b16 %v5169, %v5166
  %v5278 = vpack.c.b16 %v5170, %v5167
  %v5279 = vpack.c.b16 %v5174, %v5171
  %v5280 = vpack.c.b16 %v5175, %v5172
  %v5281 = vpack.c.b16 %v5176, %v5173
  %v5282 = vpack.c.b16 %v5180, %v5177
  %v5283 = vpack.c.b16 %v5181, %v5178
  %v5284 = vpack.c.b16 %v5182, %v5179
  %v5285 = vpack.c.b16 %v5186, %v5183
  %v5286 = vpack.c.b16 %v5187, %v5184
  %v5287 = vpack.c.b16 %v5188, %v5185
  %v5288 = vpack.c.b16 %v5192, %v5189
  %v5289 = vpack.c.b16 %v5193, %v5190
  %v5290 = vpack.c.b16 %v5194, %v5191
  %v5291 = vpack.c.b16 %v5198, %v5195
  %v5292 = vpack.c.b16 %v5199, %v5196
  %v5293 = vpack.c.b16 %v5200, %v5197
  %v5294 = vpack.c.b16 %v5204, %v5201
  %v5295 = vpack.c.b16 %v5205, %v5202
  %v5296 = vpack.c.b16 %v5206, %v5203
  %v5297 = vpack.c.b16 %v5210, %v5207
  %v5298 = vpack.c.b16 %v5211, %v5208
  %v5299 = vpack.c.b16 %v5212, %v5209
  %v5300 = vpack.c.b16 %v5216, %v5213
  %v5301 = vpack.c.b16 %v5217, %v5214
  %v5302 = vpack.c.b16 %v5218, %v5215
  %v5303 = vpack.c.b16 %v5222, %v5219
  %v5304 = vpack.c.b16 %v5223, %v5220
  %v5305 = vpack.c.b16 %v5224, %v5221
  %v5306 = vpack.c.b16 %v5228, %v5225
  %v5307 = vpack.c.b16 %v5229, %v5226
  %v5308 = vpack.c.b16 %v5230, %v5227
  %v5309 = vpack.c.b16 %v5234, %v5231
  %v5310 = vpack.c.b16 %v5235, %v5232
  %v5311 = vpack.c.b16 %v5236, %v5233
  %v5312 = vpack.c.b16 %v5240, %v5237
  %v5313 = vpack.c.b16 %v5241, %v5238
  %v5314 = vpack.c.b16 %v5242, %v5239
  %5387 = vmatpush.bf16.msra.mxu0 %v5264
  %5388 = vmatpush.bf16.msra.mxu0 %v5261
  %5389 = vmatpush.bf16.msra.mxu0 %v5258
  %5390 = vmatpush.bf16.msra.mxu0 %v5255
  %5391 = vmatpush.bf16.msra.mxu0 %v5252
  %5392 = vmatpush.bf16.msra.mxu0 %v5249
  %5393 = vmatpush.bf16.msra.mxu0 %v5246
  %5394 = vmatpush.bf16.msra.mxu0 %v5243
  %5395 = vmatmul.bf16.gmra.mxu0 %v4895
  %v5396 = vpop.f32.mrf.mxu0
  %v5397 = vadd.f32 0.0, %v5396
  %v5398 = vpop.f32.mrf.mxu0
  %v5399 = vadd.f32 0.0, %v5398
  %5400 = vmatmul.bf16.gmra.mxu0 %v4898
  %v5401 = vpop.f32.mrf.mxu0
  %v5402 = vadd.f32 0.0, %v5401
  %v5403 = vpop.f32.mrf.mxu0
  %v5404 = vadd.f32 0.0, %v5403
  %5405 = vmatmul.bf16.gmra.mxu0 %v4901
  %v5406 = vpop.f32.mrf.mxu0
  %v5407 = vadd.f32 0.0, %v5406
  %v5408 = vpop.f32.mrf.mxu0
  %v5409 = vadd.f32 0.0, %v5408
  %5410 = vmatmul.bf16.gmra.mxu0 %v4904
  %v5411 = vpop.f32.mrf.mxu0
  %v5412 = vadd.f32 0.0, %v5411
  %v5413 = vpop.f32.mrf.mxu0
  %5414 = vdwg.mxu0
  %5415 = vmatpush.bf16.msra.mxu0 %v5288
  %5416 = vmatpush.bf16.msra.mxu0 %v5285
  %5417 = vmatpush.bf16.msra.mxu0 %v5282
  %5418 = vmatpush.bf16.msra.mxu0 %v5279
  %5419 = vmatpush.bf16.msra.mxu0 %v5276
  %5420 = vmatpush.bf16.msra.mxu0 %v5273
  %5421 = vmatpush.bf16.msra.mxu0 %v5270
  %5422 = vmatpush.bf16.msra.mxu0 %v5267
  %5423 = vmatmul.bf16.gmra.mxu0 %v4896
  %v5424 = vpop.f32.mrf.mxu0
  %v5425 = vadd.f32 %v5397, %v5424
  %v5426 = vpop.f32.mrf.mxu0
  %v5427 = vadd.f32 %v5399, %v5426
  %5428 = vmatmul.bf16.gmra.mxu0 %v4899
  %v5429 = vpop.f32.mrf.mxu0
  %v5430 = vadd.f32 %v5402, %v5429
  %v5431 = vpop.f32.mrf.mxu0
  %v5432 = vadd.f32 %v5404, %v5431
  %5433 = vmatmul.bf16.gmra.mxu0 %v4902
  %v5434 = vpop.f32.mrf.mxu0
  %v5435 = vadd.f32 %v5407, %v5434
  %v5436 = vpop.f32.mrf.mxu0
  %v5437 = vadd.f32 %v5409, %v5436
  %5438 = vmatmul.bf16.gmra.mxu0 %v4905
  %v5439 = vpop.f32.mrf.mxu0
  %v5440 = vadd.f32 %v5412, %v5439
  %v5441 = vpop.f32.mrf.mxu0
  %5442 = vdwg.mxu0
  %5443 = vmatpush.bf16.msra.mxu0 %v5312
  %5444 = vmatpush.bf16.msra.mxu0 %v5309
  %5445 = vmatpush.bf16.msra.mxu0 %v5306
  %5446 = vmatpush.bf16.msra.mxu0 %v5303
  %5447 = vmatpush.bf16.msra.mxu0 %v5300
  %5448 = vmatpush.bf16.msra.mxu0 %v5297
  %5449 = vmatpush.bf16.msra.mxu0 %v5294
  %5450 = vmatpush.bf16.msra.mxu0 %v5291
  %5451 = vmatmul.bf16.gmra.mxu0 %v4897
  %v5452 = vpop.f32.mrf.mxu0
  %v5453 = vadd.f32 %v5425, %v5452
  %v5454 = vpop.f32.mrf.mxu0
  %v5455 = vadd.f32 %v5427, %v5454
  %5456 = vmatmul.bf16.gmra.mxu0 %v4900
  %v5457 = vpop.f32.mrf.mxu0
  %v5458 = vadd.f32 %v5430, %v5457
  %v5459 = vpop.f32.mrf.mxu0
  %v5460 = vadd.f32 %v5432, %v5459
  %5461 = vmatmul.bf16.gmra.mxu0 %v4903
  %v5462 = vpop.f32.mrf.mxu0
  %v5463 = vadd.f32 %v5435, %v5462
  %v5464 = vpop.f32.mrf.mxu0
  %v5465 = vadd.f32 %v5437, %v5464
  %5466 = vmatmul.bf16.gmra.mxu0 %v4906
  %v5467 = vpop.f32.mrf.mxu0
  %v5468 = vadd.f32 %v5440, %v5467
  %v5469 = vpop.f32.mrf.mxu0
  %5470 = vdwg.mxu0
  %5471 = vmatpush.bf16.msra.mxu0 %v5265
  %5472 = vmatpush.bf16.msra.mxu0 %v5262
  %5473 = vmatpush.bf16.msra.mxu0 %v5259
  %5474 = vmatpush.bf16.msra.mxu0 %v5256
  %5475 = vmatpush.bf16.msra.mxu0 %v5253
  %5476 = vmatpush.bf16.msra.mxu0 %v5250
  %5477 = vmatpush.bf16.msra.mxu0 %v5247
  %5478 = vmatpush.bf16.msra.mxu0 %v5244
  %5479 = vmatmul.bf16.gmra.mxu0 %v4895
  %v5480 = vpop.f32.mrf.mxu0
  %v5481 = vadd.f32 0.0, %v5480
  %v5482 = vpop.f32.mrf.mxu0
  %v5483 = vadd.f32 0.0, %v5482
  %5484 = vmatmul.bf16.gmra.mxu0 %v4898
  %v5485 = vpop.f32.mrf.mxu0
  %v5486 = vadd.f32 0.0, %v5485
  %v5487 = vpop.f32.mrf.mxu0
  %v5488 = vadd.f32 0.0, %v5487
  %5489 = vmatmul.bf16.gmra.mxu0 %v4901
  %v5490 = vpop.f32.mrf.mxu0
  %v5491 = vadd.f32 0.0, %v5490
  %v5492 = vpop.f32.mrf.mxu0
  %v5493 = vadd.f32 0.0, %v5492
  %5494 = vmatmul.bf16.gmra.mxu0 %v4904
  %v5495 = vpop.f32.mrf.mxu0
  %v5496 = vadd.f32 0.0, %v5495
  %v5497 = vpop.f32.mrf.mxu0
  %5498 = vdwg.mxu0
  %5499 = vmatpush.bf16.msra.mxu0 %v5289
  %5500 = vmatpush.bf16.msra.mxu0 %v5286
  %5501 = vmatpush.bf16.msra.mxu0 %v5283
  %5502 = vmatpush.bf16.msra.mxu0 %v5280
  %5503 = vmatpush.bf16.msra.mxu0 %v5277
  %5504 = vmatpush.bf16.msra.mxu0 %v5274
  %5505 = vmatpush.bf16.msra.mxu0 %v5271
  %5506 = vmatpush.bf16.msra.mxu0 %v5268
  %5507 = vmatmul.bf16.gmra.mxu0 %v4896
  %v5508 = vpop.f32.mrf.mxu0
  %v5509 = vadd.f32 %v5481, %v5508
  %v5510 = vpop.f32.mrf.mxu0
  %v5511 = vadd.f32 %v5483, %v5510
  %5512 = vmatmul.bf16.gmra.mxu0 %v4899
  %v5513 = vpop.f32.mrf.mxu0
  %v5514 = vadd.f32 %v5486, %v5513
  %v5515 = vpop.f32.mrf.mxu0
  %v5516 = vadd.f32 %v5488, %v5515
  %5517 = vmatmul.bf16.gmra.mxu0 %v4902
  %v5518 = vpop.f32.mrf.mxu0
  %v5519 = vadd.f32 %v5491, %v5518
  %v5520 = vpop.f32.mrf.mxu0
  %v5521 = vadd.f32 %v5493, %v5520
  %5522 = vmatmul.bf16.gmra.mxu0 %v4905
  %v5523 = vpop.f32.mrf.mxu0
  %v5524 = vadd.f32 %v5496, %v5523
  %v5525 = vpop.f32.mrf.mxu0
  %5526 = vdwg.mxu0
  %5527 = vmatpush.bf16.msra.mxu0 %v5313
  %5528 = vmatpush.bf16.msra.mxu0 %v5310
  %5529 = vmatpush.bf16.msra.mxu0 %v5307
  %5530 = vmatpush.bf16.msra.mxu0 %v5304
  %5531 = vmatpush.bf16.msra.mxu0 %v5301
  %5532 = vmatpush.bf16.msra.mxu0 %v5298
  %5533 = vmatpush.bf16.msra.mxu0 %v5295
  %5534 = vmatpush.bf16.msra.mxu0 %v5292
  %5535 = vmatmul.bf16.gmra.mxu0 %v4897
  %v5536 = vpop.f32.mrf.mxu0
  %v5537 = vadd.f32 %v5509, %v5536
  %v5538 = vpop.f32.mrf.mxu0
  %v5539 = vadd.f32 %v5511, %v5538
  %5540 = vmatmul.bf16.gmra.mxu0 %v4900
  %v5541 = vpop.f32.mrf.mxu0
  %v5542 = vadd.f32 %v5514, %v5541
  %v5543 = vpop.f32.mrf.mxu0
  %v5544 = vadd.f32 %v5516, %v5543
  %5545 = vmatmul.bf16.gmra.mxu0 %v4903
  %v5546 = vpop.f32.mrf.mxu0
  %v5547 = vadd.f32 %v5519, %v5546
  %v5548 = vpop.f32.mrf.mxu0
  %v5549 = vadd.f32 %v5521, %v5548
  %5550 = vmatmul.bf16.gmra.mxu0 %v4906
  %v5551 = vpop.f32.mrf.mxu0
  %v5552 = vadd.f32 %v5524, %v5551
  %v5553 = vpop.f32.mrf.mxu0
  %5554 = vdwg.mxu0
  %5555 = vmatpush.bf16.msra.mxu0 %v5266
  %5556 = vmatpush.bf16.msra.mxu0 %v5263
  %5557 = vmatpush.bf16.msra.mxu0 %v5260
  %5558 = vmatpush.bf16.msra.mxu0 %v5257
  %5559 = vmatpush.bf16.msra.mxu0 %v5254
  %5560 = vmatpush.bf16.msra.mxu0 %v5251
  %5561 = vmatpush.bf16.msra.mxu0 %v5248
  %5562 = vmatpush.bf16.msra.mxu0 %v5245
  %5563 = vmatmul.bf16.gmra.mxu0 %v4895
  %v5564 = vpop.f32.mrf.mxu0
  %v5565 = vadd.f32 0.0, %v5564
  %v5566 = vpop.f32.mrf.mxu0
  %v5567 = vadd.f32 0.0, %v5566
  %5568 = vmatmul.bf16.gmra.mxu0 %v4898
  %v5569 = vpop.f32.mrf.mxu0
  %v5570 = vadd.f32 0.0, %v5569
  %v5571 = vpop.f32.mrf.mxu0
  %v5572 = vadd.f32 0.0, %v5571
  %5573 = vmatmul.bf16.gmra.mxu0 %v4901
  %v5574 = vpop.f32.mrf.mxu0
  %v5575 = vadd.f32 0.0, %v5574
  %v5576 = vpop.f32.mrf.mxu0
  %v5577 = vadd.f32 0.0, %v5576
  %5578 = vmatmul.bf16.gmra.mxu0 %v4904
  %v5579 = vpop.f32.mrf.mxu0
  %v5580 = vadd.f32 0.0, %v5579
  %v5581 = vpop.f32.mrf.mxu0
  %5582 = vdwg.mxu0
  %5583 = vmatpush.bf16.msra.mxu0 %v5290
  %5584 = vmatpush.bf16.msra.mxu0 %v5287
  %5585 = vmatpush.bf16.msra.mxu0 %v5284
  %5586 = vmatpush.bf16.msra.mxu0 %v5281
  %5587 = vmatpush.bf16.msra.mxu0 %v5278
  %5588 = vmatpush.bf16.msra.mxu0 %v5275
  %5589 = vmatpush.bf16.msra.mxu0 %v5272
  %5590 = vmatpush.bf16.msra.mxu0 %v5269
  %5591 = vmatmul.bf16.gmra.mxu0 %v4896
  %v5592 = vpop.f32.mrf.mxu0
  %v5593 = vadd.f32 %v5565, %v5592
  %v5594 = vpop.f32.mrf.mxu0
  %v5595 = vadd.f32 %v5567, %v5594
  %5596 = vmatmul.bf16.gmra.mxu0 %v4899
  %v5597 = vpop.f32.mrf.mxu0
  %v5598 = vadd.f32 %v5570, %v5597
  %v5599 = vpop.f32.mrf.mxu0
  %v5600 = vadd.f32 %v5572, %v5599
  %5601 = vmatmul.bf16.gmra.mxu0 %v4902
  %v5602 = vpop.f32.mrf.mxu0
  %v5603 = vadd.f32 %v5575, %v5602
  %v5604 = vpop.f32.mrf.mxu0
  %v5605 = vadd.f32 %v5577, %v5604
  %5606 = vmatmul.bf16.gmra.mxu0 %v4905
  %v5607 = vpop.f32.mrf.mxu0
  %v5608 = vadd.f32 %v5580, %v5607
  %v5609 = vpop.f32.mrf.mxu0
  %5610 = vdwg.mxu0
  %5611 = vmatpush.bf16.msra.mxu0 %v5314
  %5612 = vmatpush.bf16.msra.mxu0 %v5311
  %5613 = vmatpush.bf16.msra.mxu0 %v5308
  %5614 = vmatpush.bf16.msra.mxu0 %v5305
  %5615 = vmatpush.bf16.msra.mxu0 %v5302
  %5616 = vmatpush.bf16.msra.mxu0 %v5299
  %5617 = vmatpush.bf16.msra.mxu0 %v5296
  %5618 = vmatpush.bf16.msra.mxu0 %v5293
  %5619 = vmatmul.bf16.gmra.mxu0 %v4897
  %v5620 = vpop.f32.mrf.mxu0
  %v5621 = vadd.f32 %v5593, %v5620
  %v5622 = vpop.f32.mrf.mxu0
  %v5623 = vadd.f32 %v5595, %v5622
  %5624 = vmatmul.bf16.gmra.mxu0 %v4900
  %v5625 = vpop.f32.mrf.mxu0
  %v5626 = vadd.f32 %v5598, %v5625
  %v5627 = vpop.f32.mrf.mxu0
  %v5628 = vadd.f32 %v5600, %v5627
  %5629 = vmatmul.bf16.gmra.mxu0 %v4903
  %v5630 = vpop.f32.mrf.mxu0
  %v5631 = vadd.f32 %v5603, %v5630
  %v5632 = vpop.f32.mrf.mxu0
  %v5633 = vadd.f32 %v5605, %v5632
  %5634 = vmatmul.bf16.gmra.mxu0 %v4906
  %v5635 = vpop.f32.mrf.mxu0
  %v5636 = vadd.f32 %v5608, %v5635
  %v5637 = vpop.f32.mrf.mxu0
  %5638 = vdwg.mxu0
  %v5639 = vld [vmem:[%s5] sm:$0xff]
  %v5640 = vld [vmem:[%s5 + $0x8] sm:$0xff]
  %v5641 = vld [vmem:[%s5 + $0x10] sm:$0xff]
  %v5642 = vld [vmem:[%s5 + $0x18] sm:$0xff]
  %v5643 = vld [vmem:[%s5 + $0x20] sm:$0xff]
  %v5644 = vld [vmem:[%s5 + $0x28] sm:$0xff]
  %v5645 = vld [vmem:[%s5 + $0x30] sm:$0xff]
  %v5646 = vld [vmem:[%s5 + $0x38] sm:$0xff]
  %v5647 = vld [vmem:[%s5 + $0x40] sm:$0xff]
  %v5648 = vld [vmem:[%s5 + $0x48] sm:$0xff]
  %v5649 = vld [vmem:[%s5 + $0x50] sm:$0xff]
  %v5650 = vld [vmem:[%s5 + $0x58] sm:$0xff]
  %v5651 = vld [vmem:[%s5 + $0x60] sm:$0xff]
  %v5652 = vld [vmem:[%s5 + $0x68] sm:$0xff]
  %v5653 = vld [vmem:[%s5 + $0x70] sm:$0xff]
  %v5654 = vld [vmem:[%s5 + $0x78] sm:$0xff]
  %v5655 = vld [vmem:[%s5 + $0x80] sm:$0xff]
  %v5656 = vld [vmem:[%s5 + $0x88] sm:$0xff]
  %v5657 = vld [vmem:[%s5 + $0x90] sm:$0x1]
  %v5658 = vld [vmem:[%s5 + $0x98] sm:$0x1]
  %v5659 = vld [vmem:[%s5 + $0xa0] sm:$0x1]
  %v5660 = vadd.f32 %v5639, %v5453
  %v5661 = vadd.f32 %v5640, %v5537
  %v5662 = vadd.f32 %v5641, %v5621
  %v5663 = vadd.f32 %v5642, %v5455
  %v5664 = vadd.f32 %v5643, %v5539
  %v5665 = vadd.f32 %v5644, %v5623
  %v5666 = vadd.f32 %v5645, %v5458
  %v5667 = vadd.f32 %v5646, %v5542
  %v5668 = vadd.f32 %v5647, %v5626
  %v5669 = vadd.f32 %v5648, %v5460
  %v5670 = vadd.f32 %v5649, %v5544
  %v5671 = vadd.f32 %v5650, %v5628
  %v5672 = vadd.f32 %v5651, %v5463
  %v5673 = vadd.f32 %v5652, %v5547
  %v5674 = vadd.f32 %v5653, %v5631
  %v5675 = vadd.f32 %v5654, %v5465
  %v5676 = vadd.f32 %v5655, %v5549
  %v5677 = vadd.f32 %v5656, %v5633
  %v5678 = vadd.f32 %v5657, %v5468
  %v5679 = vadd.f32 %v5658, %v5552
  %v5680 = vadd.f32 %v5659, %v5636
  %5681 = vst [vmem:[%s5] sm:$0xff] %v5660
  %5682 = vst [vmem:[%s5 + $0x8] sm:$0xff] %v5661
  %5683 = vst [vmem:[%s5 + $0x10] sm:$0xff] %v5662
  %5684 = vst [vmem:[%s5 + $0x18] sm:$0xff] %v5663
  %5685 = vst [vmem:[%s5 + $0x20] sm:$0xff] %v5664
  %5686 = vst [vmem:[%s5 + $0x28] sm:$0xff] %v5665
  %5687 = vst [vmem:[%s5 + $0x30] sm:$0xff] %v5666
  %5688 = vst [vmem:[%s5 + $0x38] sm:$0xff] %v5667
  %5689 = vst [vmem:[%s5 + $0x40] sm:$0xff] %v5668
  %5690 = vst [vmem:[%s5 + $0x48] sm:$0xff] %v5669
  %5691 = vst [vmem:[%s5 + $0x50] sm:$0xff] %v5670
  %5692 = vst [vmem:[%s5 + $0x58] sm:$0xff] %v5671
  %5693 = vst [vmem:[%s5 + $0x60] sm:$0xff] %v5672
  %5694 = vst [vmem:[%s5 + $0x68] sm:$0xff] %v5673
  %5695 = vst [vmem:[%s5 + $0x70] sm:$0xff] %v5674
  %5696 = vst [vmem:[%s5 + $0x78] sm:$0xff] %v5675
  %5697 = vst [vmem:[%s5 + $0x80] sm:$0xff] %v5676
  %5698 = vst [vmem:[%s5 + $0x88] sm:$0xff] %v5677
  %5699 = vst [vmem:[%s5 + $0x90] sm:$0x1] %v5678
  %5700 = vst [vmem:[%s5 + $0x98] sm:$0x1] %v5679
  %5701 = vst [vmem:[%s5 + $0xa0] sm:$0x1] %v5680
  // Predicated region
  $region22: #{run_module.1} parent=0 // pred_check
    _
  $region23: #{run_module.1} parent=0 // pred_check_branch
    %5703 = sbr.rel (0) target = $region25
  $region24: #{run_module.1} parent=0 // pred_region
    _
  $region25: #{run_module.1} parent=0 // pred_fallthru
    _
  // Predicated region
  $region26: #{run_module.1} parent=0 // pred_check
    _
  $region27: #{run_module.1} parent=0 // pred_check_branch
    %5705 = sbr.rel (0) target = $region29
  $region28: #{run_module.1} parent=0 // pred_region
    _
  $region29: #{run_module.1} parent=0 // pred_fallthru
    _

</llo_original>
